<compile_context>
chip_gen: v5e
topology: v5e:2x2
jax: 0.10.0
libtpu: 0.0.40
codegen_flags: <defaults>
</compile_context>

<pallas_src>
import math

import jax
import jax.numpy as jnp
from jax.experimental import pallas as pl
from jax.experimental.pallas import tpu as pltpu

# PyTorch packs LSTM gates as [i, f, g, o]; kernel uses [i, f, o, g] so the
# three sigmoid gates form one contiguous lane slab and tanh is the trailing
# block.  sigmoid(x) == 0.5*tanh(0.5*x)+0.5, so a 0.5 pre-scale (exact in any
# float format) is folded into the i/f/o columns of W, R and b.
_GATE_PERM = (0, 1, 3, 2)
_GATE_PRESCALE = (0.5, 0.5, 0.5, 1.0)


def _round_up(v, m):
    return (v + m - 1) // m * m


def _pack_gates_t(M, H, Hp, in_dim, in_dim_p, dtype):
    """(4H, in_dim) gate-packed matrix -> (in_dim_p, 4*Hp) transposed, gate
    order [i, f, o, g], i/f/o columns pre-scaled by 0.5, zero padded."""
    blocks = []
    for g, s in zip(_GATE_PERM, _GATE_PRESCALE):
        blk = (M[g * H:(g + 1) * H, :] * s).T.astype(dtype)        # (in_dim, H)
        blk = jnp.pad(blk, ((0, in_dim_p - in_dim), (0, Hp - H)))
        blocks.append(blk)
    return jnp.concatenate(blocks, axis=1)                          # (in_dim_p, 4Hp)


def _pack_gates_bias(b, H, Hp):
    blocks = [jnp.pad(b[g * H:(g + 1) * H].astype(jnp.float32) * s, (0, Hp - H))
              for g, s in zip(_GATE_PERM, _GATE_PRESCALE)]
    return jnp.concatenate(blocks)                                  # (4Hp,) fp32


def _lstm_recurrent_kernel(x_ref, y0_ref, c0_ref, bias_ref, wt_hbm, rt_hbm,
                           y_out_ref, c_out_ref,
                           wt_vmem, rt_vmem, gx_s, y_s, c_s, dma_sem):
    """Fused input projection + serial recurrence.

    Grid = (batch_chunks ["parallel"], time_chunks ["arbitrary"]).
    """
    t_blk = pl.program_id(1)
    TT, BC, Dp = x_ref.shape
    Hp = y_s.shape[-1]

    @pl.when(t_blk == 0)
    def _init():
        # Grid-invariant weights: copy HBM -> single-buffered VMEM scratch
        # once per batch chunk (per core).  State init sits between start()
        # and wait() so it hides part of the DMA latency.
        cp_w = pltpu.make_async_copy(wt_hbm, wt_vmem, dma_sem.at[0])
        cp_r = pltpu.make_async_copy(rt_hbm, rt_vmem, dma_sem.at[1])
        cp_w.start()
        cp_r.start()
        y_s[...] = y0_ref[...].astype(y_s.dtype)
        c_s[...] = c0_ref[...].astype(jnp.float32)
        cp_w.wait()
        cp_r.wait()

    # Fused input projection for this (TT, BC) block: one MXU matmul with
    # M = TT*BC, fp32 accumulation, bias folded in.  Replaces the old
    # HBM-round-tripped fp32 gates_x intermediate.
    x2d = x_ref[...].reshape(TT * BC, Dp).astype(wt_vmem.dtype)
    gx = jnp.dot(x2d, wt_vmem[...], preferred_element_type=jnp.float32)
    gx_s[...] = (gx + bias_ref[...]).reshape(TT, BC, 4 * Hp)

    def step(i, carry):
        # gates_t = (x_t @ W^T + b) + y_{t-1} @ R^T   (fp32)
        gates = gx_s[i] + jnp.dot(y_s[...], rt_vmem[...],
                                  preferred_element_type=jnp.float32)
        # One tanh over all 4 gates (i/f/o columns were pre-scaled by 0.5).
        t = jnp.tanh(gates)
        sig = 0.5 * t[:, 0:3 * Hp] + 0.5            # sigmoid(i), sigmoid(f), sigmoid(o)
        i_g = sig[:, 0 * Hp:1 * Hp]
        f_g = sig[:, 1 * Hp:2 * Hp]
        o_g = sig[:, 2 * Hp:3 * Hp]
        g_g = t[:, 3 * Hp:4 * Hp]

        c_new = f_g * c_s[...] + i_g * g_g          # fp32 cell recurrence
        y_new = o_g * jnp.tanh(c_new)

        c_s[...] = c_new
        y_s[...] = y_new.astype(y_s.dtype)          # MXU-operand dtype
        y_out_ref[i] = y_new.astype(y_out_ref.dtype)
        c_out_ref[i] = c_new.astype(c_out_ref.dtype)
        return carry

    jax.lax.fori_loop(0, TT, step, 0, unroll=True)


def lstm_layer_forward(x, y0, c0, W, R, bW, bR, *,
                       time_chunk=16, mxu_dtype=None, min_batch_chunks=2):
    """Single custom-LSTM layer (soft activations).

    Args:
      x : (T, B, D)
      y0, c0 : (B, H)
      W : (4H, D), R : (4H, H), bW, bR : (4H,)   (PyTorch gate order i,f,g,o)
      mxu_dtype: matmul-operand dtype (default: bf16 for 16-bit params, else
        the param dtype).  Accumulation is always fp32.
    Returns:
      (y_all, c_all) each (T, B, H)
    """
    T, B, D = x.shape
    four_h, H = R.shape
    assert four_h == 4 * H and W.shape == (4 * H, D)

    param_dtype = R.dtype
    if mxu_dtype is None:
        mxu_dtype = (jnp.bfloat16 if jnp.dtype(param_dtype).itemsize < 4
                     else jnp.dtype(param_dtype))
    out_dtype = x.dtype

    Hp = _round_up(H, 128)            # lane-align hidden (gate slices stay in-tile)
    Dp = _round_up(D, 128)            # lane-align input features
    Bp0 = _round_up(B, 8)             # sublane-align batch

    # Batch chunking: cap at 128 rows; if that leaves a single chunk, split so
    # the "parallel" grid axis has >= min_batch_chunks extents (keeps the 2nd
    # v7x TensorCore busy; the streamed-M MXU cost is unchanged on 1-TC chips).
    BC = min(Bp0, 128)
    if Bp0 // BC < min_batch_chunks and Bp0 >= 16 * min_batch_chunks:
        BC = _round_up(-(-Bp0 // min_batch_chunks), 8)

    isz_mxu = jnp.dtype(mxu_dtype).itemsize
    isz_in = jnp.dtype(x.dtype).itemsize
    isz_out = jnp.dtype(out_dtype).itemsize

    def est_vmem(tt, bc):
        return (Dp * 4 * Hp * isz_mxu              # W^T scratch (single buffer)
                + Hp * 4 * Hp * isz_mxu            # R^T scratch (single buffer)
                + tt * bc * 4 * Hp * 4              # gates_x block scratch (fp32)
                + bc * Hp * (isz_mxu + 4)           # y / c state scratch
                + 2 * tt * bc * Dp * isz_in         # x block, double-buffered
                + 2 * 2 * bc * Hp * isz_in          # y0 / c0 blocks
                + 2 * 4 * Hp * 4                    # bias block
                + 2 * 2 * tt * bc * Hp * isz_out)   # y / c outputs, double-buffered

    # Per-generation VMEM budget (v7x: 64 MiB/TC, v5e/v6e: 128 MiB), 4 MiB headroom.
    try:
        vmem_cap = int(pltpu.get_tpu_info().vmem_capacity_bytes)
    except Exception:
        vmem_cap = 64 * 1024 * 1024
    budget = max(32 * 1024 * 1024, vmem_cap - 4 * 1024 * 1024)

    TT = max(1, min(time_chunk, T))   # timesteps per grid step
    while TT > 1 and est_vmem(TT, BC) > budget:
        TT //= 2
    while BC > 8 and est_vmem(TT, BC) > budget:
        BC = max(8, _round_up(BC // 2, 8))

    Bp = _round_up(Bp0, BC)
    Tp = _round_up(T, TT)
    nb = Bp // BC
    nt = Tp // TT

    vmem_limit = int(min(budget, max(32 * 1024 * 1024,
                                     est_vmem(TT, BC) * 1.25 + (2 << 20))))

    # --- packed, gate-reordered, 0.5-prescaled, zero-padded parameters ------
    wt_p = _pack_gates_t(W, H, Hp, D, Dp, mxu_dtype)        # (Dp, 4Hp)
    rt_p = _pack_gates_t(R, H, Hp, H, Hp, mxu_dtype)        # (Hp, 4Hp)
    bias_p = _pack_gates_bias(bW + bR, H, Hp).reshape(1, 4 * Hp)   # fp32

    xp = jnp.pad(x, ((0, Tp - T), (0, Bp - B), (0, Dp - D)))
    y0p = jnp.pad(y0, ((0, Bp - B), (0, Hp - H)))
    c0p = jnp.pad(c0, ((0, Bp - B), (0, Hp - H)))

    grid_spec = pltpu.PrefetchScalarGridSpec(
        num_scalar_prefetch=0,
        grid=(nb, nt),
        in_specs=[
            pl.BlockSpec((TT, BC, Dp), lambda b, t: (t, b, 0)),   # x block
            pl.BlockSpec((BC, Hp), lambda b, t: (b, 0)),          # y0
            pl.BlockSpec((BC, Hp), lambda b, t: (b, 0)),          # c0
            pl.BlockSpec((1, 4 * Hp), lambda b, t: (0, 0)),       # bias
            pl.BlockSpec(memory_space=pl.ANY),                    # W^T (raw HBM)
            pl.BlockSpec(memory_space=pl.ANY),                    # R^T (raw HBM)
        ],
        out_specs=[
            pl.BlockSpec((TT, BC, Hp), lambda b, t: (t, b, 0)),   # y_all
            pl.BlockSpec((TT, BC, Hp), lambda b, t: (t, b, 0)),   # c_all
        ],
        scratch_shapes=[
            pltpu.VMEM((Dp, 4 * Hp), mxu_dtype),        # resident W^T
            pltpu.VMEM((Hp, 4 * Hp), mxu_dtype),        # resident R^T
            pltpu.VMEM((TT, BC, 4 * Hp), jnp.float32),  # gates_x block
            pltpu.VMEM((BC, Hp), mxu_dtype),            # y state (MXU operand dtype)
            pltpu.VMEM((BC, Hp), jnp.float32),          # c state (fp32 recurrence)
            pltpu.SemaphoreType.DMA((2,)),              # W^T / R^T copy semaphores
        ],
    )

    y_all_p, c_all_p = pl.pallas_call(
        _lstm_recurrent_kernel,
        grid_spec=grid_spec,
        out_shape=(
            jax.ShapeDtypeStruct((Tp, Bp, Hp), out_dtype),
            jax.ShapeDtypeStruct((Tp, Bp, Hp), out_dtype),
        ),
        compiler_params=pltpu.CompilerParams(
            dimension_semantics=("parallel", "arbitrary"),
            vmem_limit_bytes=vmem_limit),
    )(xp, y0p, c0p, bias_p, wt_p, rt_p)

    return y_all_p[:T, :B, :H], c_all_p[:T, :B, :H]


def init_custom_lstm_params(key, input_size, hidden_size, num_layers,
                            dtype=jnp.float32):
    """Deterministic init matching Layer.__init__: uniform(-1/sqrt(H), 1/sqrt(H))."""
    rsh = 1.0 / math.sqrt(hidden_size)
    params = []
    for i in range(num_layers):
        in_sz = input_size if i == 0 else hidden_size
        key, k1, k2, k3, k4 = jax.random.split(key, 5)
        params.append(dict(
            weight_ih=jax.random.uniform(k1, (4 * hidden_size, in_sz),
                                         dtype, -rsh, rsh),
            weight_hh=jax.random.uniform(k2, (4 * hidden_size, hidden_size),
                                         dtype, -rsh, rsh),
            bias_ih=jax.random.uniform(k3, (4 * hidden_size,), dtype, -rsh, rsh),
            bias_hh=jax.random.uniform(k4, (4 * hidden_size,), dtype, -rsh, rsh),
        ))
    return params


def custom_lstm_forward(params, x, state=None, *, time_chunk=16, mxu_dtype=None):
    """Equivalent of CustomLSTM.forward (dropout=0, rw_dropout=0, hard=False).

    Args:
      x: (T, B, input_size)
      state: optional ((num_layers, B, H), (num_layers, B, H))
    Returns:
      (out, (h_n, c_n), (all_h, all_c)) matching the PyTorch module.
    """
    T, B, _ = x.shape
    H = params[0]["weight_hh"].shape[1]
    num_layers = len(params)

    h_fl, c_fl, all_h, all_c = [], [], [], []
    layer_in = x
    for i in range(num_layers):
        if state is None:
            h0 = jnp.zeros((B, H), dtype=x.dtype)
            c0 = jnp.zeros((B, H), dtype=x.dtype)
        else:
            h0 = state[0][i]
            c0 = state[1][i]
        p = params[i]
        y_all, c_all = lstm_layer_forward(layer_in, h0, c0,
                                          p["weight_ih"], p["weight_hh"],
                                          p["bias_ih"], p["bias_hh"],
                                          time_chunk=time_chunk,
                                          mxu_dtype=mxu_dtype)
        h_fl.append(y_all[-1])
        c_fl.append(c_all[-1])
        all_h.append(y_all)
        all_c.append(c_all)
        layer_in = y_all
        # TODO(synk): inter-layer dropout (bl_dropout>0) and recurrent-weight
        # dropout (rw_dropout>0) are identity here (eval semantics).

    return (layer_in,
            (jnp.stack(h_fl, 0), jnp.stack(c_fl, 0)),
            (jnp.stack(all_h, 0), jnp.stack(all_c, 0)))


def _reference_layer(x, y0, c0, W, R, bW, bR):
    """Pure-JAX reference for a single soft LSTM layer (correctness check)."""
    H = R.shape[1]
    b = (bW + bR).astype(jnp.float32)

    def step(carry, x_t):
        y_p, c_p = carry
        g = (x_t.astype(jnp.float32) @ W.T.astype(jnp.float32)
             + y_p @ R.T.astype(jnp.float32) + b)
        i = jax.nn.sigmoid(g[:, 0 * H:1 * H])
        f = jax.nn.sigmoid(g[:, 1 * H:2 * H])
        gg = jnp.tanh(g[:, 2 * H:3 * H])
        o = jax.nn.sigmoid(g[:, 3 * H:4 * H])
        c_n = f * c_p + i * gg
        y_n = o * jnp.tanh(c_n)
        return (y_n, c_n), (y_n, c_n)

    (_, _), (ys, cs) = jax.lax.scan(
        step, (y0.astype(jnp.float32), c0.astype(jnp.float32)), x)
    return ys.astype(x.dtype), cs.astype(x.dtype)


if __name__ == "__main__":
    T, B, D, H, L = 8, 2, 16, 32, 2
    key = jax.random.PRNGKey(0)
    kx, kp = jax.random.split(key)

    x = jax.random.normal(kx, (T, B, D), dtype=jnp.float32)
    params = init_custom_lstm_params(kp, D, H, L, dtype=jnp.float32)

    # fp32 params -> fp32 MXU path: tight correctness check vs lax.scan reference.
    out, (h_n, c_n), (all_h, all_c) = custom_lstm_forward(params, x, state=None)
    jax.block_until_ready((out, h_n, c_n, all_h, all_c))

    layer_in = x
    for i in range(L):
        p = params[i]
        y_ref, c_ref = _reference_layer(
            layer_in, jnp.zeros((B, H), x.dtype), jnp.zeros((B, H), x.dtype),
            p["weight_ih"], p["weight_hh"], p["bias_ih"], p["bias_hh"])
        assert jnp.allclose(all_h[i], y_ref, atol=1e-4, rtol=1e-4)
        assert jnp.allclose(all_c[i], c_ref, atol=1e-4, rtol=1e-4)
        layer_in = y_ref

    assert out.shape == (T, B, H)
    assert h_n.shape == (L, B, H) and c_n.shape == (L, B, H)
    assert all_h.shape == (L, T, B, H) and all_c.shape == (L, T, B, H)

    # Forced-bf16 MXU path (the production/perf configuration): loose check.
    out_bf, _, _ = custom_lstm_forward(params, x, state=None,
                                       mxu_dtype=jnp.bfloat16)
    jax.block_until_ready(out_bf)
    assert out_bf.shape == out.shape
    assert jnp.allclose(out_bf.astype(jnp.float32), out, atol=5e-2, rtol=5e-2)

    print("KERNEL_OK")
</pallas_src>

<mosaic_0001>
module attributes {stable_mosaic.version = 11 : i64} {
  func.func @_lstm_recurrent_kernel(%arg0: i32, %arg1: i32, %arg2: memref<8x8x128xf32, #tpu.memory_space<vmem>>, %arg3: memref<8x128xf32, #tpu.memory_space<vmem>>, %arg4: memref<8x128xf32, #tpu.memory_space<vmem>>, %arg5: memref<1x512xf32, #tpu.memory_space<vmem>>, %arg6: memref<128x512xf32, #tpu.memory_space<any>>, %arg7: memref<128x512xf32, #tpu.memory_space<any>>, %arg8: memref<8x8x128xf32, #tpu.memory_space<vmem>>, %arg9: memref<8x8x128xf32, #tpu.memory_space<vmem>>, %arg10: memref<128x512xf32, #tpu.memory_space<vmem>>, %arg11: memref<128x512xf32, #tpu.memory_space<vmem>>, %arg12: memref<8x8x512xf32, #tpu.memory_space<vmem>>, %arg13: memref<8x128xf32, #tpu.memory_space<vmem>>, %arg14: memref<8x128xf32, #tpu.memory_space<vmem>>, %arg15: memref<2x!tpu.dma_semaphore, #tpu.memory_space<semaphore_mem>>) attributes {dimension_semantics = [#tpu.dimension_semantics<parallel>, #tpu.dimension_semantics<arbitrary>], iteration_bounds = array<i64: 1, 1>, scalar_prefetch = 0 : i64, scratch_operands = 6 : i64, tpu.core_type = #tpu.core_type<tc>, window_params = [{transform_indices = @transform_0, window_bounds = array<i64: 8, 8, 128>}, {transform_indices = @transform_1, window_bounds = array<i64: 8, 128>}, {transform_indices = @transform_2, window_bounds = array<i64: 8, 128>}, {pipeline_mode = #tpu.pipeline_mode<synchronous>, transform_indices = @transform_3, window_bounds = array<i64: 1, 512>}, {}, {}, {transform_indices = @transform_6, window_bounds = array<i64: 8, 8, 128>}, {transform_indices = @transform_7, window_bounds = array<i64: 8, 8, 128>}]} {
    %c0_i32 = arith.constant 0 : i32
    %0 = arith.cmpi eq, %arg1, %c0_i32 : i32
    %1 = arith.extui %0 : i1 to i32
    %c0_i32_0 = arith.constant 0 : i32
    %2 = arith.cmpi ne, %1, %c0_i32_0 : i32
    scf.if %2 {
      %c0_i32_163 = arith.constant 0 : i32
      %276 = tpu.memref_slice %arg15[%c0_i32_163] : memref<2x!tpu.dma_semaphore, #tpu.memory_space<semaphore_mem>> -> memref<1x!tpu.dma_semaphore, #tpu.memory_space<semaphore_mem>>
      %277 = tpu.memref_squeeze %276 : memref<1x!tpu.dma_semaphore, #tpu.memory_space<semaphore_mem>> -> memref<!tpu.dma_semaphore, #tpu.memory_space<semaphore_mem>>
      tpu.enqueue_dma source(%arg6 : memref<128x512xf32, #tpu.memory_space<any>>) target(%arg10 : memref<128x512xf32, #tpu.memory_space<vmem>>) target_semaphore(%277 : memref<!tpu.dma_semaphore, #tpu.memory_space<semaphore_mem>>)
      %c1_i32_164 = arith.constant 1 : i32
      %278 = tpu.memref_slice %arg15[%c1_i32_164] : memref<2x!tpu.dma_semaphore, #tpu.memory_space<semaphore_mem>> -> memref<1x!tpu.dma_semaphore, #tpu.memory_space<semaphore_mem>>
      %279 = tpu.memref_squeeze %278 : memref<1x!tpu.dma_semaphore, #tpu.memory_space<semaphore_mem>> -> memref<!tpu.dma_semaphore, #tpu.memory_space<semaphore_mem>>
      tpu.enqueue_dma source(%arg7 : memref<128x512xf32, #tpu.memory_space<any>>) target(%arg11 : memref<128x512xf32, #tpu.memory_space<vmem>>) target_semaphore(%279 : memref<!tpu.dma_semaphore, #tpu.memory_space<semaphore_mem>>)
      %c0_165 = arith.constant 0 : index
      %c0_166 = arith.constant 0 : index
      %280 = vector.load %arg3[%c0_165, %c0_166] : memref<8x128xf32, #tpu.memory_space<vmem>>, vector<8x128xf32>
      %c0_167 = arith.constant 0 : index
      %c0_168 = arith.constant 0 : index
      %281 = vector.load %arg13[%c0_167, %c0_168] : memref<8x128xf32, #tpu.memory_space<vmem>>, vector<8x128xf32>
      tpu.vector_store %arg13[%c0_167, %c0_168], %280 {strides = array<i32>} : memref<8x128xf32, #tpu.memory_space<vmem>>, vector<8x128xf32>,
      %c0_169 = arith.constant 0 : index
      %c0_170 = arith.constant 0 : index
      %282 = vector.load %arg4[%c0_169, %c0_170] : memref<8x128xf32, #tpu.memory_space<vmem>>, vector<8x128xf32>
      %c0_171 = arith.constant 0 : index
      %c0_172 = arith.constant 0 : index
      %283 = vector.load %arg14[%c0_171, %c0_172] : memref<8x128xf32, #tpu.memory_space<vmem>>, vector<8x128xf32>
      tpu.vector_store %arg14[%c0_171, %c0_172], %282 {strides = array<i32>} : memref<8x128xf32, #tpu.memory_space<vmem>>, vector<8x128xf32>,
      %c0_i32_173 = arith.constant 0 : i32
      %284 = tpu.memref_slice %arg15[%c0_i32_173] : memref<2x!tpu.dma_semaphore, #tpu.memory_space<semaphore_mem>> -> memref<1x!tpu.dma_semaphore, #tpu.memory_space<semaphore_mem>>
      %285 = tpu.memref_squeeze %284 : memref<1x!tpu.dma_semaphore, #tpu.memory_space<semaphore_mem>> -> memref<!tpu.dma_semaphore, #tpu.memory_space<semaphore_mem>>
      tpu.wait_dma2 semaphore(%285 : memref<!tpu.dma_semaphore, #tpu.memory_space<semaphore_mem>>) src(%arg6 : memref<128x512xf32, #tpu.memory_space<any>>) dst(%arg10 : memref<128x512xf32, #tpu.memory_space<vmem>>)
      %c1_i32_174 = arith.constant 1 : i32
      %286 = tpu.memref_slice %arg15[%c1_i32_174] : memref<2x!tpu.dma_semaphore, #tpu.memory_space<semaphore_mem>> -> memref<1x!tpu.dma_semaphore, #tpu.memory_space<semaphore_mem>>
      %287 = tpu.memref_squeeze %286 : memref<1x!tpu.dma_semaphore, #tpu.memory_space<semaphore_mem>> -> memref<!tpu.dma_semaphore, #tpu.memory_space<semaphore_mem>>
      tpu.wait_dma2 semaphore(%287 : memref<!tpu.dma_semaphore, #tpu.memory_space<semaphore_mem>>) src(%arg7 : memref<128x512xf32, #tpu.memory_space<any>>) dst(%arg11 : memref<128x512xf32, #tpu.memory_space<vmem>>)
    } else {
    }
    %c0 = arith.constant 0 : index
    %c0_1 = arith.constant 0 : index
    %c0_2 = arith.constant 0 : index
    %3 = vector.load %arg2[%c0, %c0_1, %c0_2] : memref<8x8x128xf32, #tpu.memory_space<vmem>>, vector<8x8x128xf32>
    %4 = vector.shape_cast %3 : vector<8x8x128xf32> to vector<64x128xf32>
    %c0_3 = arith.constant 0 : index
    %c0_4 = arith.constant 0 : index
    %5 = vector.load %arg10[%c0_3, %c0_4] : memref<128x512xf32, #tpu.memory_space<vmem>>, vector<128x512xf32>
    %cst = arith.constant dense<0.000000e+00> : vector<64x512xf32>
    %6 = tpu.matmul %4, %5, %cst {dimension_numbers = #tpu.dot_dimension_numbers<[1], [0], [0], [1], [0, 0, 1, 1], [], []>} : vector<64x128xf32>, vector<128x512xf32>, vector<64x512xf32> -> vector<64x512xf32>
    %c0_5 = arith.constant 0 : index
    %c0_6 = arith.constant 0 : index
    %7 = vector.load %arg5[%c0_5, %c0_6] : memref<1x512xf32, #tpu.memory_space<vmem>>, vector<1x512xf32>
    %8 = vector.broadcast %7 : vector<1x512xf32> to vector<64x512xf32>
    %9 = arith.addf %6, %8 : vector<64x512xf32>
    %10 = vector.shape_cast %9 : vector<64x512xf32> to vector<8x8x512xf32>
    %c0_7 = arith.constant 0 : index
    %c0_8 = arith.constant 0 : index
    %c0_9 = arith.constant 0 : index
    %11 = vector.load %arg12[%c0_7, %c0_8, %c0_9] : memref<8x8x512xf32, #tpu.memory_space<vmem>>, vector<8x8x512xf32>
    tpu.vector_store %arg12[%c0_7, %c0_8, %c0_9], %10 {strides = array<i32>} : memref<8x8x512xf32, #tpu.memory_space<vmem>>, vector<8x8x512xf32>,
    %c0_i32_10 = arith.constant 0 : i32
    %12 = arith.index_cast %c0_i32_10 : i32 to index
    %c0_11 = arith.constant 0 : index
    %c0_12 = arith.constant 0 : index
    %13 = vector.load %arg12[%12, %c0_11, %c0_12] : memref<8x8x512xf32, #tpu.memory_space<vmem>>, vector<1x8x512xf32>
    %14 = vector.shape_cast %13 : vector<1x8x512xf32> to vector<8x512xf32>
    %c0_13 = arith.constant 0 : index
    %c0_14 = arith.constant 0 : index
    %15 = vector.load %arg13[%c0_13, %c0_14] : memref<8x128xf32, #tpu.memory_space<vmem>>, vector<8x128xf32>
    %c0_15 = arith.constant 0 : index
    %c0_16 = arith.constant 0 : index
    %16 = vector.load %arg11[%c0_15, %c0_16] : memref<128x512xf32, #tpu.memory_space<vmem>>, vector<128x512xf32>
    %cst_17 = arith.constant dense<0.000000e+00> : vector<8x512xf32>
    %17 = tpu.matmul %15, %16, %cst_17 {dimension_numbers = #tpu.dot_dimension_numbers<[1], [0], [0], [1], [0, 0, 1, 1], [], []>} : vector<8x128xf32>, vector<128x512xf32>, vector<8x512xf32> -> vector<8x512xf32>
    %18 = arith.addf %14, %17 : vector<8x512xf32>
    %19 = math.tanh %18 : vector<8x512xf32>
    %20 = vector.extract_strided_slice %19 {offsets = [0, 0], sizes = [8, 384], strides = [1, 1]} : vector<8x512xf32> to vector<8x384xf32>
    %cst_18 = arith.constant 5.000000e-01 : f32
    %21 = vector.broadcast %cst_18 : f32 to vector<8x384xf32>
    %22 = arith.mulf %21, %20 : vector<8x384xf32>
    %cst_19 = arith.constant 5.000000e-01 : f32
    %23 = vector.broadcast %cst_19 : f32 to vector<8x384xf32>
    %24 = arith.addf %22, %23 : vector<8x384xf32>
    %25 = vector.extract_strided_slice %24 {offsets = [0, 0], sizes = [8, 128], strides = [1, 1]} : vector<8x384xf32> to vector<8x128xf32>
    %26 = vector.extract_strided_slice %24 {offsets = [0, 128], sizes = [8, 128], strides = [1, 1]} : vector<8x384xf32> to vector<8x128xf32>
    %27 = vector.extract_strided_slice %24 {offsets = [0, 256], sizes = [8, 128], strides = [1, 1]} : vector<8x384xf32> to vector<8x128xf32>
    %28 = vector.extract_strided_slice %19 {offsets = [0, 384], sizes = [8, 128], strides = [1, 1]} : vector<8x512xf32> to vector<8x128xf32>
    %c0_20 = arith.constant 0 : index
    %c0_21 = arith.constant 0 : index
    %29 = vector.load %arg14[%c0_20, %c0_21] : memref<8x128xf32, #tpu.memory_space<vmem>>, vector<8x128xf32>
    %30 = arith.mulf %26, %29 : vector<8x128xf32>
    %31 = arith.mulf %25, %28 : vector<8x128xf32>
    %32 = arith.addf %30, %31 : vector<8x128xf32>
    %33 = math.tanh %32 : vector<8x128xf32>
    %34 = arith.mulf %27, %33 : vector<8x128xf32>
    %c0_22 = arith.constant 0 : index
    %c0_23 = arith.constant 0 : index
    %35 = vector.load %arg14[%c0_22, %c0_23] : memref<8x128xf32, #tpu.memory_space<vmem>>, vector<8x128xf32>
    tpu.vector_store %arg14[%c0_22, %c0_23], %32 {strides = array<i32>} : memref<8x128xf32, #tpu.memory_space<vmem>>, vector<8x128xf32>,
    %c0_24 = arith.constant 0 : index
    %c0_25 = arith.constant 0 : index
    %36 = vector.load %arg13[%c0_24, %c0_25] : memref<8x128xf32, #tpu.memory_space<vmem>>, vector<8x128xf32>
    tpu.vector_store %arg13[%c0_24, %c0_25], %34 {strides = array<i32>} : memref<8x128xf32, #tpu.memory_space<vmem>>, vector<8x128xf32>,
    %37 = arith.index_cast %c0_i32_10 : i32 to index
    %c0_26 = arith.constant 0 : index
    %c0_27 = arith.constant 0 : index
    %38 = vector.load %arg8[%37, %c0_26, %c0_27] : memref<8x8x128xf32, #tpu.memory_space<vmem>>, vector<1x8x128xf32>
    %39 = vector.shape_cast %38 : vector<1x8x128xf32> to vector<8x128xf32>
    %40 = vector.shape_cast %34 : vector<8x128xf32> to vector<1x8x128xf32>
    tpu.vector_store %arg8[%37, %c0_26, %c0_27], %40 {strides = array<i32>} : memref<8x8x128xf32, #tpu.memory_space<vmem>>, vector<1x8x128xf32>,
    %41 = arith.index_cast %c0_i32_10 : i32 to index
    %c0_28 = arith.constant 0 : index
    %c0_29 = arith.constant 0 : index
    %42 = vector.load %arg9[%41, %c0_28, %c0_29] : memref<8x8x128xf32, #tpu.memory_space<vmem>>, vector<1x8x128xf32>
    %43 = vector.shape_cast %42 : vector<1x8x128xf32> to vector<8x128xf32>
    %44 = vector.shape_cast %32 : vector<8x128xf32> to vector<1x8x128xf32>
    tpu.vector_store %arg9[%41, %c0_28, %c0_29], %44 {strides = array<i32>} : memref<8x8x128xf32, #tpu.memory_space<vmem>>, vector<1x8x128xf32>,
    %c1_i32 = arith.constant 1 : i32
    %45 = arith.index_cast %c1_i32 : i32 to index
    %c0_30 = arith.constant 0 : index
    %c0_31 = arith.constant 0 : index
    %46 = vector.load %arg12[%45, %c0_30, %c0_31] : memref<8x8x512xf32, #tpu.memory_space<vmem>>, vector<1x8x512xf32>
    %47 = vector.shape_cast %46 : vector<1x8x512xf32> to vector<8x512xf32>
    %c0_32 = arith.constant 0 : index
    %c0_33 = arith.constant 0 : index
    %48 = vector.load %arg13[%c0_32, %c0_33] : memref<8x128xf32, #tpu.memory_space<vmem>>, vector<8x128xf32>
    %c0_34 = arith.constant 0 : index
    %c0_35 = arith.constant 0 : index
    %49 = vector.load %arg11[%c0_34, %c0_35] : memref<128x512xf32, #tpu.memory_space<vmem>>, vector<128x512xf32>
    %cst_36 = arith.constant dense<0.000000e+00> : vector<8x512xf32>
    %50 = tpu.matmul %48, %49, %cst_36 {dimension_numbers = #tpu.dot_dimension_numbers<[1], [0], [0], [1], [0, 0, 1, 1], [], []>} : vector<8x128xf32>, vector<128x512xf32>, vector<8x512xf32> -> vector<8x512xf32>
    %51 = arith.addf %47, %50 : vector<8x512xf32>
    %52 = math.tanh %51 : vector<8x512xf32>
    %53 = vector.extract_strided_slice %52 {offsets = [0, 0], sizes = [8, 384], strides = [1, 1]} : vector<8x512xf32> to vector<8x384xf32>
    %cst_37 = arith.constant 5.000000e-01 : f32
    %54 = vector.broadcast %cst_37 : f32 to vector<8x384xf32>
    %55 = arith.mulf %54, %53 : vector<8x384xf32>
    %cst_38 = arith.constant 5.000000e-01 : f32
    %56 = vector.broadcast %cst_38 : f32 to vector<8x384xf32>
    %57 = arith.addf %55, %56 : vector<8x384xf32>
    %58 = vector.extract_strided_slice %57 {offsets = [0, 0], sizes = [8, 128], strides = [1, 1]} : vector<8x384xf32> to vector<8x128xf32>
    %59 = vector.extract_strided_slice %57 {offsets = [0, 128], sizes = [8, 128], strides = [1, 1]} : vector<8x384xf32> to vector<8x128xf32>
    %60 = vector.extract_strided_slice %57 {offsets = [0, 256], sizes = [8, 128], strides = [1, 1]} : vector<8x384xf32> to vector<8x128xf32>
    %61 = vector.extract_strided_slice %52 {offsets = [0, 384], sizes = [8, 128], strides = [1, 1]} : vector<8x512xf32> to vector<8x128xf32>
    %c0_39 = arith.constant 0 : index
    %c0_40 = arith.constant 0 : index
    %62 = vector.load %arg14[%c0_39, %c0_40] : memref<8x128xf32, #tpu.memory_space<vmem>>, vector<8x128xf32>
    %63 = arith.mulf %59, %62 : vector<8x128xf32>
    %64 = arith.mulf %58, %61 : vector<8x128xf32>
    %65 = arith.addf %63, %64 : vector<8x128xf32>
    %66 = math.tanh %65 : vector<8x128xf32>
    %67 = arith.mulf %60, %66 : vector<8x128xf32>
    %c0_41 = arith.constant 0 : index
    %c0_42 = arith.constant 0 : index
    %68 = vector.load %arg14[%c0_41, %c0_42] : memref<8x128xf32, #tpu.memory_space<vmem>>, vector<8x128xf32>
    tpu.vector_store %arg14[%c0_41, %c0_42], %65 {strides = array<i32>} : memref<8x128xf32, #tpu.memory_space<vmem>>, vector<8x128xf32>,
    %c0_43 = arith.constant 0 : index
    %c0_44 = arith.constant 0 : index
    %69 = vector.load %arg13[%c0_43, %c0_44] : memref<8x128xf32, #tpu.memory_space<vmem>>, vector<8x128xf32>
    tpu.vector_store %arg13[%c0_43, %c0_44], %67 {strides = array<i32>} : memref<8x128xf32, #tpu.memory_space<vmem>>, vector<8x128xf32>,
    %70 = arith.index_cast %c1_i32 : i32 to index
    %c0_45 = arith.constant 0 : index
    %c0_46 = arith.constant 0 : index
    %71 = vector.load %arg8[%70, %c0_45, %c0_46] : memref<8x8x128xf32, #tpu.memory_space<vmem>>, vector<1x8x128xf32>
    %72 = vector.shape_cast %71 : vector<1x8x128xf32> to vector<8x128xf32>
    %73 = vector.shape_cast %67 : vector<8x128xf32> to vector<1x8x128xf32>
    tpu.vector_store %arg8[%70, %c0_45, %c0_46], %73 {strides = array<i32>} : memref<8x8x128xf32, #tpu.memory_space<vmem>>, vector<1x8x128xf32>,
    %74 = arith.index_cast %c1_i32 : i32 to index
    %c0_47 = arith.constant 0 : index
    %c0_48 = arith.constant 0 : index
    %75 = vector.load %arg9[%74, %c0_47, %c0_48] : memref<8x8x128xf32, #tpu.memory_space<vmem>>, vector<1x8x128xf32>
    %76 = vector.shape_cast %75 : vector<1x8x128xf32> to vector<8x128xf32>
    %77 = vector.shape_cast %65 : vector<8x128xf32> to vector<1x8x128xf32>
    tpu.vector_store %arg9[%74, %c0_47, %c0_48], %77 {strides = array<i32>} : memref<8x8x128xf32, #tpu.memory_space<vmem>>, vector<1x8x128xf32>,
    %c2_i32 = arith.constant 2 : i32
    %78 = arith.index_cast %c2_i32 : i32 to index
    %c0_49 = arith.constant 0 : index
    %c0_50 = arith.constant 0 : index
    %79 = vector.load %arg12[%78, %c0_49, %c0_50] : memref<8x8x512xf32, #tpu.memory_space<vmem>>, vector<1x8x512xf32>
    %80 = vector.shape_cast %79 : vector<1x8x512xf32> to vector<8x512xf32>
    %c0_51 = arith.constant 0 : index
    %c0_52 = arith.constant 0 : index
    %81 = vector.load %arg13[%c0_51, %c0_52] : memref<8x128xf32, #tpu.memory_space<vmem>>, vector<8x128xf32>
    %c0_53 = arith.constant 0 : index
    %c0_54 = arith.constant 0 : index
    %82 = vector.load %arg11[%c0_53, %c0_54] : memref<128x512xf32, #tpu.memory_space<vmem>>, vector<128x512xf32>
    %cst_55 = arith.constant dense<0.000000e+00> : vector<8x512xf32>
    %83 = tpu.matmul %81, %82, %cst_55 {dimension_numbers = #tpu.dot_dimension_numbers<[1], [0], [0], [1], [0, 0, 1, 1], [], []>} : vector<8x128xf32>, vector<128x512xf32>, vector<8x512xf32> -> vector<8x512xf32>
    %84 = arith.addf %80, %83 : vector<8x512xf32>
    %85 = math.tanh %84 : vector<8x512xf32>
    %86 = vector.extract_strided_slice %85 {offsets = [0, 0], sizes = [8, 384], strides = [1, 1]} : vector<8x512xf32> to vector<8x384xf32>
    %cst_56 = arith.constant 5.000000e-01 : f32
    %87 = vector.broadcast %cst_56 : f32 to vector<8x384xf32>
    %88 = arith.mulf %87, %86 : vector<8x384xf32>
    %cst_57 = arith.constant 5.000000e-01 : f32
    %89 = vector.broadcast %cst_57 : f32 to vector<8x384xf32>
    %90 = arith.addf %88, %89 : vector<8x384xf32>
    %91 = vector.extract_strided_slice %90 {offsets = [0, 0], sizes = [8, 128], strides = [1, 1]} : vector<8x384xf32> to vector<8x128xf32>
    %92 = vector.extract_strided_slice %90 {offsets = [0, 128], sizes = [8, 128], strides = [1, 1]} : vector<8x384xf32> to vector<8x128xf32>
    %93 = vector.extract_strided_slice %90 {offsets = [0, 256], sizes = [8, 128], strides = [1, 1]} : vector<8x384xf32> to vector<8x128xf32>
    %94 = vector.extract_strided_slice %85 {offsets = [0, 384], sizes = [8, 128], strides = [1, 1]} : vector<8x512xf32> to vector<8x128xf32>
    %c0_58 = arith.constant 0 : index
    %c0_59 = arith.constant 0 : index
    %95 = vector.load %arg14[%c0_58, %c0_59] : memref<8x128xf32, #tpu.memory_space<vmem>>, vector<8x128xf32>
    %96 = arith.mulf %92, %95 : vector<8x128xf32>
    %97 = arith.mulf %91, %94 : vector<8x128xf32>
    %98 = arith.addf %96, %97 : vector<8x128xf32>
    %99 = math.tanh %98 : vector<8x128xf32>
    %100 = arith.mulf %93, %99 : vector<8x128xf32>
    %c0_60 = arith.constant 0 : index
    %c0_61 = arith.constant 0 : index
    %101 = vector.load %arg14[%c0_60, %c0_61] : memref<8x128xf32, #tpu.memory_space<vmem>>, vector<8x128xf32>
    tpu.vector_store %arg14[%c0_60, %c0_61], %98 {strides = array<i32>} : memref<8x128xf32, #tpu.memory_space<vmem>>, vector<8x128xf32>,
    %c0_62 = arith.constant 0 : index
    %c0_63 = arith.constant 0 : index
    %102 = vector.load %arg13[%c0_62, %c0_63] : memref<8x128xf32, #tpu.memory_space<vmem>>, vector<8x128xf32>
    tpu.vector_store %arg13[%c0_62, %c0_63], %100 {strides = array<i32>} : memref<8x128xf32, #tpu.memory_space<vmem>>, vector<8x128xf32>,
    %103 = arith.index_cast %c2_i32 : i32 to index
    %c0_64 = arith.constant 0 : index
    %c0_65 = arith.constant 0 : index
    %104 = vector.load %arg8[%103, %c0_64, %c0_65] : memref<8x8x128xf32, #tpu.memory_space<vmem>>, vector<1x8x128xf32>
    %105 = vector.shape_cast %104 : vector<1x8x128xf32> to vector<8x128xf32>
    %106 = vector.shape_cast %100 : vector<8x128xf32> to vector<1x8x128xf32>
    tpu.vector_store %arg8[%103, %c0_64, %c0_65], %106 {strides = array<i32>} : memref<8x8x128xf32, #tpu.memory_space<vmem>>, vector<1x8x128xf32>,
    %107 = arith.index_cast %c2_i32 : i32 to index
    %c0_66 = arith.constant 0 : index
    %c0_67 = arith.constant 0 : index
    %108 = vector.load %arg9[%107, %c0_66, %c0_67] : memref<8x8x128xf32, #tpu.memory_space<vmem>>, vector<1x8x128xf32>
    %109 = vector.shape_cast %108 : vector<1x8x128xf32> to vector<8x128xf32>
    %110 = vector.shape_cast %98 : vector<8x128xf32> to vector<1x8x128xf32>
    tpu.vector_store %arg9[%107, %c0_66, %c0_67], %110 {strides = array<i32>} : memref<8x8x128xf32, #tpu.memory_space<vmem>>, vector<1x8x128xf32>,
    %c3_i32 = arith.constant 3 : i32
    %111 = arith.index_cast %c3_i32 : i32 to index
    %c0_68 = arith.constant 0 : index
    %c0_69 = arith.constant 0 : index
    %112 = vector.load %arg12[%111, %c0_68, %c0_69] : memref<8x8x512xf32, #tpu.memory_space<vmem>>, vector<1x8x512xf32>
    %113 = vector.shape_cast %112 : vector<1x8x512xf32> to vector<8x512xf32>
    %c0_70 = arith.constant 0 : index
    %c0_71 = arith.constant 0 : index
    %114 = vector.load %arg13[%c0_70, %c0_71] : memref<8x128xf32, #tpu.memory_space<vmem>>, vector<8x128xf32>
    %c0_72 = arith.constant 0 : index
    %c0_73 = arith.constant 0 : index
    %115 = vector.load %arg11[%c0_72, %c0_73] : memref<128x512xf32, #tpu.memory_space<vmem>>, vector<128x512xf32>
    %cst_74 = arith.constant dense<0.000000e+00> : vector<8x512xf32>
    %116 = tpu.matmul %114, %115, %cst_74 {dimension_numbers = #tpu.dot_dimension_numbers<[1], [0], [0], [1], [0, 0, 1, 1], [], []>} : vector<8x128xf32>, vector<128x512xf32>, vector<8x512xf32> -> vector<8x512xf32>
    %117 = arith.addf %113, %116 : vector<8x512xf32>
    %118 = math.tanh %117 : vector<8x512xf32>
    %119 = vector.extract_strided_slice %118 {offsets = [0, 0], sizes = [8, 384], strides = [1, 1]} : vector<8x512xf32> to vector<8x384xf32>
    %cst_75 = arith.constant 5.000000e-01 : f32
    %120 = vector.broadcast %cst_75 : f32 to vector<8x384xf32>
    %121 = arith.mulf %120, %119 : vector<8x384xf32>
    %cst_76 = arith.constant 5.000000e-01 : f32
    %122 = vector.broadcast %cst_76 : f32 to vector<8x384xf32>
    %123 = arith.addf %121, %122 : vector<8x384xf32>
    %124 = vector.extract_strided_slice %123 {offsets = [0, 0], sizes = [8, 128], strides = [1, 1]} : vector<8x384xf32> to vector<8x128xf32>
    %125 = vector.extract_strided_slice %123 {offsets = [0, 128], sizes = [8, 128], strides = [1, 1]} : vector<8x384xf32> to vector<8x128xf32>
    %126 = vector.extract_strided_slice %123 {offsets = [0, 256], sizes = [8, 128], strides = [1, 1]} : vector<8x384xf32> to vector<8x128xf32>
    %127 = vector.extract_strided_slice %118 {offsets = [0, 384], sizes = [8, 128], strides = [1, 1]} : vector<8x512xf32> to vector<8x128xf32>
    %c0_77 = arith.constant 0 : index
    %c0_78 = arith.constant 0 : index
    %128 = vector.load %arg14[%c0_77, %c0_78] : memref<8x128xf32, #tpu.memory_space<vmem>>, vector<8x128xf32>
    %129 = arith.mulf %125, %128 : vector<8x128xf32>
    %130 = arith.mulf %124, %127 : vector<8x128xf32>
    %131 = arith.addf %129, %130 : vector<8x128xf32>
    %132 = math.tanh %131 : vector<8x128xf32>
    %133 = arith.mulf %126, %132 : vector<8x128xf32>
    %c0_79 = arith.constant 0 : index
    %c0_80 = arith.constant 0 : index
    %134 = vector.load %arg14[%c0_79, %c0_80] : memref<8x128xf32, #tpu.memory_space<vmem>>, vector<8x128xf32>
    tpu.vector_store %arg14[%c0_79, %c0_80], %131 {strides = array<i32>} : memref<8x128xf32, #tpu.memory_space<vmem>>, vector<8x128xf32>,
    %c0_81 = arith.constant 0 : index
    %c0_82 = arith.constant 0 : index
    %135 = vector.load %arg13[%c0_81, %c0_82] : memref<8x128xf32, #tpu.memory_space<vmem>>, vector<8x128xf32>
    tpu.vector_store %arg13[%c0_81, %c0_82], %133 {strides = array<i32>} : memref<8x128xf32, #tpu.memory_space<vmem>>, vector<8x128xf32>,
    %136 = arith.index_cast %c3_i32 : i32 to index
    %c0_83 = arith.constant 0 : index
    %c0_84 = arith.constant 0 : index
    %137 = vector.load %arg8[%136, %c0_83, %c0_84] : memref<8x8x128xf32, #tpu.memory_space<vmem>>, vector<1x8x128xf32>
    %138 = vector.shape_cast %137 : vector<1x8x128xf32> to vector<8x128xf32>
    %139 = vector.shape_cast %133 : vector<8x128xf32> to vector<1x8x128xf32>
    tpu.vector_store %arg8[%136, %c0_83, %c0_84], %139 {strides = array<i32>} : memref<8x8x128xf32, #tpu.memory_space<vmem>>, vector<1x8x128xf32>,
    %140 = arith.index_cast %c3_i32 : i32 to index
    %c0_85 = arith.constant 0 : index
    %c0_86 = arith.constant 0 : index
    %141 = vector.load %arg9[%140, %c0_85, %c0_86] : memref<8x8x128xf32, #tpu.memory_space<vmem>>, vector<1x8x128xf32>
    %142 = vector.shape_cast %141 : vector<1x8x128xf32> to vector<8x128xf32>
    %143 = vector.shape_cast %131 : vector<8x128xf32> to vector<1x8x128xf32>
    tpu.vector_store %arg9[%140, %c0_85, %c0_86], %143 {strides = array<i32>} : memref<8x8x128xf32, #tpu.memory_space<vmem>>, vector<1x8x128xf32>,
    %c4_i32 = arith.constant 4 : i32
    %144 = arith.index_cast %c4_i32 : i32 to index
    %c0_87 = arith.constant 0 : index
    %c0_88 = arith.constant 0 : index
    %145 = vector.load %arg12[%144, %c0_87, %c0_88] : memref<8x8x512xf32, #tpu.memory_space<vmem>>, vector<1x8x512xf32>
    %146 = vector.shape_cast %145 : vector<1x8x512xf32> to vector<8x512xf32>
    %c0_89 = arith.constant 0 : index
    %c0_90 = arith.constant 0 : index
    %147 = vector.load %arg13[%c0_89, %c0_90] : memref<8x128xf32, #tpu.memory_space<vmem>>, vector<8x128xf32>
    %c0_91 = arith.constant 0 : index
    %c0_92 = arith.constant 0 : index
    %148 = vector.load %arg11[%c0_91, %c0_92] : memref<128x512xf32, #tpu.memory_space<vmem>>, vector<128x512xf32>
    %cst_93 = arith.constant dense<0.000000e+00> : vector<8x512xf32>
    %149 = tpu.matmul %147, %148, %cst_93 {dimension_numbers = #tpu.dot_dimension_numbers<[1], [0], [0], [1], [0, 0, 1, 1], [], []>} : vector<8x128xf32>, vector<128x512xf32>, vector<8x512xf32> -> vector<8x512xf32>
    %150 = arith.addf %146, %149 : vector<8x512xf32>
    %151 = math.tanh %150 : vector<8x512xf32>
    %152 = vector.extract_strided_slice %151 {offsets = [0, 0], sizes = [8, 384], strides = [1, 1]} : vector<8x512xf32> to vector<8x384xf32>
    %cst_94 = arith.constant 5.000000e-01 : f32
    %153 = vector.broadcast %cst_94 : f32 to vector<8x384xf32>
    %154 = arith.mulf %153, %152 : vector<8x384xf32>
    %cst_95 = arith.constant 5.000000e-01 : f32
    %155 = vector.broadcast %cst_95 : f32 to vector<8x384xf32>
    %156 = arith.addf %154, %155 : vector<8x384xf32>
    %157 = vector.extract_strided_slice %156 {offsets = [0, 0], sizes = [8, 128], strides = [1, 1]} : vector<8x384xf32> to vector<8x128xf32>
    %158 = vector.extract_strided_slice %156 {offsets = [0, 128], sizes = [8, 128], strides = [1, 1]} : vector<8x384xf32> to vector<8x128xf32>
    %159 = vector.extract_strided_slice %156 {offsets = [0, 256], sizes = [8, 128], strides = [1, 1]} : vector<8x384xf32> to vector<8x128xf32>
    %160 = vector.extract_strided_slice %151 {offsets = [0, 384], sizes = [8, 128], strides = [1, 1]} : vector<8x512xf32> to vector<8x128xf32>
    %c0_96 = arith.constant 0 : index
    %c0_97 = arith.constant 0 : index
    %161 = vector.load %arg14[%c0_96, %c0_97] : memref<8x128xf32, #tpu.memory_space<vmem>>, vector<8x128xf32>
    %162 = arith.mulf %158, %161 : vector<8x128xf32>
    %163 = arith.mulf %157, %160 : vector<8x128xf32>
    %164 = arith.addf %162, %163 : vector<8x128xf32>
    %165 = math.tanh %164 : vector<8x128xf32>
    %166 = arith.mulf %159, %165 : vector<8x128xf32>
    %c0_98 = arith.constant 0 : index
    %c0_99 = arith.constant 0 : index
    %167 = vector.load %arg14[%c0_98, %c0_99] : memref<8x128xf32, #tpu.memory_space<vmem>>, vector<8x128xf32>
    tpu.vector_store %arg14[%c0_98, %c0_99], %164 {strides = array<i32>} : memref<8x128xf32, #tpu.memory_space<vmem>>, vector<8x128xf32>,
    %c0_100 = arith.constant 0 : index
    %c0_101 = arith.constant 0 : index
    %168 = vector.load %arg13[%c0_100, %c0_101] : memref<8x128xf32, #tpu.memory_space<vmem>>, vector<8x128xf32>
    tpu.vector_store %arg13[%c0_100, %c0_101], %166 {strides = array<i32>} : memref<8x128xf32, #tpu.memory_space<vmem>>, vector<8x128xf32>,
    %169 = arith.index_cast %c4_i32 : i32 to index
    %c0_102 = arith.constant 0 : index
    %c0_103 = arith.constant 0 : index
    %170 = vector.load %arg8[%169, %c0_102, %c0_103] : memref<8x8x128xf32, #tpu.memory_space<vmem>>, vector<1x8x128xf32>
    %171 = vector.shape_cast %170 : vector<1x8x128xf32> to vector<8x128xf32>
    %172 = vector.shape_cast %166 : vector<8x128xf32> to vector<1x8x128xf32>
    tpu.vector_store %arg8[%169, %c0_102, %c0_103], %172 {strides = array<i32>} : memref<8x8x128xf32, #tpu.memory_space<vmem>>, vector<1x8x128xf32>,
    %173 = arith.index_cast %c4_i32 : i32 to index
    %c0_104 = arith.constant 0 : index
    %c0_105 = arith.constant 0 : index
    %174 = vector.load %arg9[%173, %c0_104, %c0_105] : memref<8x8x128xf32, #tpu.memory_space<vmem>>, vector<1x8x128xf32>
    %175 = vector.shape_cast %174 : vector<1x8x128xf32> to vector<8x128xf32>
    %176 = vector.shape_cast %164 : vector<8x128xf32> to vector<1x8x128xf32>
    tpu.vector_store %arg9[%173, %c0_104, %c0_105], %176 {strides = array<i32>} : memref<8x8x128xf32, #tpu.memory_space<vmem>>, vector<1x8x128xf32>,
    %c5_i32 = arith.constant 5 : i32
    %177 = arith.index_cast %c5_i32 : i32 to index
    %c0_106 = arith.constant 0 : index
    %c0_107 = arith.constant 0 : index
    %178 = vector.load %arg12[%177, %c0_106, %c0_107] : memref<8x8x512xf32, #tpu.memory_space<vmem>>, vector<1x8x512xf32>
    %179 = vector.shape_cast %178 : vector<1x8x512xf32> to vector<8x512xf32>
    %c0_108 = arith.constant 0 : index
    %c0_109 = arith.constant 0 : index
    %180 = vector.load %arg13[%c0_108, %c0_109] : memref<8x128xf32, #tpu.memory_space<vmem>>, vector<8x128xf32>
    %c0_110 = arith.constant 0 : index
    %c0_111 = arith.constant 0 : index
    %181 = vector.load %arg11[%c0_110, %c0_111] : memref<128x512xf32, #tpu.memory_space<vmem>>, vector<128x512xf32>
    %cst_112 = arith.constant dense<0.000000e+00> : vector<8x512xf32>
    %182 = tpu.matmul %180, %181, %cst_112 {dimension_numbers = #tpu.dot_dimension_numbers<[1], [0], [0], [1], [0, 0, 1, 1], [], []>} : vector<8x128xf32>, vector<128x512xf32>, vector<8x512xf32> -> vector<8x512xf32>
    %183 = arith.addf %179, %182 : vector<8x512xf32>
    %184 = math.tanh %183 : vector<8x512xf32>
    %185 = vector.extract_strided_slice %184 {offsets = [0, 0], sizes = [8, 384], strides = [1, 1]} : vector<8x512xf32> to vector<8x384xf32>
    %cst_113 = arith.constant 5.000000e-01 : f32
    %186 = vector.broadcast %cst_113 : f32 to vector<8x384xf32>
    %187 = arith.mulf %186, %185 : vector<8x384xf32>
    %cst_114 = arith.constant 5.000000e-01 : f32
    %188 = vector.broadcast %cst_114 : f32 to vector<8x384xf32>
    %189 = arith.addf %187, %188 : vector<8x384xf32>
    %190 = vector.extract_strided_slice %189 {offsets = [0, 0], sizes = [8, 128], strides = [1, 1]} : vector<8x384xf32> to vector<8x128xf32>
    %191 = vector.extract_strided_slice %189 {offsets = [0, 128], sizes = [8, 128], strides = [1, 1]} : vector<8x384xf32> to vector<8x128xf32>
    %192 = vector.extract_strided_slice %189 {offsets = [0, 256], sizes = [8, 128], strides = [1, 1]} : vector<8x384xf32> to vector<8x128xf32>
    %193 = vector.extract_strided_slice %184 {offsets = [0, 384], sizes = [8, 128], strides = [1, 1]} : vector<8x512xf32> to vector<8x128xf32>
    %c0_115 = arith.constant 0 : index
    %c0_116 = arith.constant 0 : index
    %194 = vector.load %arg14[%c0_115, %c0_116] : memref<8x128xf32, #tpu.memory_space<vmem>>, vector<8x128xf32>
    %195 = arith.mulf %191, %194 : vector<8x128xf32>
    %196 = arith.mulf %190, %193 : vector<8x128xf32>
    %197 = arith.addf %195, %196 : vector<8x128xf32>
    %198 = math.tanh %197 : vector<8x128xf32>
    %199 = arith.mulf %192, %198 : vector<8x128xf32>
    %c0_117 = arith.constant 0 : index
    %c0_118 = arith.constant 0 : index
    %200 = vector.load %arg14[%c0_117, %c0_118] : memref<8x128xf32, #tpu.memory_space<vmem>>, vector<8x128xf32>
    tpu.vector_store %arg14[%c0_117, %c0_118], %197 {strides = array<i32>} : memref<8x128xf32, #tpu.memory_space<vmem>>, vector<8x128xf32>,
    %c0_119 = arith.constant 0 : index
    %c0_120 = arith.constant 0 : index
    %201 = vector.load %arg13[%c0_119, %c0_120] : memref<8x128xf32, #tpu.memory_space<vmem>>, vector<8x128xf32>
    tpu.vector_store %arg13[%c0_119, %c0_120], %199 {strides = array<i32>} : memref<8x128xf32, #tpu.memory_space<vmem>>, vector<8x128xf32>,
    %202 = arith.index_cast %c5_i32 : i32 to index
    %c0_121 = arith.constant 0 : index
    %c0_122 = arith.constant 0 : index
    %203 = vector.load %arg8[%202, %c0_121, %c0_122] : memref<8x8x128xf32, #tpu.memory_space<vmem>>, vector<1x8x128xf32>
    %204 = vector.shape_cast %203 : vector<1x8x128xf32> to vector<8x128xf32>
    %205 = vector.shape_cast %199 : vector<8x128xf32> to vector<1x8x128xf32>
    tpu.vector_store %arg8[%202, %c0_121, %c0_122], %205 {strides = array<i32>} : memref<8x8x128xf32, #tpu.memory_space<vmem>>, vector<1x8x128xf32>,
    %206 = arith.index_cast %c5_i32 : i32 to index
    %c0_123 = arith.constant 0 : index
    %c0_124 = arith.constant 0 : index
    %207 = vector.load %arg9[%206, %c0_123, %c0_124] : memref<8x8x128xf32, #tpu.memory_space<vmem>>, vector<1x8x128xf32>
    %208 = vector.shape_cast %207 : vector<1x8x128xf32> to vector<8x128xf32>
    %209 = vector.shape_cast %197 : vector<8x128xf32> to vector<1x8x128xf32>
    tpu.vector_store %arg9[%206, %c0_123, %c0_124], %209 {strides = array<i32>} : memref<8x8x128xf32, #tpu.memory_space<vmem>>, vector<1x8x128xf32>,
    %c6_i32 = arith.constant 6 : i32
    %210 = arith.index_cast %c6_i32 : i32 to index
    %c0_125 = arith.constant 0 : index
    %c0_126 = arith.constant 0 : index
    %211 = vector.load %arg12[%210, %c0_125, %c0_126] : memref<8x8x512xf32, #tpu.memory_space<vmem>>, vector<1x8x512xf32>
    %212 = vector.shape_cast %211 : vector<1x8x512xf32> to vector<8x512xf32>
    %c0_127 = arith.constant 0 : index
    %c0_128 = arith.constant 0 : index
    %213 = vector.load %arg13[%c0_127, %c0_128] : memref<8x128xf32, #tpu.memory_space<vmem>>, vector<8x128xf32>
    %c0_129 = arith.constant 0 : index
    %c0_130 = arith.constant 0 : index
    %214 = vector.load %arg11[%c0_129, %c0_130] : memref<128x512xf32, #tpu.memory_space<vmem>>, vector<128x512xf32>
    %cst_131 = arith.constant dense<0.000000e+00> : vector<8x512xf32>
    %215 = tpu.matmul %213, %214, %cst_131 {dimension_numbers = #tpu.dot_dimension_numbers<[1], [0], [0], [1], [0, 0, 1, 1], [], []>} : vector<8x128xf32>, vector<128x512xf32>, vector<8x512xf32> -> vector<8x512xf32>
    %216 = arith.addf %212, %215 : vector<8x512xf32>
    %217 = math.tanh %216 : vector<8x512xf32>
    %218 = vector.extract_strided_slice %217 {offsets = [0, 0], sizes = [8, 384], strides = [1, 1]} : vector<8x512xf32> to vector<8x384xf32>
    %cst_132 = arith.constant 5.000000e-01 : f32
    %219 = vector.broadcast %cst_132 : f32 to vector<8x384xf32>
    %220 = arith.mulf %219, %218 : vector<8x384xf32>
    %cst_133 = arith.constant 5.000000e-01 : f32
    %221 = vector.broadcast %cst_133 : f32 to vector<8x384xf32>
    %222 = arith.addf %220, %221 : vector<8x384xf32>
    %223 = vector.extract_strided_slice %222 {offsets = [0, 0], sizes = [8, 128], strides = [1, 1]} : vector<8x384xf32> to vector<8x128xf32>
    %224 = vector.extract_strided_slice %222 {offsets = [0, 128], sizes = [8, 128], strides = [1, 1]} : vector<8x384xf32> to vector<8x128xf32>
    %225 = vector.extract_strided_slice %222 {offsets = [0, 256], sizes = [8, 128], strides = [1, 1]} : vector<8x384xf32> to vector<8x128xf32>
    %226 = vector.extract_strided_slice %217 {offsets = [0, 384], sizes = [8, 128], strides = [1, 1]} : vector<8x512xf32> to vector<8x128xf32>
    %c0_134 = arith.constant 0 : index
    %c0_135 = arith.constant 0 : index
    %227 = vector.load %arg14[%c0_134, %c0_135] : memref<8x128xf32, #tpu.memory_space<vmem>>, vector<8x128xf32>
    %228 = arith.mulf %224, %227 : vector<8x128xf32>
    %229 = arith.mulf %223, %226 : vector<8x128xf32>
    %230 = arith.addf %228, %229 : vector<8x128xf32>
    %231 = math.tanh %230 : vector<8x128xf32>
    %232 = arith.mulf %225, %231 : vector<8x128xf32>
    %c0_136 = arith.constant 0 : index
    %c0_137 = arith.constant 0 : index
    %233 = vector.load %arg14[%c0_136, %c0_137] : memref<8x128xf32, #tpu.memory_space<vmem>>, vector<8x128xf32>
    tpu.vector_store %arg14[%c0_136, %c0_137], %230 {strides = array<i32>} : memref<8x128xf32, #tpu.memory_space<vmem>>, vector<8x128xf32>,
    %c0_138 = arith.constant 0 : index
    %c0_139 = arith.constant 0 : index
    %234 = vector.load %arg13[%c0_138, %c0_139] : memref<8x128xf32, #tpu.memory_space<vmem>>, vector<8x128xf32>
    tpu.vector_store %arg13[%c0_138, %c0_139], %232 {strides = array<i32>} : memref<8x128xf32, #tpu.memory_space<vmem>>, vector<8x128xf32>,
    %235 = arith.index_cast %c6_i32 : i32 to index
    %c0_140 = arith.constant 0 : index
    %c0_141 = arith.constant 0 : index
    %236 = vector.load %arg8[%235, %c0_140, %c0_141] : memref<8x8x128xf32, #tpu.memory_space<vmem>>, vector<1x8x128xf32>
    %237 = vector.shape_cast %236 : vector<1x8x128xf32> to vector<8x128xf32>
    %238 = vector.shape_cast %232 : vector<8x128xf32> to vector<1x8x128xf32>
    tpu.vector_store %arg8[%235, %c0_140, %c0_141], %238 {strides = array<i32>} : memref<8x8x128xf32, #tpu.memory_space<vmem>>, vector<1x8x128xf32>,
    %239 = arith.index_cast %c6_i32 : i32 to index
    %c0_142 = arith.constant 0 : index
    %c0_143 = arith.constant 0 : index
    %240 = vector.load %arg9[%239, %c0_142, %c0_143] : memref<8x8x128xf32, #tpu.memory_space<vmem>>, vector<1x8x128xf32>
    %241 = vector.shape_cast %240 : vector<1x8x128xf32> to vector<8x128xf32>
    %242 = vector.shape_cast %230 : vector<8x128xf32> to vector<1x8x128xf32>
    tpu.vector_store %arg9[%239, %c0_142, %c0_143], %242 {strides = array<i32>} : memref<8x8x128xf32, #tpu.memory_space<vmem>>, vector<1x8x128xf32>,
    %c7_i32 = arith.constant 7 : i32
    %243 = arith.index_cast %c7_i32 : i32 to index
    %c0_144 = arith.constant 0 : index
    %c0_145 = arith.constant 0 : index
    %244 = vector.load %arg12[%243, %c0_144, %c0_145] : memref<8x8x512xf32, #tpu.memory_space<vmem>>, vector<1x8x512xf32>
    %245 = vector.shape_cast %244 : vector<1x8x512xf32> to vector<8x512xf32>
    %c0_146 = arith.constant 0 : index
    %c0_147 = arith.constant 0 : index
    %246 = vector.load %arg13[%c0_146, %c0_147] : memref<8x128xf32, #tpu.memory_space<vmem>>, vector<8x128xf32>
    %c0_148 = arith.constant 0 : index
    %c0_149 = arith.constant 0 : index
    %247 = vector.load %arg11[%c0_148, %c0_149] : memref<128x512xf32, #tpu.memory_space<vmem>>, vector<128x512xf32>
    %cst_150 = arith.constant dense<0.000000e+00> : vector<8x512xf32>
    %248 = tpu.matmul %246, %247, %cst_150 {dimension_numbers = #tpu.dot_dimension_numbers<[1], [0], [0], [1], [0, 0, 1, 1], [], []>} : vector<8x128xf32>, vector<128x512xf32>, vector<8x512xf32> -> vector<8x512xf32>
    %249 = arith.addf %245, %248 : vector<8x512xf32>
    %250 = math.tanh %249 : vector<8x512xf32>
    %251 = vector.extract_strided_slice %250 {offsets = [0, 0], sizes = [8, 384], strides = [1, 1]} : vector<8x512xf32> to vector<8x384xf32>
    %cst_151 = arith.constant 5.000000e-01 : f32
    %252 = vector.broadcast %cst_151 : f32 to vector<8x384xf32>
    %253 = arith.mulf %252, %251 : vector<8x384xf32>
    %cst_152 = arith.constant 5.000000e-01 : f32
    %254 = vector.broadcast %cst_152 : f32 to vector<8x384xf32>
    %255 = arith.addf %253, %254 : vector<8x384xf32>
    %256 = vector.extract_strided_slice %255 {offsets = [0, 0], sizes = [8, 128], strides = [1, 1]} : vector<8x384xf32> to vector<8x128xf32>
    %257 = vector.extract_strided_slice %255 {offsets = [0, 128], sizes = [8, 128], strides = [1, 1]} : vector<8x384xf32> to vector<8x128xf32>
    %258 = vector.extract_strided_slice %255 {offsets = [0, 256], sizes = [8, 128], strides = [1, 1]} : vector<8x384xf32> to vector<8x128xf32>
    %259 = vector.extract_strided_slice %250 {offsets = [0, 384], sizes = [8, 128], strides = [1, 1]} : vector<8x512xf32> to vector<8x128xf32>
    %c0_153 = arith.constant 0 : index
    %c0_154 = arith.constant 0 : index
    %260 = vector.load %arg14[%c0_153, %c0_154] : memref<8x128xf32, #tpu.memory_space<vmem>>, vector<8x128xf32>
    %261 = arith.mulf %257, %260 : vector<8x128xf32>
    %262 = arith.mulf %256, %259 : vector<8x128xf32>
    %263 = arith.addf %261, %262 : vector<8x128xf32>
    %264 = math.tanh %263 : vector<8x128xf32>
    %265 = arith.mulf %258, %264 : vector<8x128xf32>
    %c0_155 = arith.constant 0 : index
    %c0_156 = arith.constant 0 : index
    %266 = vector.load %arg14[%c0_155, %c0_156] : memref<8x128xf32, #tpu.memory_space<vmem>>, vector<8x128xf32>
    tpu.vector_store %arg14[%c0_155, %c0_156], %263 {strides = array<i32>} : memref<8x128xf32, #tpu.memory_space<vmem>>, vector<8x128xf32>,
    %c0_157 = arith.constant 0 : index
    %c0_158 = arith.constant 0 : index
    %267 = vector.load %arg13[%c0_157, %c0_158] : memref<8x128xf32, #tpu.memory_space<vmem>>, vector<8x128xf32>
    tpu.vector_store %arg13[%c0_157, %c0_158], %265 {strides = array<i32>} : memref<8x128xf32, #tpu.memory_space<vmem>>, vector<8x128xf32>,
    %268 = arith.index_cast %c7_i32 : i32 to index
    %c0_159 = arith.constant 0 : index
    %c0_160 = arith.constant 0 : index
    %269 = vector.load %arg8[%268, %c0_159, %c0_160] : memref<8x8x128xf32, #tpu.memory_space<vmem>>, vector<1x8x128xf32>
    %270 = vector.shape_cast %269 : vector<1x8x128xf32> to vector<8x128xf32>
    %271 = vector.shape_cast %265 : vector<8x128xf32> to vector<1x8x128xf32>
    tpu.vector_store %arg8[%268, %c0_159, %c0_160], %271 {strides = array<i32>} : memref<8x8x128xf32, #tpu.memory_space<vmem>>, vector<1x8x128xf32>,
    %272 = arith.index_cast %c7_i32 : i32 to index
    %c0_161 = arith.constant 0 : index
    %c0_162 = arith.constant 0 : index
    %273 = vector.load %arg9[%272, %c0_161, %c0_162] : memref<8x8x128xf32, #tpu.memory_space<vmem>>, vector<1x8x128xf32>
    %274 = vector.shape_cast %273 : vector<1x8x128xf32> to vector<8x128xf32>
    %275 = vector.shape_cast %263 : vector<8x128xf32> to vector<1x8x128xf32>
    tpu.vector_store %arg9[%272, %c0_161, %c0_162], %275 {strides = array<i32>} : memref<8x8x128xf32, #tpu.memory_space<vmem>>, vector<1x8x128xf32>,
    %c8_i32 = arith.constant 8 : i32
    return
  }
  func.func @transform_0(%arg0: i32, %arg1: i32) -> (i32, i32, i32) {
    %c0_i32 = arith.constant 0 : i32
    %c0_i32_0 = arith.constant 0 : i32
    return %arg1, %arg0, %c0_i32 : i32, i32, i32
  }
  func.func @transform_1(%arg0: i32, %arg1: i32) -> (i32, i32) {
    %c0_i32 = arith.constant 0 : i32
    %c0_i32_0 = arith.constant 0 : i32
    return %arg0, %c0_i32 : i32, i32
  }
  func.func @transform_2(%arg0: i32, %arg1: i32) -> (i32, i32) {
    %c0_i32 = arith.constant 0 : i32
    %c0_i32_0 = arith.constant 0 : i32
    return %arg0, %c0_i32 : i32, i32
  }
  func.func @transform_3(%arg0: i32, %arg1: i32) -> (i32, i32) {
    %c0_i32 = arith.constant 0 : i32
    %c0_i32_0 = arith.constant 0 : i32
    %c0_i32_1 = arith.constant 0 : i32
    return %c0_i32, %c0_i32_0 : i32, i32
  }
  func.func @transform_6(%arg0: i32, %arg1: i32) -> (i32, i32, i32) {
    %c0_i32 = arith.constant 0 : i32
    %c0_i32_0 = arith.constant 0 : i32
    return %arg1, %arg0, %c0_i32 : i32, i32, i32
  }
  func.func @transform_7(%arg0: i32, %arg1: i32) -> (i32, i32, i32) {
    %c0_i32 = arith.constant 0 : i32
    %c0_i32_0 = arith.constant 0 : i32
    return %arg1, %arg0, %c0_i32 : i32, i32, i32
  }
}

</mosaic_0001>

<llo_original>
// kernel: tpu_custom_call.1
$region0: #{tpu_custom_call.1}
  #allocation0 [shape = 'u32[]', space=smem, size = 0x4, offset = 0x4, fixed_abs, tag = 'smem constant byte address 0x4 - core index']
  #allocation1 [shape = 'u32[72,128]{1,0:T(1,128)}', space=vmem, size = 0x9000, scoped, tag = 'internal scratch']
  #allocation2 [shape = 'f32[128,512]{1,0:T(8,128)}', space=vmem, size = 0x40000, scoped, tag = 'scratch operand']
  #allocation3 [shape = 'f32[128,512]{1,0:T(8,128)}', space=vmem, size = 0x40000, scoped, tag = 'scratch operand']
  #allocation4 [shape = 'f32[8,8,512]{2,1,0:T(8,128)}', space=vmem, size = 0x20000, scoped, tag = 'scratch operand']
  #allocation5 [shape = 'f32[8,128]{1,0:T(8,128)}', space=vmem, size = 0x1000, scoped, tag = 'scratch operand']
  #allocation6 [shape = 'f32[8,128]{1,0:T(8,128)}', space=vmem, size = 0x1000, scoped, tag = 'scratch operand']
  #allocation7 [shape = 's32[2]{0}', space=sflag, size = 0x8, scoped, tag = 'scratch operand']
  #allocation19 [shape = 's32[]', space=sflag, size = 0x4, offset = 0, fixed_abs, tag = 'sflag constant byte address 0x0 - dummy sync flag']
  #allocation20 [shape = 's32[]', space=sflag, size = 0x4, offset = 0, fixed_abs, tag = 'sflag constant byte address 0x0 - dummy sync flag']
  #allocation21 [shape = 'u32[]', space=smem, size = 0x4, offset = 0x44, fixed_abs, tag = 'smem constant byte address 0x44 - assertion arg 0']
  #allocation22 [shape = 'u32[]', space=smem, size = 0x4, offset = 0x48, fixed_abs, tag = 'smem constant byte address 0x48 - assertion arg 1']
  #allocation23 [shape = 's32[]', space=sflag, size = 0x4, offset = 0, fixed_abs, tag = 'sflag constant byte address 0x0 - dummy sync flag']
  #allocation24 [shape = 's32[]', space=sflag, size = 0x4, offset = 0, fixed_abs, tag = 'sflag constant byte address 0x0 - dummy sync flag']
  %s0 = inlined_call_operand.hbm [shape: f32[8,8,128], index: 0, kind: input, shape index: {}]
  %s1 = inlined_call_operand.hbm [shape: f32[8,128], index: 1, kind: input, shape index: {}]
  %s2 = inlined_call_operand.hbm [shape: f32[8,128], index: 2, kind: input, shape index: {}]
  %s3 = inlined_call_operand.hbm [shape: f32[1,512], index: 3, kind: input, shape index: {}]
  %s4 = inlined_call_operand.hbm [shape: f32[128,512], index: 4, kind: input, shape index: {}]
  %s5 = inlined_call_operand.hbm [shape: f32[128,512], index: 5, kind: input, shape index: {}]
  %s6 = inlined_call_operand.hbm [shape: f32[8,8,128], index: 6, kind: output, shape index: {0}]
  %s7 = inlined_call_operand.hbm [shape: f32[8,8,128], index: 7, kind: output, shape index: {1}]
  %8 = xla_tuple %s6, %s7
  %s9 = sld [smem:[#allocation0]]
  $region62: #{tpu_custom_call.1} parent=0
    _
  %s11 = ssub.s32 1, %s9
  %s12 = scalar_select 0, %s11, %s9
  $region1: #{tpu_custom_call.1} parent=0
    #allocation8 [shape = 'u8[32768]{0}', space=vmem, size = 0x8000, scoped, tag = 'input window, operand 0, single buffered']
    #allocation9 [shape = 's32[1]{0}', space=sflag, size = 0x4, scoped, tag = 'scoped memory for tpu_custom_call.1']
    #allocation10 [shape = 's32[1]{0}', space=sflag, size = 0x4, scoped, tag = 'scoped memory for tpu_custom_call.1']
    #allocation11 [shape = 'u8[4096]{0}', space=vmem, size = 0x1000, scoped, tag = 'input window, operand 1, single buffered']
    #allocation12 [shape = 's32[1]{0}', space=sflag, size = 0x4, scoped, tag = 'scoped memory for tpu_custom_call.1']
    #allocation13 [shape = 'u8[4096]{0}', space=vmem, size = 0x1000, scoped, tag = 'input window, operand 2, single buffered']
    #allocation14 [shape = 'u8[2048]{0}', space=vmem, size = 0x800, scoped, tag = 'input window, operand 3, single buffered']
    #allocation15 [shape = 's32[1]{0}', space=sflag, size = 0x4, scoped, tag = 'scoped memory for tpu_custom_call.1']
    #allocation16 [shape = 'u8[32768]{0}', space=vmem, size = 0x8000, scoped, tag = 'output window, operand 0, single buffered']
    #allocation17 [shape = 'u8[32768]{0}', space=vmem, size = 0x8000, scoped, tag = 'output window, operand 1, single buffered']
    #allocation18 [shape = 's32[1]{0}', space=sflag, size = 0x4, scoped, tag = 'scoped memory for tpu_custom_call.1']
    %13 = vsyncpa [#allocation9], 0
    %14 = vsyncpa [#allocation12], 0
    %15 = vsyncpa [#allocation15], 0
    %16 = vsyncpa [#allocation10], 0
    %17 = vsyncpa [#allocation18], 0
    // Predicated region
    $region2: #{tpu_custom_call.1} parent=1 // pred_check
      _
    $region3: #{tpu_custom_call.1} parent=1 // pred_check_branch
      %19 = sbr.rel (0) target = $region5
    $region4: #{tpu_custom_call.1} parent=1 // pred_region
      %21 = vsyncadd [#allocation9], 0
      %s22 = sshll.u32 %s0, 4
      %s23 = int_to_ptr.hbm [resolvable:$true] %s22
      %s24 = sshll.u32 [#allocation8], 4
      %s25 = int_to_ptr.vmem [resolvable:$true] %s24
      %30 = dma.hbm_to_vmem [thread:$0]  %s23, 1024, %s25, [#allocation9], 128, 128, 8
    $region5: #{tpu_custom_call.1} parent=1 // pred_fallthru
      _
    // Predicated region
    $region6: #{tpu_custom_call.1} parent=1 // pred_check
      _
    $region7: #{tpu_custom_call.1} parent=1 // pred_check_branch
      %32 = sbr.rel (0) target = $region9
    $region8: #{tpu_custom_call.1} parent=1 // pred_region
      %34 = vsyncadd [#allocation12], 0
      %s36 = sshll.u32 %s1, 4
      %s37 = int_to_ptr.hbm [resolvable:$true] %s36
      %s38 = sshll.u32 [#allocation11], 4
      %s39 = int_to_ptr.vmem [resolvable:$true] %s38
      %41 = dma.hbm_to_vmem [thread:$0]  %s37, 128, %s39, [#allocation12]
    $region9: #{tpu_custom_call.1} parent=1 // pred_fallthru
      _
    // Predicated region
    $region10: #{tpu_custom_call.1} parent=1 // pred_check
      _
    $region11: #{tpu_custom_call.1} parent=1 // pred_check_branch
      %43 = sbr.rel (0) target = $region13
    $region12: #{tpu_custom_call.1} parent=1 // pred_region
      %45 = vsyncadd [#allocation12], 0
      %s47 = sshll.u32 %s2, 4
      %s48 = int_to_ptr.hbm [resolvable:$true] %s47
      %s49 = sshll.u32 [#allocation13], 4
      %s50 = int_to_ptr.vmem [resolvable:$true] %s49
      %52 = dma.hbm_to_vmem [thread:$0]  %s48, 128, %s50, [#allocation12]
    $region13: #{tpu_custom_call.1} parent=1 // pred_fallthru
      _
    // Predicated region
    $region14: #{tpu_custom_call.1} parent=1 // pred_check
      _
    $region15: #{tpu_custom_call.1} parent=1 // pred_check_branch
      %54 = sbr.rel (0) target = $region17
    $region16: #{tpu_custom_call.1} parent=1 // pred_region
      %56 = vsyncadd [#allocation15], 0
      %s58 = sshll.u32 %s3, 4
      %s59 = int_to_ptr.hbm [resolvable:$true] %s58
      %s60 = sshll.u32 [#allocation14], 4
      %s61 = int_to_ptr.vmem [resolvable:$true] %s60
      %63 = dma.hbm_to_vmem [thread:$0]  %s59, 64, %s61, [#allocation15]
    $region17: #{tpu_custom_call.1} parent=1 // pred_fallthru
      _
    // Predicated region
    $region18: #{tpu_custom_call.1} parent=1 // pred_check
      _
    $region19: #{tpu_custom_call.1} parent=1 // pred_check_branch
      %65 = sbr.rel (0) target = $region21
    $region20: #{tpu_custom_call.1} parent=1 // pred_region
      %67 = dma.done [#allocation9], 1024
    $region21: #{tpu_custom_call.1} parent=1 // pred_fallthru
      _
    // Predicated region
    $region22: #{tpu_custom_call.1} parent=1 // pred_check
      _
    $region23: #{tpu_custom_call.1} parent=1 // pred_check_branch
      %69 = sbr.rel (0) target = $region25
    $region24: #{tpu_custom_call.1} parent=1 // pred_region
      %71 = dma.done [#allocation12], 128
    $region25: #{tpu_custom_call.1} parent=1 // pred_fallthru
      _
    // Predicated region
    $region26: #{tpu_custom_call.1} parent=1 // pred_check
      _
    $region27: #{tpu_custom_call.1} parent=1 // pred_check_branch
      %73 = sbr.rel (0) target = $region29
    $region28: #{tpu_custom_call.1} parent=1 // pred_region
      %75 = dma.done [#allocation12], 128
    $region29: #{tpu_custom_call.1} parent=1 // pred_fallthru
      _
    // Predicated region
    $region30: #{tpu_custom_call.1} parent=1 // pred_check
      _
    $region31: #{tpu_custom_call.1} parent=1 // pred_check_branch
      %77 = sbr.rel (0) target = $region33
    $region32: #{tpu_custom_call.1} parent=1 // pred_region
      %79 = dma.done [#allocation15], 64
    $region33: #{tpu_custom_call.1} parent=1 // pred_fallthru
      _
    %p80 = scmp.eq.s32.totalorder 0, 0
    // Predicated region
    $region34: #{tpu_custom_call.1} parent=1 // pred_check
      %p81 = pneg %p80
    $region35: #{tpu_custom_call.1} parent=1 // pred_check_branch
      %83 = sbr.rel (%p81) target = $region37
    $region36: #{tpu_custom_call.1} parent=1 // pred_region
      // Predicated region
      $region38: #{tpu_custom_call.1} parent=36 // pred_check
        _
      $region39: #{tpu_custom_call.1} parent=36 // pred_check_branch
        %85 = sbr.rel target = $region41
      $region40: #{tpu_custom_call.1} parent=36 // pred_region
        %86 = sst [smem:[#allocation21]] [#allocation20]
        %87 = sst [smem:[#allocation22]] [#allocation19]
      $region41: #{tpu_custom_call.1} parent=36 // pred_fallthru
        _
      %89 = shalt.err (0)
      %s91 = sshll.u32 %s4, 4
      %s92 = int_to_ptr.hbm [resolvable:$true] %s91
      %s93 = sshll.u32 [#allocation2], 4
      %s94 = int_to_ptr.vmem [resolvable:$true] %s93
      %96 = dma.hbm_to_vmem [thread:$0]  %s92, 8192, %s94, [#allocation7]
      %s97 = scalar_lea.sflag [#allocation7], 1
      // Predicated region
      $region42: #{tpu_custom_call.1} parent=36 // pred_check
        _
      $region43: #{tpu_custom_call.1} parent=36 // pred_check_branch
        %99 = sbr.rel target = $region45
      $region44: #{tpu_custom_call.1} parent=36 // pred_region
        %100 = sst [smem:[#allocation21]] [#allocation24]
        %101 = sst [smem:[#allocation22]] [#allocation23]
      $region45: #{tpu_custom_call.1} parent=36 // pred_fallthru
        _
      %103 = shalt.err (0)
      %s105 = sshll.u32 %s5, 4
      %s106 = int_to_ptr.hbm [resolvable:$true] %s105
      %s107 = sshll.u32 [#allocation3], 4
      %s108 = int_to_ptr.vmem [resolvable:$true] %s107
      %110 = dma.hbm_to_vmem [thread:$0]  %s106, 8192, %s108, %s97
      %v111 = vld [vmem:[#allocation11] sm:$0xff]
      %112 = vst [vmem:[#allocation5] sm:$0xff] %v111
      %v113 = vld [vmem:[#allocation13] sm:$0xff]
      %114 = vst [vmem:[#allocation6] sm:$0xff] %v113
      %s115 = smul.u32 8, 16
      %s116 = smul.u32 %s115, 4
      %s117 = sshll.u32 %s116, 4
      %118 = dma.done [#allocation7], %s117
      %s119 = sshll.u32 %s116, 4
      %120 = dma.done %s97, %s119
    $region37: #{tpu_custom_call.1} parent=1 // pred_fallthru
      _
    %v121 = vld [vmem:[#allocation8] sm:$0xff]
    %v122 = vld [vmem:[#allocation8 + $0x8] sm:$0xff]
    %v123 = vld [vmem:[#allocation8 + $0x10] sm:$0xff]
    %v124 = vld [vmem:[#allocation8 + $0x18] sm:$0xff]
    %v125 = vld [vmem:[#allocation8 + $0x20] sm:$0xff]
    %v126 = vld [vmem:[#allocation8 + $0x28] sm:$0xff]
    %v127 = vld [vmem:[#allocation8 + $0x30] sm:$0xff]
    %v128 = vld [vmem:[#allocation8 + $0x38] sm:$0xff]
    %v129 = vld [vmem:[#allocation2] sm:$0xff]
    %v130 = vld [vmem:[#allocation2 + $0x8] sm:$0xff]
    %v131 = vld [vmem:[#allocation2 + $0x10] sm:$0xff]
    %v132 = vld [vmem:[#allocation2 + $0x18] sm:$0xff]
    %v133 = vld [vmem:[#allocation2 + $0x20] sm:$0xff]
    %v134 = vld [vmem:[#allocation2 + $0x28] sm:$0xff]
    %v135 = vld [vmem:[#allocation2 + $0x30] sm:$0xff]
    %v136 = vld [vmem:[#allocation2 + $0x38] sm:$0xff]
    %v137 = vld [vmem:[#allocation2 + $0x40] sm:$0xff]
    %v138 = vld [vmem:[#allocation2 + $0x48] sm:$0xff]
    %v139 = vld [vmem:[#allocation2 + $0x50] sm:$0xff]
    %v140 = vld [vmem:[#allocation2 + $0x58] sm:$0xff]
    %v141 = vld [vmem:[#allocation2 + $0x60] sm:$0xff]
    %v142 = vld [vmem:[#allocation2 + $0x68] sm:$0xff]
    %v143 = vld [vmem:[#allocation2 + $0x70] sm:$0xff]
    %v144 = vld [vmem:[#allocation2 + $0x78] sm:$0xff]
    %v145 = vld [vmem:[#allocation2 + $0x80] sm:$0xff]
    %v146 = vld [vmem:[#allocation2 + $0x88] sm:$0xff]
    %v147 = vld [vmem:[#allocation2 + $0x90] sm:$0xff]
    %v148 = vld [vmem:[#allocation2 + $0x98] sm:$0xff]
    %v149 = vld [vmem:[#allocation2 + $0xa0] sm:$0xff]
    %v150 = vld [vmem:[#allocation2 + $0xa8] sm:$0xff]
    %v151 = vld [vmem:[#allocation2 + $0xb0] sm:$0xff]
    %v152 = vld [vmem:[#allocation2 + $0xb8] sm:$0xff]
    %v153 = vld [vmem:[#allocation2 + $0xc0] sm:$0xff]
    %v154 = vld [vmem:[#allocation2 + $0xc8] sm:$0xff]
    %v155 = vld [vmem:[#allocation2 + $0xd0] sm:$0xff]
    %v156 = vld [vmem:[#allocation2 + $0xd8] sm:$0xff]
    %v157 = vld [vmem:[#allocation2 + $0xe0] sm:$0xff]
    %v158 = vld [vmem:[#allocation2 + $0xe8] sm:$0xff]
    %v159 = vld [vmem:[#allocation2 + $0xf0] sm:$0xff]
    %v160 = vld [vmem:[#allocation2 + $0xf8] sm:$0xff]
    %v161 = vld [vmem:[#allocation2 + $0x100] sm:$0xff]
    %v162 = vld [vmem:[#allocation2 + $0x108] sm:$0xff]
    %v163 = vld [vmem:[#allocation2 + $0x110] sm:$0xff]
    %v164 = vld [vmem:[#allocation2 + $0x118] sm:$0xff]
    %v165 = vld [vmem:[#allocation2 + $0x120] sm:$0xff]
    %v166 = vld [vmem:[#allocation2 + $0x128] sm:$0xff]
    %v167 = vld [vmem:[#allocation2 + $0x130] sm:$0xff]
    %v168 = vld [vmem:[#allocation2 + $0x138] sm:$0xff]
    %v169 = vld [vmem:[#allocation2 + $0x140] sm:$0xff]
    %v170 = vld [vmem:[#allocation2 + $0x148] sm:$0xff]
    %v171 = vld [vmem:[#allocation2 + $0x150] sm:$0xff]
    %v172 = vld [vmem:[#allocation2 + $0x158] sm:$0xff]
    %v173 = vld [vmem:[#allocation2 + $0x160] sm:$0xff]
    %v174 = vld [vmem:[#allocation2 + $0x168] sm:$0xff]
    %v175 = vld [vmem:[#allocation2 + $0x170] sm:$0xff]
    %v176 = vld [vmem:[#allocation2 + $0x178] sm:$0xff]
    %v177 = vld [vmem:[#allocation2 + $0x180] sm:$0xff]
    %v178 = vld [vmem:[#allocation2 + $0x188] sm:$0xff]
    %v179 = vld [vmem:[#allocation2 + $0x190] sm:$0xff]
    %v180 = vld [vmem:[#allocation2 + $0x198] sm:$0xff]
    %v181 = vld [vmem:[#allocation2 + $0x1a0] sm:$0xff]
    %v182 = vld [vmem:[#allocation2 + $0x1a8] sm:$0xff]
    %v183 = vld [vmem:[#allocation2 + $0x1b0] sm:$0xff]
    %v184 = vld [vmem:[#allocation2 + $0x1b8] sm:$0xff]
    %v185 = vld [vmem:[#allocation2 + $0x1c0] sm:$0xff]
    %v186 = vld [vmem:[#allocation2 + $0x1c8] sm:$0xff]
    %v187 = vld [vmem:[#allocation2 + $0x1d0] sm:$0xff]
    %v188 = vld [vmem:[#allocation2 + $0x1d8] sm:$0xff]
    %v189 = vld [vmem:[#allocation2 + $0x1e0] sm:$0xff]
    %v190 = vld [vmem:[#allocation2 + $0x1e8] sm:$0xff]
    %v191 = vld [vmem:[#allocation2 + $0x1f0] sm:$0xff]
    %v192 = vld [vmem:[#allocation2 + $0x1f8] sm:$0xff]
    %v193 = vld [vmem:[#allocation14] sm:$0xf]
    %v195 = vperm.slane %v193, 0
    %v196 = vperm.slane %v193, 1
    %v197 = vperm.slane %v193, 2
    %v198 = vperm.slane %v193, 3
    %203 = vmatpush.msra.mxu0 %v189
    %204 = vmatpush.msra.mxu0 %v185
    %205 = vmatpush.msra.mxu0 %v181
    %206 = vmatpush.msra.mxu0 %v177
    %207 = vmatpush.msra.mxu0 %v173
    %208 = vmatpush.msra.mxu0 %v169
    %209 = vmatpush.msra.mxu0 %v165
    %210 = vmatpush.msra.mxu0 %v161
    %211 = vmatpush.msra.mxu0 %v157
    %212 = vmatpush.msra.mxu0 %v153
    %213 = vmatpush.msra.mxu0 %v149
    %214 = vmatpush.msra.mxu0 %v145
    %215 = vmatpush.msra.mxu0 %v141
    %216 = vmatpush.msra.mxu0 %v137
    %217 = vmatpush.msra.mxu0 %v133
    %218 = vmatpush.msra.mxu0 %v129
    %219 = vmatmul.f32.gmra.mxu0 %v121
    %v220 = vpop.f32.mrf.mxu0
    %v221 = vadd.f32 %v195, %v220
    %222 = vmatmul.f32.gmra.mxu0 %v122
    %v223 = vpop.f32.mrf.mxu0
    %v224 = vadd.f32 %v195, %v223
    %225 = vmatmul.f32.gmra.mxu0 %v123
    %v226 = vpop.f32.mrf.mxu0
    %v227 = vadd.f32 %v195, %v226
    %228 = vmatmul.f32.gmra.mxu0 %v124
    %v229 = vpop.f32.mrf.mxu0
    %v230 = vadd.f32 %v195, %v229
    %231 = vmatmul.f32.gmra.mxu0 %v125
    %v232 = vpop.f32.mrf.mxu0
    %v233 = vadd.f32 %v195, %v232
    %234 = vmatmul.f32.gmra.mxu0 %v126
    %v235 = vpop.f32.mrf.mxu0
    %v236 = vadd.f32 %v195, %v235
    %237 = vmatmul.f32.gmra.mxu0 %v127
    %v238 = vpop.f32.mrf.mxu0
    %v239 = vadd.f32 %v195, %v238
    %240 = vmatmul.f32.gmra.mxu0 %v128
    %v241 = vpop.f32.mrf.mxu0
    %v242 = vadd.f32 %v195, %v241
    %243 = vdwg.mxu0
    %244 = vmatpush.msra.mxu0 %v190
    %245 = vmatpush.msra.mxu0 %v186
    %246 = vmatpush.msra.mxu0 %v182
    %247 = vmatpush.msra.mxu0 %v178
    %248 = vmatpush.msra.mxu0 %v174
    %249 = vmatpush.msra.mxu0 %v170
    %250 = vmatpush.msra.mxu0 %v166
    %251 = vmatpush.msra.mxu0 %v162
    %252 = vmatpush.msra.mxu0 %v158
    %253 = vmatpush.msra.mxu0 %v154
    %254 = vmatpush.msra.mxu0 %v150
    %255 = vmatpush.msra.mxu0 %v146
    %256 = vmatpush.msra.mxu0 %v142
    %257 = vmatpush.msra.mxu0 %v138
    %258 = vmatpush.msra.mxu0 %v134
    %259 = vmatpush.msra.mxu0 %v130
    %260 = vmatmul.f32.gmra.mxu0 %v121
    %v261 = vpop.f32.mrf.mxu0
    %v262 = vadd.f32 %v196, %v261
    %263 = vmatmul.f32.gmra.mxu0 %v122
    %v264 = vpop.f32.mrf.mxu0
    %v265 = vadd.f32 %v196, %v264
    %266 = vmatmul.f32.gmra.mxu0 %v123
    %v267 = vpop.f32.mrf.mxu0
    %v268 = vadd.f32 %v196, %v267
    %269 = vmatmul.f32.gmra.mxu0 %v124
    %v270 = vpop.f32.mrf.mxu0
    %v271 = vadd.f32 %v196, %v270
    %272 = vmatmul.f32.gmra.mxu0 %v125
    %v273 = vpop.f32.mrf.mxu0
    %v274 = vadd.f32 %v196, %v273
    %275 = vmatmul.f32.gmra.mxu0 %v126
    %v276 = vpop.f32.mrf.mxu0
    %v277 = vadd.f32 %v196, %v276
    %278 = vmatmul.f32.gmra.mxu0 %v127
    %v279 = vpop.f32.mrf.mxu0
    %v280 = vadd.f32 %v196, %v279
    %281 = vmatmul.f32.gmra.mxu0 %v128
    %v282 = vpop.f32.mrf.mxu0
    %v283 = vadd.f32 %v196, %v282
    %284 = vdwg.mxu0
    %285 = vmatpush.msra.mxu0 %v191
    %286 = vmatpush.msra.mxu0 %v187
    %287 = vmatpush.msra.mxu0 %v183
    %288 = vmatpush.msra.mxu0 %v179
    %289 = vmatpush.msra.mxu0 %v175
    %290 = vmatpush.msra.mxu0 %v171
    %291 = vmatpush.msra.mxu0 %v167
    %292 = vmatpush.msra.mxu0 %v163
    %293 = vmatpush.msra.mxu0 %v159
    %294 = vmatpush.msra.mxu0 %v155
    %295 = vmatpush.msra.mxu0 %v151
    %296 = vmatpush.msra.mxu0 %v147
    %297 = vmatpush.msra.mxu0 %v143
    %298 = vmatpush.msra.mxu0 %v139
    %299 = vmatpush.msra.mxu0 %v135
    %300 = vmatpush.msra.mxu0 %v131
    %301 = vmatmul.f32.gmra.mxu0 %v121
    %v302 = vpop.f32.mrf.mxu0
    %v303 = vadd.f32 %v197, %v302
    %304 = vmatmul.f32.gmra.mxu0 %v122
    %v305 = vpop.f32.mrf.mxu0
    %v306 = vadd.f32 %v197, %v305
    %307 = vmatmul.f32.gmra.mxu0 %v123
    %v308 = vpop.f32.mrf.mxu0
    %v309 = vadd.f32 %v197, %v308
    %310 = vmatmul.f32.gmra.mxu0 %v124
    %v311 = vpop.f32.mrf.mxu0
    %v312 = vadd.f32 %v197, %v311
    %313 = vmatmul.f32.gmra.mxu0 %v125
    %v314 = vpop.f32.mrf.mxu0
    %v315 = vadd.f32 %v197, %v314
    %316 = vmatmul.f32.gmra.mxu0 %v126
    %v317 = vpop.f32.mrf.mxu0
    %v318 = vadd.f32 %v197, %v317
    %319 = vmatmul.f32.gmra.mxu0 %v127
    %v320 = vpop.f32.mrf.mxu0
    %v321 = vadd.f32 %v197, %v320
    %322 = vmatmul.f32.gmra.mxu0 %v128
    %v323 = vpop.f32.mrf.mxu0
    %v324 = vadd.f32 %v197, %v323
    %325 = vdwg.mxu0
    %326 = vmatpush.msra.mxu0 %v192
    %327 = vmatpush.msra.mxu0 %v188
    %328 = vmatpush.msra.mxu0 %v184
    %329 = vmatpush.msra.mxu0 %v180
    %330 = vmatpush.msra.mxu0 %v176
    %331 = vmatpush.msra.mxu0 %v172
    %332 = vmatpush.msra.mxu0 %v168
    %333 = vmatpush.msra.mxu0 %v164
    %334 = vmatpush.msra.mxu0 %v160
    %335 = vmatpush.msra.mxu0 %v156
    %336 = vmatpush.msra.mxu0 %v152
    %337 = vmatpush.msra.mxu0 %v148
    %338 = vmatpush.msra.mxu0 %v144
    %339 = vmatpush.msra.mxu0 %v140
    %340 = vmatpush.msra.mxu0 %v136
    %341 = vmatpush.msra.mxu0 %v132
    %342 = vmatmul.f32.gmra.mxu0 %v121
    %v343 = vpop.f32.mrf.mxu0
    %v344 = vadd.f32 %v198, %v343
    %345 = vmatmul.f32.gmra.mxu0 %v122
    %v346 = vpop.f32.mrf.mxu0
    %v347 = vadd.f32 %v198, %v346
    %348 = vmatmul.f32.gmra.mxu0 %v123
    %v349 = vpop.f32.mrf.mxu0
    %v350 = vadd.f32 %v198, %v349
    %351 = vmatmul.f32.gmra.mxu0 %v124
    %v352 = vpop.f32.mrf.mxu0
    %v353 = vadd.f32 %v198, %v352
    %354 = vmatmul.f32.gmra.mxu0 %v125
    %v355 = vpop.f32.mrf.mxu0
    %v356 = vadd.f32 %v198, %v355
    %357 = vmatmul.f32.gmra.mxu0 %v126
    %v358 = vpop.f32.mrf.mxu0
    %v359 = vadd.f32 %v198, %v358
    %360 = vmatmul.f32.gmra.mxu0 %v127
    %v361 = vpop.f32.mrf.mxu0
    %v362 = vadd.f32 %v198, %v361
    %363 = vmatmul.f32.gmra.mxu0 %v128
    %v364 = vpop.f32.mrf.mxu0
    %v365 = vadd.f32 %v198, %v364
    %366 = vdwg.mxu0
    %367 = vst [vmem:[#allocation4] sm:$0xff] %v221
    %368 = vst [vmem:[#allocation4 + $0x8] sm:$0xff] %v262
    %369 = vst [vmem:[#allocation4 + $0x10] sm:$0xff] %v303
    %370 = vst [vmem:[#allocation4 + $0x18] sm:$0xff] %v344
    %371 = vst [vmem:[#allocation4 + $0x20] sm:$0xff] %v224
    %372 = vst [vmem:[#allocation4 + $0x28] sm:$0xff] %v265
    %373 = vst [vmem:[#allocation4 + $0x30] sm:$0xff] %v306
    %374 = vst [vmem:[#allocation4 + $0x38] sm:$0xff] %v347
    %375 = vst [vmem:[#allocation4 + $0x40] sm:$0xff] %v227
    %376 = vst [vmem:[#allocation4 + $0x48] sm:$0xff] %v268
    %377 = vst [vmem:[#allocation4 + $0x50] sm:$0xff] %v309
    %378 = vst [vmem:[#allocation4 + $0x58] sm:$0xff] %v350
    %379 = vst [vmem:[#allocation4 + $0x60] sm:$0xff] %v230
    %380 = vst [vmem:[#allocation4 + $0x68] sm:$0xff] %v271
    %381 = vst [vmem:[#allocation4 + $0x70] sm:$0xff] %v312
    %382 = vst [vmem:[#allocation4 + $0x78] sm:$0xff] %v353
    %383 = vst [vmem:[#allocation4 + $0x80] sm:$0xff] %v233
    %384 = vst [vmem:[#allocation4 + $0x88] sm:$0xff] %v274
    %385 = vst [vmem:[#allocation4 + $0x90] sm:$0xff] %v315
    %386 = vst [vmem:[#allocation4 + $0x98] sm:$0xff] %v356
    %387 = vst [vmem:[#allocation4 + $0xa0] sm:$0xff] %v236
    %388 = vst [vmem:[#allocation4 + $0xa8] sm:$0xff] %v277
    %389 = vst [vmem:[#allocation4 + $0xb0] sm:$0xff] %v318
    %390 = vst [vmem:[#allocation4 + $0xb8] sm:$0xff] %v359
    %391 = vst [vmem:[#allocation4 + $0xc0] sm:$0xff] %v239
    %392 = vst [vmem:[#allocation4 + $0xc8] sm:$0xff] %v280
    %393 = vst [vmem:[#allocation4 + $0xd0] sm:$0xff] %v321
    %394 = vst [vmem:[#allocation4 + $0xd8] sm:$0xff] %v362
    %395 = vst [vmem:[#allocation4 + $0xe0] sm:$0xff] %v242
    %396 = vst [vmem:[#allocation4 + $0xe8] sm:$0xff] %v283
    %397 = vst [vmem:[#allocation4 + $0xf0] sm:$0xff] %v324
    %398 = vst [vmem:[#allocation4 + $0xf8] sm:$0xff] %v365
    %v399 = vld [vmem:[#allocation4] sm:$0xff]
    %v400 = vld [vmem:[#allocation4 + $0x8] sm:$0xff]
    %v401 = vld [vmem:[#allocation4 + $0x10] sm:$0xff]
    %v402 = vld [vmem:[#allocation4 + $0x18] sm:$0xff]
    %v403 = vld [vmem:[#allocation5] sm:$0xff]
    %v404 = vld [vmem:[#allocation3] sm:$0xff]
    %v405 = vld [vmem:[#allocation3 + $0x8] sm:$0xff]
    %v406 = vld [vmem:[#allocation3 + $0x10] sm:$0xff]
    %v407 = vld [vmem:[#allocation3 + $0x18] sm:$0xff]
    %v408 = vld [vmem:[#allocation3 + $0x20] sm:$0xff]
    %v409 = vld [vmem:[#allocation3 + $0x28] sm:$0xff]
    %v410 = vld [vmem:[#allocation3 + $0x30] sm:$0xff]
    %v411 = vld [vmem:[#allocation3 + $0x38] sm:$0xff]
    %v412 = vld [vmem:[#allocation3 + $0x40] sm:$0xff]
    %v413 = vld [vmem:[#allocation3 + $0x48] sm:$0xff]
    %v414 = vld [vmem:[#allocation3 + $0x50] sm:$0xff]
    %v415 = vld [vmem:[#allocation3 + $0x58] sm:$0xff]
    %v416 = vld [vmem:[#allocation3 + $0x60] sm:$0xff]
    %v417 = vld [vmem:[#allocation3 + $0x68] sm:$0xff]
    %v418 = vld [vmem:[#allocation3 + $0x70] sm:$0xff]
    %v419 = vld [vmem:[#allocation3 + $0x78] sm:$0xff]
    %v420 = vld [vmem:[#allocation3 + $0x80] sm:$0xff]
    %v421 = vld [vmem:[#allocation3 + $0x88] sm:$0xff]
    %v422 = vld [vmem:[#allocation3 + $0x90] sm:$0xff]
    %v423 = vld [vmem:[#allocation3 + $0x98] sm:$0xff]
    %v424 = vld [vmem:[#allocation3 + $0xa0] sm:$0xff]
    %v425 = vld [vmem:[#allocation3 + $0xa8] sm:$0xff]
    %v426 = vld [vmem:[#allocation3 + $0xb0] sm:$0xff]
    %v427 = vld [vmem:[#allocation3 + $0xb8] sm:$0xff]
    %v428 = vld [vmem:[#allocation3 + $0xc0] sm:$0xff]
    %v429 = vld [vmem:[#allocation3 + $0xc8] sm:$0xff]
    %v430 = vld [vmem:[#allocation3 + $0xd0] sm:$0xff]
    %v431 = vld [vmem:[#allocation3 + $0xd8] sm:$0xff]
    %v432 = vld [vmem:[#allocation3 + $0xe0] sm:$0xff]
    %v433 = vld [vmem:[#allocation3 + $0xe8] sm:$0xff]
    %v434 = vld [vmem:[#allocation3 + $0xf0] sm:$0xff]
    %v435 = vld [vmem:[#allocation3 + $0xf8] sm:$0xff]
    %v436 = vld [vmem:[#allocation3 + $0x100] sm:$0xff]
    %v437 = vld [vmem:[#allocation3 + $0x108] sm:$0xff]
    %v438 = vld [vmem:[#allocation3 + $0x110] sm:$0xff]
    %v439 = vld [vmem:[#allocation3 + $0x118] sm:$0xff]
    %v440 = vld [vmem:[#allocation3 + $0x120] sm:$0xff]
    %v441 = vld [vmem:[#allocation3 + $0x128] sm:$0xff]
    %v442 = vld [vmem:[#allocation3 + $0x130] sm:$0xff]
    %v443 = vld [vmem:[#allocation3 + $0x138] sm:$0xff]
    %v444 = vld [vmem:[#allocation3 + $0x140] sm:$0xff]
    %v445 = vld [vmem:[#allocation3 + $0x148] sm:$0xff]
    %v446 = vld [vmem:[#allocation3 + $0x150] sm:$0xff]
    %v447 = vld [vmem:[#allocation3 + $0x158] sm:$0xff]
    %v448 = vld [vmem:[#allocation3 + $0x160] sm:$0xff]
    %v449 = vld [vmem:[#allocation3 + $0x168] sm:$0xff]
    %v450 = vld [vmem:[#allocation3 + $0x170] sm:$0xff]
    %v451 = vld [vmem:[#allocation3 + $0x178] sm:$0xff]
    %v452 = vld [vmem:[#allocation3 + $0x180] sm:$0xff]
    %v453 = vld [vmem:[#allocation3 + $0x188] sm:$0xff]
    %v454 = vld [vmem:[#allocation3 + $0x190] sm:$0xff]
    %v455 = vld [vmem:[#allocation3 + $0x198] sm:$0xff]
    %v456 = vld [vmem:[#allocation3 + $0x1a0] sm:$0xff]
    %v457 = vld [vmem:[#allocation3 + $0x1a8] sm:$0xff]
    %v458 = vld [vmem:[#allocation3 + $0x1b0] sm:$0xff]
    %v459 = vld [vmem:[#allocation3 + $0x1b8] sm:$0xff]
    %v460 = vld [vmem:[#allocation3 + $0x1c0] sm:$0xff]
    %v461 = vld [vmem:[#allocation3 + $0x1c8] sm:$0xff]
    %v462 = vld [vmem:[#allocation3 + $0x1d0] sm:$0xff]
    %v463 = vld [vmem:[#allocation3 + $0x1d8] sm:$0xff]
    %v464 = vld [vmem:[#allocation3 + $0x1e0] sm:$0xff]
    %v465 = vld [vmem:[#allocation3 + $0x1e8] sm:$0xff]
    %v466 = vld [vmem:[#allocation3 + $0x1f0] sm:$0xff]
    %v467 = vld [vmem:[#allocation3 + $0x1f8] sm:$0xff]
    %468 = vmatpush.msra.mxu0 %v464
    %469 = vmatpush.msra.mxu0 %v460
    %470 = vmatpush.msra.mxu0 %v456
    %471 = vmatpush.msra.mxu0 %v452
    %472 = vmatpush.msra.mxu0 %v448
    %473 = vmatpush.msra.mxu0 %v444
    %474 = vmatpush.msra.mxu0 %v440
    %475 = vmatpush.msra.mxu0 %v436
    %476 = vmatpush.msra.mxu0 %v432
    %477 = vmatpush.msra.mxu0 %v428
    %478 = vmatpush.msra.mxu0 %v424
    %479 = vmatpush.msra.mxu0 %v420
    %480 = vmatpush.msra.mxu0 %v416
    %481 = vmatpush.msra.mxu0 %v412
    %482 = vmatpush.msra.mxu0 %v408
    %483 = vmatpush.msra.mxu0 %v404
    %484 = vmatmul.f32.gmra.mxu0 %v403
    %v485 = vpop.f32.mrf.mxu0
    %v486 = vadd.f32 0.0, %v485
    %487 = vdwg.mxu0
    %488 = vmatpush.msra.mxu0 %v465
    %489 = vmatpush.msra.mxu0 %v461
    %490 = vmatpush.msra.mxu0 %v457
    %491 = vmatpush.msra.mxu0 %v453
    %492 = vmatpush.msra.mxu0 %v449
    %493 = vmatpush.msra.mxu0 %v445
    %494 = vmatpush.msra.mxu0 %v441
    %495 = vmatpush.msra.mxu0 %v437
    %496 = vmatpush.msra.mxu0 %v433
    %497 = vmatpush.msra.mxu0 %v429
    %498 = vmatpush.msra.mxu0 %v425
    %499 = vmatpush.msra.mxu0 %v421
    %500 = vmatpush.msra.mxu0 %v417
    %501 = vmatpush.msra.mxu0 %v413
    %502 = vmatpush.msra.mxu0 %v409
    %503 = vmatpush.msra.mxu0 %v405
    %504 = vmatmul.f32.gmra.mxu0 %v403
    %v505 = vpop.f32.mrf.mxu0
    %v506 = vadd.f32 0.0, %v505
    %507 = vdwg.mxu0
    %508 = vmatpush.msra.mxu0 %v466
    %509 = vmatpush.msra.mxu0 %v462
    %510 = vmatpush.msra.mxu0 %v458
    %511 = vmatpush.msra.mxu0 %v454
    %512 = vmatpush.msra.mxu0 %v450
    %513 = vmatpush.msra.mxu0 %v446
    %514 = vmatpush.msra.mxu0 %v442
    %515 = vmatpush.msra.mxu0 %v438
    %516 = vmatpush.msra.mxu0 %v434
    %517 = vmatpush.msra.mxu0 %v430
    %518 = vmatpush.msra.mxu0 %v426
    %519 = vmatpush.msra.mxu0 %v422
    %520 = vmatpush.msra.mxu0 %v418
    %521 = vmatpush.msra.mxu0 %v414
    %522 = vmatpush.msra.mxu0 %v410
    %523 = vmatpush.msra.mxu0 %v406
    %524 = vmatmul.f32.gmra.mxu0 %v403
    %v525 = vpop.f32.mrf.mxu0
    %v526 = vadd.f32 0.0, %v525
    %527 = vdwg.mxu0
    %528 = vmatpush.msra.mxu0 %v467
    %529 = vmatpush.msra.mxu0 %v463
    %530 = vmatpush.msra.mxu0 %v459
    %531 = vmatpush.msra.mxu0 %v455
    %532 = vmatpush.msra.mxu0 %v451
    %533 = vmatpush.msra.mxu0 %v447
    %534 = vmatpush.msra.mxu0 %v443
    %535 = vmatpush.msra.mxu0 %v439
    %536 = vmatpush.msra.mxu0 %v435
    %537 = vmatpush.msra.mxu0 %v431
    %538 = vmatpush.msra.mxu0 %v427
    %539 = vmatpush.msra.mxu0 %v423
    %540 = vmatpush.msra.mxu0 %v419
    %541 = vmatpush.msra.mxu0 %v415
    %542 = vmatpush.msra.mxu0 %v411
    %543 = vmatpush.msra.mxu0 %v407
    %544 = vmatmul.f32.gmra.mxu0 %v403
    %v545 = vpop.f32.mrf.mxu0
    %v546 = vadd.f32 0.0, %v545
    %547 = vdwg.mxu0
    %v548 = vadd.f32 %v399, %v486
    %v549 = vadd.f32 %v400, %v506
    %v550 = vadd.f32 %v401, %v526
    %v551 = vadd.f32 %v402, %v546
    %v552 = vtanh.pop %v548
    %v553 = vtanh.pop %v549
    %v554 = vtanh.pop %v550
    %v555 = vtanh.pop %v551
    %v556 = vmul.f32 %v552, 0.5
    %v557 = vmul.f32 %v553, 0.5
    %v558 = vmul.f32 %v554, 0.5
    %v559 = vadd.f32 %v556, 0.5
    %v560 = vadd.f32 %v557, 0.5
    %v561 = vadd.f32 %v558, 0.5
    %v562 = vld [vmem:[#allocation6] sm:$0xff]
    %v563 = vmul.f32 %v560, %v562
    %v564 = vmul.f32 %v559, %v555
    %v565 = vadd.f32 %v563, %v564
    %v566 = vtanh.pop %v565
    %v567 = vmul.f32 %v561, %v566
    %568 = vst [vmem:[#allocation6] sm:$0xff] %v565
    %569 = vst [vmem:[#allocation5] sm:$0xff] %v567
    %570 = vst [vmem:[#allocation16] sm:$0xff] %v567
    %571 = vst [vmem:[#allocation17] sm:$0xff] %v565
    %s572 = scalar_lea.vmem [#allocation4], 32
    %v573 = vld [vmem:[%s572] sm:$0xff]
    %v574 = vld [vmem:[%s572 + $0x8] sm:$0xff]
    %v575 = vld [vmem:[%s572 + $0x10] sm:$0xff]
    %v576 = vld [vmem:[%s572 + $0x18] sm:$0xff]
    %v577 = vld [vmem:[#allocation5] sm:$0xff]
    %v578 = vld [vmem:[#allocation3] sm:$0xff]
    %v579 = vld [vmem:[#allocation3 + $0x8] sm:$0xff]
    %v580 = vld [vmem:[#allocation3 + $0x10] sm:$0xff]
    %v581 = vld [vmem:[#allocation3 + $0x18] sm:$0xff]
    %v582 = vld [vmem:[#allocation3 + $0x20] sm:$0xff]
    %v583 = vld [vmem:[#allocation3 + $0x28] sm:$0xff]
    %v584 = vld [vmem:[#allocation3 + $0x30] sm:$0xff]
    %v585 = vld [vmem:[#allocation3 + $0x38] sm:$0xff]
    %v586 = vld [vmem:[#allocation3 + $0x40] sm:$0xff]
    %v587 = vld [vmem:[#allocation3 + $0x48] sm:$0xff]
    %v588 = vld [vmem:[#allocation3 + $0x50] sm:$0xff]
    %v589 = vld [vmem:[#allocation3 + $0x58] sm:$0xff]
    %v590 = vld [vmem:[#allocation3 + $0x60] sm:$0xff]
    %v591 = vld [vmem:[#allocation3 + $0x68] sm:$0xff]
    %v592 = vld [vmem:[#allocation3 + $0x70] sm:$0xff]
    %v593 = vld [vmem:[#allocation3 + $0x78] sm:$0xff]
    %v594 = vld [vmem:[#allocation3 + $0x80] sm:$0xff]
    %v595 = vld [vmem:[#allocation3 + $0x88] sm:$0xff]
    %v596 = vld [vmem:[#allocation3 + $0x90] sm:$0xff]
    %v597 = vld [vmem:[#allocation3 + $0x98] sm:$0xff]
    %v598 = vld [vmem:[#allocation3 + $0xa0] sm:$0xff]
    %v599 = vld [vmem:[#allocation3 + $0xa8] sm:$0xff]
    %v600 = vld [vmem:[#allocation3 + $0xb0] sm:$0xff]
    %v601 = vld [vmem:[#allocation3 + $0xb8] sm:$0xff]
    %v602 = vld [vmem:[#allocation3 + $0xc0] sm:$0xff]
    %v603 = vld [vmem:[#allocation3 + $0xc8] sm:$0xff]
    %v604 = vld [vmem:[#allocation3 + $0xd0] sm:$0xff]
    %v605 = vld [vmem:[#allocation3 + $0xd8] sm:$0xff]
    %v606 = vld [vmem:[#allocation3 + $0xe0] sm:$0xff]
    %v607 = vld [vmem:[#allocation3 + $0xe8] sm:$0xff]
    %v608 = vld [vmem:[#allocation3 + $0xf0] sm:$0xff]
    %v609 = vld [vmem:[#allocation3 + $0xf8] sm:$0xff]
    %v610 = vld [vmem:[#allocation3 + $0x100] sm:$0xff]
    %v611 = vld [vmem:[#allocation3 + $0x108] sm:$0xff]
    %v612 = vld [vmem:[#allocation3 + $0x110] sm:$0xff]
    %v613 = vld [vmem:[#allocation3 + $0x118] sm:$0xff]
    %v614 = vld [vmem:[#allocation3 + $0x120] sm:$0xff]
    %v615 = vld [vmem:[#allocation3 + $0x128] sm:$0xff]
    %v616 = vld [vmem:[#allocation3 + $0x130] sm:$0xff]
    %v617 = vld [vmem:[#allocation3 + $0x138] sm:$0xff]
    %v618 = vld [vmem:[#allocation3 + $0x140] sm:$0xff]
    %v619 = vld [vmem:[#allocation3 + $0x148] sm:$0xff]
    %v620 = vld [vmem:[#allocation3 + $0x150] sm:$0xff]
    %v621 = vld [vmem:[#allocation3 + $0x158] sm:$0xff]
    %v622 = vld [vmem:[#allocation3 + $0x160] sm:$0xff]
    %v623 = vld [vmem:[#allocation3 + $0x168] sm:$0xff]
    %v624 = vld [vmem:[#allocation3 + $0x170] sm:$0xff]
    %v625 = vld [vmem:[#allocation3 + $0x178] sm:$0xff]
    %v626 = vld [vmem:[#allocation3 + $0x180] sm:$0xff]
    %v627 = vld [vmem:[#allocation3 + $0x188] sm:$0xff]
    %v628 = vld [vmem:[#allocation3 + $0x190] sm:$0xff]
    %v629 = vld [vmem:[#allocation3 + $0x198] sm:$0xff]
    %v630 = vld [vmem:[#allocation3 + $0x1a0] sm:$0xff]
    %v631 = vld [vmem:[#allocation3 + $0x1a8] sm:$0xff]
    %v632 = vld [vmem:[#allocation3 + $0x1b0] sm:$0xff]
    %v633 = vld [vmem:[#allocation3 + $0x1b8] sm:$0xff]
    %v634 = vld [vmem:[#allocation3 + $0x1c0] sm:$0xff]
    %v635 = vld [vmem:[#allocation3 + $0x1c8] sm:$0xff]
    %v636 = vld [vmem:[#allocation3 + $0x1d0] sm:$0xff]
    %v637 = vld [vmem:[#allocation3 + $0x1d8] sm:$0xff]
    %v638 = vld [vmem:[#allocation3 + $0x1e0] sm:$0xff]
    %v639 = vld [vmem:[#allocation3 + $0x1e8] sm:$0xff]
    %v640 = vld [vmem:[#allocation3 + $0x1f0] sm:$0xff]
    %v641 = vld [vmem:[#allocation3 + $0x1f8] sm:$0xff]
    %642 = vmatpush.msra.mxu0 %v638
    %643 = vmatpush.msra.mxu0 %v634
    %644 = vmatpush.msra.mxu0 %v630
    %645 = vmatpush.msra.mxu0 %v626
    %646 = vmatpush.msra.mxu0 %v622
    %647 = vmatpush.msra.mxu0 %v618
    %648 = vmatpush.msra.mxu0 %v614
    %649 = vmatpush.msra.mxu0 %v610
    %650 = vmatpush.msra.mxu0 %v606
    %651 = vmatpush.msra.mxu0 %v602
    %652 = vmatpush.msra.mxu0 %v598
    %653 = vmatpush.msra.mxu0 %v594
    %654 = vmatpush.msra.mxu0 %v590
    %655 = vmatpush.msra.mxu0 %v586
    %656 = vmatpush.msra.mxu0 %v582
    %657 = vmatpush.msra.mxu0 %v578
    %658 = vmatmul.f32.gmra.mxu0 %v577
    %v659 = vpop.f32.mrf.mxu0
    %v660 = vadd.f32 0.0, %v659
    %661 = vdwg.mxu0
    %662 = vmatpush.msra.mxu0 %v639
    %663 = vmatpush.msra.mxu0 %v635
    %664 = vmatpush.msra.mxu0 %v631
    %665 = vmatpush.msra.mxu0 %v627
    %666 = vmatpush.msra.mxu0 %v623
    %667 = vmatpush.msra.mxu0 %v619
    %668 = vmatpush.msra.mxu0 %v615
    %669 = vmatpush.msra.mxu0 %v611
    %670 = vmatpush.msra.mxu0 %v607
    %671 = vmatpush.msra.mxu0 %v603
    %672 = vmatpush.msra.mxu0 %v599
    %673 = vmatpush.msra.mxu0 %v595
    %674 = vmatpush.msra.mxu0 %v591
    %675 = vmatpush.msra.mxu0 %v587
    %676 = vmatpush.msra.mxu0 %v583
    %677 = vmatpush.msra.mxu0 %v579
    %678 = vmatmul.f32.gmra.mxu0 %v577
    %v679 = vpop.f32.mrf.mxu0
    %v680 = vadd.f32 0.0, %v679
    %681 = vdwg.mxu0
    %682 = vmatpush.msra.mxu0 %v640
    %683 = vmatpush.msra.mxu0 %v636
    %684 = vmatpush.msra.mxu0 %v632
    %685 = vmatpush.msra.mxu0 %v628
    %686 = vmatpush.msra.mxu0 %v624
    %687 = vmatpush.msra.mxu0 %v620
    %688 = vmatpush.msra.mxu0 %v616
    %689 = vmatpush.msra.mxu0 %v612
    %690 = vmatpush.msra.mxu0 %v608
    %691 = vmatpush.msra.mxu0 %v604
    %692 = vmatpush.msra.mxu0 %v600
    %693 = vmatpush.msra.mxu0 %v596
    %694 = vmatpush.msra.mxu0 %v592
    %695 = vmatpush.msra.mxu0 %v588
    %696 = vmatpush.msra.mxu0 %v584
    %697 = vmatpush.msra.mxu0 %v580
    %698 = vmatmul.f32.gmra.mxu0 %v577
    %v699 = vpop.f32.mrf.mxu0
    %v700 = vadd.f32 0.0, %v699
    %701 = vdwg.mxu0
    %702 = vmatpush.msra.mxu0 %v641
    %703 = vmatpush.msra.mxu0 %v637
    %704 = vmatpush.msra.mxu0 %v633
    %705 = vmatpush.msra.mxu0 %v629
    %706 = vmatpush.msra.mxu0 %v625
    %707 = vmatpush.msra.mxu0 %v621
    %708 = vmatpush.msra.mxu0 %v617
    %709 = vmatpush.msra.mxu0 %v613
    %710 = vmatpush.msra.mxu0 %v609
    %711 = vmatpush.msra.mxu0 %v605
    %712 = vmatpush.msra.mxu0 %v601
    %713 = vmatpush.msra.mxu0 %v597
    %714 = vmatpush.msra.mxu0 %v593
    %715 = vmatpush.msra.mxu0 %v589
    %716 = vmatpush.msra.mxu0 %v585
    %717 = vmatpush.msra.mxu0 %v581
    %718 = vmatmul.f32.gmra.mxu0 %v577
    %v719 = vpop.f32.mrf.mxu0
    %v720 = vadd.f32 0.0, %v719
    %721 = vdwg.mxu0
    %v722 = vadd.f32 %v573, %v660
    %v723 = vadd.f32 %v574, %v680
    %v724 = vadd.f32 %v575, %v700
    %v725 = vadd.f32 %v576, %v720
    %v726 = vtanh.pop %v722
    %v727 = vtanh.pop %v723
    %v728 = vtanh.pop %v724
    %v729 = vtanh.pop %v725
    %v730 = vmul.f32 %v726, 0.5
    %v731 = vmul.f32 %v727, 0.5
    %v732 = vmul.f32 %v728, 0.5
    %v733 = vadd.f32 %v730, 0.5
    %v734 = vadd.f32 %v731, 0.5
    %v735 = vadd.f32 %v732, 0.5
    %v736 = vld [vmem:[#allocation6] sm:$0xff]
    %v737 = vmul.f32 %v734, %v736
    %v738 = vmul.f32 %v733, %v729
    %v739 = vadd.f32 %v737, %v738
    %v740 = vtanh.pop %v739
    %v741 = vmul.f32 %v735, %v740
    %742 = vst [vmem:[#allocation6] sm:$0xff] %v739
    %743 = vst [vmem:[#allocation5] sm:$0xff] %v741
    %s744 = scalar_lea.vmem [#allocation16], 8
    %745 = vst [vmem:[%s744] sm:$0xff] %v741
    %s746 = scalar_lea.vmem [#allocation17], 8
    %747 = vst [vmem:[%s746] sm:$0xff] %v739
    %s748 = scalar_lea.vmem [#allocation4], 64
    %v749 = vld [vmem:[%s748] sm:$0xff]
    %v750 = vld [vmem:[%s748 + $0x8] sm:$0xff]
    %v751 = vld [vmem:[%s748 + $0x10] sm:$0xff]
    %v752 = vld [vmem:[%s748 + $0x18] sm:$0xff]
    %v753 = vld [vmem:[#allocation5] sm:$0xff]
    %v754 = vld [vmem:[#allocation3] sm:$0xff]
    %v755 = vld [vmem:[#allocation3 + $0x8] sm:$0xff]
    %v756 = vld [vmem:[#allocation3 + $0x10] sm:$0xff]
    %v757 = vld [vmem:[#allocation3 + $0x18] sm:$0xff]
    %v758 = vld [vmem:[#allocation3 + $0x20] sm:$0xff]
    %v759 = vld [vmem:[#allocation3 + $0x28] sm:$0xff]
    %v760 = vld [vmem:[#allocation3 + $0x30] sm:$0xff]
    %v761 = vld [vmem:[#allocation3 + $0x38] sm:$0xff]
    %v762 = vld [vmem:[#allocation3 + $0x40] sm:$0xff]
    %v763 = vld [vmem:[#allocation3 + $0x48] sm:$0xff]
    %v764 = vld [vmem:[#allocation3 + $0x50] sm:$0xff]
    %v765 = vld [vmem:[#allocation3 + $0x58] sm:$0xff]
    %v766 = vld [vmem:[#allocation3 + $0x60] sm:$0xff]
    %v767 = vld [vmem:[#allocation3 + $0x68] sm:$0xff]
    %v768 = vld [vmem:[#allocation3 + $0x70] sm:$0xff]
    %v769 = vld [vmem:[#allocation3 + $0x78] sm:$0xff]
    %v770 = vld [vmem:[#allocation3 + $0x80] sm:$0xff]
    %v771 = vld [vmem:[#allocation3 + $0x88] sm:$0xff]
    %v772 = vld [vmem:[#allocation3 + $0x90] sm:$0xff]
    %v773 = vld [vmem:[#allocation3 + $0x98] sm:$0xff]
    %v774 = vld [vmem:[#allocation3 + $0xa0] sm:$0xff]
    %v775 = vld [vmem:[#allocation3 + $0xa8] sm:$0xff]
    %v776 = vld [vmem:[#allocation3 + $0xb0] sm:$0xff]
    %v777 = vld [vmem:[#allocation3 + $0xb8] sm:$0xff]
    %v778 = vld [vmem:[#allocation3 + $0xc0] sm:$0xff]
    %v779 = vld [vmem:[#allocation3 + $0xc8] sm:$0xff]
    %v780 = vld [vmem:[#allocation3 + $0xd0] sm:$0xff]
    %v781 = vld [vmem:[#allocation3 + $0xd8] sm:$0xff]
    %v782 = vld [vmem:[#allocation3 + $0xe0] sm:$0xff]
    %v783 = vld [vmem:[#allocation3 + $0xe8] sm:$0xff]
    %v784 = vld [vmem:[#allocation3 + $0xf0] sm:$0xff]
    %v785 = vld [vmem:[#allocation3 + $0xf8] sm:$0xff]
    %v786 = vld [vmem:[#allocation3 + $0x100] sm:$0xff]
    %v787 = vld [vmem:[#allocation3 + $0x108] sm:$0xff]
    %v788 = vld [vmem:[#allocation3 + $0x110] sm:$0xff]
    %v789 = vld [vmem:[#allocation3 + $0x118] sm:$0xff]
    %v790 = vld [vmem:[#allocation3 + $0x120] sm:$0xff]
    %v791 = vld [vmem:[#allocation3 + $0x128] sm:$0xff]
    %v792 = vld [vmem:[#allocation3 + $0x130] sm:$0xff]
    %v793 = vld [vmem:[#allocation3 + $0x138] sm:$0xff]
    %v794 = vld [vmem:[#allocation3 + $0x140] sm:$0xff]
    %v795 = vld [vmem:[#allocation3 + $0x148] sm:$0xff]
    %v796 = vld [vmem:[#allocation3 + $0x150] sm:$0xff]
    %v797 = vld [vmem:[#allocation3 + $0x158] sm:$0xff]
    %v798 = vld [vmem:[#allocation3 + $0x160] sm:$0xff]
    %v799 = vld [vmem:[#allocation3 + $0x168] sm:$0xff]
    %v800 = vld [vmem:[#allocation3 + $0x170] sm:$0xff]
    %v801 = vld [vmem:[#allocation3 + $0x178] sm:$0xff]
    %v802 = vld [vmem:[#allocation3 + $0x180] sm:$0xff]
    %v803 = vld [vmem:[#allocation3 + $0x188] sm:$0xff]
    %v804 = vld [vmem:[#allocation3 + $0x190] sm:$0xff]
    %v805 = vld [vmem:[#allocation3 + $0x198] sm:$0xff]
    %v806 = vld [vmem:[#allocation3 + $0x1a0] sm:$0xff]
    %v807 = vld [vmem:[#allocation3 + $0x1a8] sm:$0xff]
    %v808 = vld [vmem:[#allocation3 + $0x1b0] sm:$0xff]
    %v809 = vld [vmem:[#allocation3 + $0x1b8] sm:$0xff]
    %v810 = vld [vmem:[#allocation3 + $0x1c0] sm:$0xff]
    %v811 = vld [vmem:[#allocation3 + $0x1c8] sm:$0xff]
    %v812 = vld [vmem:[#allocation3 + $0x1d0] sm:$0xff]
    %v813 = vld [vmem:[#allocation3 + $0x1d8] sm:$0xff]
    %v814 = vld [vmem:[#allocation3 + $0x1e0] sm:$0xff]
    %v815 = vld [vmem:[#allocation3 + $0x1e8] sm:$0xff]
    %v816 = vld [vmem:[#allocation3 + $0x1f0] sm:$0xff]
    %v817 = vld [vmem:[#allocation3 + $0x1f8] sm:$0xff]
    %818 = vmatpush.msra.mxu0 %v814
    %819 = vmatpush.msra.mxu0 %v810
    %820 = vmatpush.msra.mxu0 %v806
    %821 = vmatpush.msra.mxu0 %v802
    %822 = vmatpush.msra.mxu0 %v798
    %823 = vmatpush.msra.mxu0 %v794
    %824 = vmatpush.msra.mxu0 %v790
    %825 = vmatpush.msra.mxu0 %v786
    %826 = vmatpush.msra.mxu0 %v782
    %827 = vmatpush.msra.mxu0 %v778
    %828 = vmatpush.msra.mxu0 %v774
    %829 = vmatpush.msra.mxu0 %v770
    %830 = vmatpush.msra.mxu0 %v766
    %831 = vmatpush.msra.mxu0 %v762
    %832 = vmatpush.msra.mxu0 %v758
    %833 = vmatpush.msra.mxu0 %v754
    %834 = vmatmul.f32.gmra.mxu0 %v753
    %v835 = vpop.f32.mrf.mxu0
    %v836 = vadd.f32 0.0, %v835
    %837 = vdwg.mxu0
    %838 = vmatpush.msra.mxu0 %v815
    %839 = vmatpush.msra.mxu0 %v811
    %840 = vmatpush.msra.mxu0 %v807
    %841 = vmatpush.msra.mxu0 %v803
    %842 = vmatpush.msra.mxu0 %v799
    %843 = vmatpush.msra.mxu0 %v795
    %844 = vmatpush.msra.mxu0 %v791
    %845 = vmatpush.msra.mxu0 %v787
    %846 = vmatpush.msra.mxu0 %v783
    %847 = vmatpush.msra.mxu0 %v779
    %848 = vmatpush.msra.mxu0 %v775
    %849 = vmatpush.msra.mxu0 %v771
    %850 = vmatpush.msra.mxu0 %v767
    %851 = vmatpush.msra.mxu0 %v763
    %852 = vmatpush.msra.mxu0 %v759
    %853 = vmatpush.msra.mxu0 %v755
    %854 = vmatmul.f32.gmra.mxu0 %v753
    %v855 = vpop.f32.mrf.mxu0
    %v856 = vadd.f32 0.0, %v855
    %857 = vdwg.mxu0
    %858 = vmatpush.msra.mxu0 %v816
    %859 = vmatpush.msra.mxu0 %v812
    %860 = vmatpush.msra.mxu0 %v808
    %861 = vmatpush.msra.mxu0 %v804
    %862 = vmatpush.msra.mxu0 %v800
    %863 = vmatpush.msra.mxu0 %v796
    %864 = vmatpush.msra.mxu0 %v792
    %865 = vmatpush.msra.mxu0 %v788
    %866 = vmatpush.msra.mxu0 %v784
    %867 = vmatpush.msra.mxu0 %v780
    %868 = vmatpush.msra.mxu0 %v776
    %869 = vmatpush.msra.mxu0 %v772
    %870 = vmatpush.msra.mxu0 %v768
    %871 = vmatpush.msra.mxu0 %v764
    %872 = vmatpush.msra.mxu0 %v760
    %873 = vmatpush.msra.mxu0 %v756
    %874 = vmatmul.f32.gmra.mxu0 %v753
    %v875 = vpop.f32.mrf.mxu0
    %v876 = vadd.f32 0.0, %v875
    %877 = vdwg.mxu0
    %878 = vmatpush.msra.mxu0 %v817
    %879 = vmatpush.msra.mxu0 %v813
    %880 = vmatpush.msra.mxu0 %v809
    %881 = vmatpush.msra.mxu0 %v805
    %882 = vmatpush.msra.mxu0 %v801
    %883 = vmatpush.msra.mxu0 %v797
    %884 = vmatpush.msra.mxu0 %v793
    %885 = vmatpush.msra.mxu0 %v789
    %886 = vmatpush.msra.mxu0 %v785
    %887 = vmatpush.msra.mxu0 %v781
    %888 = vmatpush.msra.mxu0 %v777
    %889 = vmatpush.msra.mxu0 %v773
    %890 = vmatpush.msra.mxu0 %v769
    %891 = vmatpush.msra.mxu0 %v765
    %892 = vmatpush.msra.mxu0 %v761
    %893 = vmatpush.msra.mxu0 %v757
    %894 = vmatmul.f32.gmra.mxu0 %v753
    %v895 = vpop.f32.mrf.mxu0
    %v896 = vadd.f32 0.0, %v895
    %897 = vdwg.mxu0
    %v898 = vadd.f32 %v749, %v836
    %v899 = vadd.f32 %v750, %v856
    %v900 = vadd.f32 %v751, %v876
    %v901 = vadd.f32 %v752, %v896
    %v902 = vtanh.pop %v898
    %v903 = vtanh.pop %v899
    %v904 = vtanh.pop %v900
    %v905 = vtanh.pop %v901
    %v906 = vmul.f32 %v902, 0.5
    %v907 = vmul.f32 %v903, 0.5
    %v908 = vmul.f32 %v904, 0.5
    %v909 = vadd.f32 %v906, 0.5
    %v910 = vadd.f32 %v907, 0.5
    %v911 = vadd.f32 %v908, 0.5
    %v912 = vld [vmem:[#allocation6] sm:$0xff]
    %v913 = vmul.f32 %v910, %v912
    %v914 = vmul.f32 %v909, %v905
    %v915 = vadd.f32 %v913, %v914
    %v916 = vtanh.pop %v915
    %v917 = vmul.f32 %v911, %v916
    %918 = vst [vmem:[#allocation6] sm:$0xff] %v915
    %919 = vst [vmem:[#allocation5] sm:$0xff] %v917
    %s920 = scalar_lea.vmem [#allocation16], 16
    %921 = vst [vmem:[%s920] sm:$0xff] %v917
    %s922 = scalar_lea.vmem [#allocation17], 16
    %923 = vst [vmem:[%s922] sm:$0xff] %v915
    %s924 = scalar_lea.vmem [#allocation4], 96
    %v925 = vld [vmem:[%s924] sm:$0xff]
    %v926 = vld [vmem:[%s924 + $0x8] sm:$0xff]
    %v927 = vld [vmem:[%s924 + $0x10] sm:$0xff]
    %v928 = vld [vmem:[%s924 + $0x18] sm:$0xff]
    %v929 = vld [vmem:[#allocation5] sm:$0xff]
    %v930 = vld [vmem:[#allocation3] sm:$0xff]
    %v931 = vld [vmem:[#allocation3 + $0x8] sm:$0xff]
    %v932 = vld [vmem:[#allocation3 + $0x10] sm:$0xff]
    %v933 = vld [vmem:[#allocation3 + $0x18] sm:$0xff]
    %v934 = vld [vmem:[#allocation3 + $0x20] sm:$0xff]
    %v935 = vld [vmem:[#allocation3 + $0x28] sm:$0xff]
    %v936 = vld [vmem:[#allocation3 + $0x30] sm:$0xff]
    %v937 = vld [vmem:[#allocation3 + $0x38] sm:$0xff]
    %v938 = vld [vmem:[#allocation3 + $0x40] sm:$0xff]
    %v939 = vld [vmem:[#allocation3 + $0x48] sm:$0xff]
    %v940 = vld [vmem:[#allocation3 + $0x50] sm:$0xff]
    %v941 = vld [vmem:[#allocation3 + $0x58] sm:$0xff]
    %v942 = vld [vmem:[#allocation3 + $0x60] sm:$0xff]
    %v943 = vld [vmem:[#allocation3 + $0x68] sm:$0xff]
    %v944 = vld [vmem:[#allocation3 + $0x70] sm:$0xff]
    %v945 = vld [vmem:[#allocation3 + $0x78] sm:$0xff]
    %v946 = vld [vmem:[#allocation3 + $0x80] sm:$0xff]
    %v947 = vld [vmem:[#allocation3 + $0x88] sm:$0xff]
    %v948 = vld [vmem:[#allocation3 + $0x90] sm:$0xff]
    %v949 = vld [vmem:[#allocation3 + $0x98] sm:$0xff]
    %v950 = vld [vmem:[#allocation3 + $0xa0] sm:$0xff]
    %v951 = vld [vmem:[#allocation3 + $0xa8] sm:$0xff]
    %v952 = vld [vmem:[#allocation3 + $0xb0] sm:$0xff]
    %v953 = vld [vmem:[#allocation3 + $0xb8] sm:$0xff]
    %v954 = vld [vmem:[#allocation3 + $0xc0] sm:$0xff]
    %v955 = vld [vmem:[#allocation3 + $0xc8] sm:$0xff]
    %v956 = vld [vmem:[#allocation3 + $0xd0] sm:$0xff]
    %v957 = vld [vmem:[#allocation3 + $0xd8] sm:$0xff]
    %v958 = vld [vmem:[#allocation3 + $0xe0] sm:$0xff]
    %v959 = vld [vmem:[#allocation3 + $0xe8] sm:$0xff]
    %v960 = vld [vmem:[#allocation3 + $0xf0] sm:$0xff]
    %v961 = vld [vmem:[#allocation3 + $0xf8] sm:$0xff]
    %v962 = vld [vmem:[#allocation3 + $0x100] sm:$0xff]
    %v963 = vld [vmem:[#allocation3 + $0x108] sm:$0xff]
    %v964 = vld [vmem:[#allocation3 + $0x110] sm:$0xff]
    %v965 = vld [vmem:[#allocation3 + $0x118] sm:$0xff]
    %v966 = vld [vmem:[#allocation3 + $0x120] sm:$0xff]
    %v967 = vld [vmem:[#allocation3 + $0x128] sm:$0xff]
    %v968 = vld [vmem:[#allocation3 + $0x130] sm:$0xff]
    %v969 = vld [vmem:[#allocation3 + $0x138] sm:$0xff]
    %v970 = vld [vmem:[#allocation3 + $0x140] sm:$0xff]
    %v971 = vld [vmem:[#allocation3 + $0x148] sm:$0xff]
    %v972 = vld [vmem:[#allocation3 + $0x150] sm:$0xff]
    %v973 = vld [vmem:[#allocation3 + $0x158] sm:$0xff]
    %v974 = vld [vmem:[#allocation3 + $0x160] sm:$0xff]
    %v975 = vld [vmem:[#allocation3 + $0x168] sm:$0xff]
    %v976 = vld [vmem:[#allocation3 + $0x170] sm:$0xff]
    %v977 = vld [vmem:[#allocation3 + $0x178] sm:$0xff]
    %v978 = vld [vmem:[#allocation3 + $0x180] sm:$0xff]
    %v979 = vld [vmem:[#allocation3 + $0x188] sm:$0xff]
    %v980 = vld [vmem:[#allocation3 + $0x190] sm:$0xff]
    %v981 = vld [vmem:[#allocation3 + $0x198] sm:$0xff]
    %v982 = vld [vmem:[#allocation3 + $0x1a0] sm:$0xff]
    %v983 = vld [vmem:[#allocation3 + $0x1a8] sm:$0xff]
    %v984 = vld [vmem:[#allocation3 + $0x1b0] sm:$0xff]
    %v985 = vld [vmem:[#allocation3 + $0x1b8] sm:$0xff]
    %v986 = vld [vmem:[#allocation3 + $0x1c0] sm:$0xff]
    %v987 = vld [vmem:[#allocation3 + $0x1c8] sm:$0xff]
    %v988 = vld [vmem:[#allocation3 + $0x1d0] sm:$0xff]
    %v989 = vld [vmem:[#allocation3 + $0x1d8] sm:$0xff]
    %v990 = vld [vmem:[#allocation3 + $0x1e0] sm:$0xff]
    %v991 = vld [vmem:[#allocation3 + $0x1e8] sm:$0xff]
    %v992 = vld [vmem:[#allocation3 + $0x1f0] sm:$0xff]
    %v993 = vld [vmem:[#allocation3 + $0x1f8] sm:$0xff]
    %994 = vmatpush.msra.mxu0 %v990
    %995 = vmatpush.msra.mxu0 %v986
    %996 = vmatpush.msra.mxu0 %v982
    %997 = vmatpush.msra.mxu0 %v978
    %998 = vmatpush.msra.mxu0 %v974
    %999 = vmatpush.msra.mxu0 %v970
    %1000 = vmatpush.msra.mxu0 %v966
    %1001 = vmatpush.msra.mxu0 %v962
    %1002 = vmatpush.msra.mxu0 %v958
    %1003 = vmatpush.msra.mxu0 %v954
    %1004 = vmatpush.msra.mxu0 %v950
    %1005 = vmatpush.msra.mxu0 %v946
    %1006 = vmatpush.msra.mxu0 %v942
    %1007 = vmatpush.msra.mxu0 %v938
    %1008 = vmatpush.msra.mxu0 %v934
    %1009 = vmatpush.msra.mxu0 %v930
    %1010 = vmatmul.f32.gmra.mxu0 %v929
    %v1011 = vpop.f32.mrf.mxu0
    %v1012 = vadd.f32 0.0, %v1011
    %1013 = vdwg.mxu0
    %1014 = vmatpush.msra.mxu0 %v991
    %1015 = vmatpush.msra.mxu0 %v987
    %1016 = vmatpush.msra.mxu0 %v983
    %1017 = vmatpush.msra.mxu0 %v979
    %1018 = vmatpush.msra.mxu0 %v975
    %1019 = vmatpush.msra.mxu0 %v971
    %1020 = vmatpush.msra.mxu0 %v967
    %1021 = vmatpush.msra.mxu0 %v963
    %1022 = vmatpush.msra.mxu0 %v959
    %1023 = vmatpush.msra.mxu0 %v955
    %1024 = vmatpush.msra.mxu0 %v951
    %1025 = vmatpush.msra.mxu0 %v947
    %1026 = vmatpush.msra.mxu0 %v943
    %1027 = vmatpush.msra.mxu0 %v939
    %1028 = vmatpush.msra.mxu0 %v935
    %1029 = vmatpush.msra.mxu0 %v931
    %1030 = vmatmul.f32.gmra.mxu0 %v929
    %v1031 = vpop.f32.mrf.mxu0
    %v1032 = vadd.f32 0.0, %v1031
    %1033 = vdwg.mxu0
    %1034 = vmatpush.msra.mxu0 %v992
    %1035 = vmatpush.msra.mxu0 %v988
    %1036 = vmatpush.msra.mxu0 %v984
    %1037 = vmatpush.msra.mxu0 %v980
    %1038 = vmatpush.msra.mxu0 %v976
    %1039 = vmatpush.msra.mxu0 %v972
    %1040 = vmatpush.msra.mxu0 %v968
    %1041 = vmatpush.msra.mxu0 %v964
    %1042 = vmatpush.msra.mxu0 %v960
    %1043 = vmatpush.msra.mxu0 %v956
    %1044 = vmatpush.msra.mxu0 %v952
    %1045 = vmatpush.msra.mxu0 %v948
    %1046 = vmatpush.msra.mxu0 %v944
    %1047 = vmatpush.msra.mxu0 %v940
    %1048 = vmatpush.msra.mxu0 %v936
    %1049 = vmatpush.msra.mxu0 %v932
    %1050 = vmatmul.f32.gmra.mxu0 %v929
    %v1051 = vpop.f32.mrf.mxu0
    %v1052 = vadd.f32 0.0, %v1051
    %1053 = vdwg.mxu0
    %1054 = vmatpush.msra.mxu0 %v993
    %1055 = vmatpush.msra.mxu0 %v989
    %1056 = vmatpush.msra.mxu0 %v985
    %1057 = vmatpush.msra.mxu0 %v981
    %1058 = vmatpush.msra.mxu0 %v977
    %1059 = vmatpush.msra.mxu0 %v973
    %1060 = vmatpush.msra.mxu0 %v969
    %1061 = vmatpush.msra.mxu0 %v965
    %1062 = vmatpush.msra.mxu0 %v961
    %1063 = vmatpush.msra.mxu0 %v957
    %1064 = vmatpush.msra.mxu0 %v953
    %1065 = vmatpush.msra.mxu0 %v949
    %1066 = vmatpush.msra.mxu0 %v945
    %1067 = vmatpush.msra.mxu0 %v941
    %1068 = vmatpush.msra.mxu0 %v937
    %1069 = vmatpush.msra.mxu0 %v933
    %1070 = vmatmul.f32.gmra.mxu0 %v929
    %v1071 = vpop.f32.mrf.mxu0
    %v1072 = vadd.f32 0.0, %v1071
    %1073 = vdwg.mxu0
    %v1074 = vadd.f32 %v925, %v1012
    %v1075 = vadd.f32 %v926, %v1032
    %v1076 = vadd.f32 %v927, %v1052
    %v1077 = vadd.f32 %v928, %v1072
    %v1078 = vtanh.pop %v1074
    %v1079 = vtanh.pop %v1075
    %v1080 = vtanh.pop %v1076
    %v1081 = vtanh.pop %v1077
    %v1082 = vmul.f32 %v1078, 0.5
    %v1083 = vmul.f32 %v1079, 0.5
    %v1084 = vmul.f32 %v1080, 0.5
    %v1085 = vadd.f32 %v1082, 0.5
    %v1086 = vadd.f32 %v1083, 0.5
    %v1087 = vadd.f32 %v1084, 0.5
    %v1088 = vld [vmem:[#allocation6] sm:$0xff]
    %v1089 = vmul.f32 %v1086, %v1088
    %v1090 = vmul.f32 %v1085, %v1081
    %v1091 = vadd.f32 %v1089, %v1090
    %v1092 = vtanh.pop %v1091
    %v1093 = vmul.f32 %v1087, %v1092
    %1094 = vst [vmem:[#allocation6] sm:$0xff] %v1091
    %1095 = vst [vmem:[#allocation5] sm:$0xff] %v1093
    %s1096 = scalar_lea.vmem [#allocation16], 24
    %1097 = vst [vmem:[%s1096] sm:$0xff] %v1093
    %s1098 = scalar_lea.vmem [#allocation17], 24
    %1099 = vst [vmem:[%s1098] sm:$0xff] %v1091
    %s1100 = scalar_lea.vmem [#allocation4], 128
    %v1101 = vld [vmem:[%s1100] sm:$0xff]
    %v1102 = vld [vmem:[%s1100 + $0x8] sm:$0xff]
    %v1103 = vld [vmem:[%s1100 + $0x10] sm:$0xff]
    %v1104 = vld [vmem:[%s1100 + $0x18] sm:$0xff]
    %v1105 = vld [vmem:[#allocation5] sm:$0xff]
    %v1106 = vld [vmem:[#allocation3] sm:$0xff]
    %v1107 = vld [vmem:[#allocation3 + $0x8] sm:$0xff]
    %v1108 = vld [vmem:[#allocation3 + $0x10] sm:$0xff]
    %v1109 = vld [vmem:[#allocation3 + $0x18] sm:$0xff]
    %v1110 = vld [vmem:[#allocation3 + $0x20] sm:$0xff]
    %v1111 = vld [vmem:[#allocation3 + $0x28] sm:$0xff]
    %v1112 = vld [vmem:[#allocation3 + $0x30] sm:$0xff]
    %v1113 = vld [vmem:[#allocation3 + $0x38] sm:$0xff]
    %v1114 = vld [vmem:[#allocation3 + $0x40] sm:$0xff]
    %v1115 = vld [vmem:[#allocation3 + $0x48] sm:$0xff]
    %v1116 = vld [vmem:[#allocation3 + $0x50] sm:$0xff]
    %v1117 = vld [vmem:[#allocation3 + $0x58] sm:$0xff]
    %v1118 = vld [vmem:[#allocation3 + $0x60] sm:$0xff]
    %v1119 = vld [vmem:[#allocation3 + $0x68] sm:$0xff]
    %v1120 = vld [vmem:[#allocation3 + $0x70] sm:$0xff]
    %v1121 = vld [vmem:[#allocation3 + $0x78] sm:$0xff]
    %v1122 = vld [vmem:[#allocation3 + $0x80] sm:$0xff]
    %v1123 = vld [vmem:[#allocation3 + $0x88] sm:$0xff]
    %v1124 = vld [vmem:[#allocation3 + $0x90] sm:$0xff]
    %v1125 = vld [vmem:[#allocation3 + $0x98] sm:$0xff]
    %v1126 = vld [vmem:[#allocation3 + $0xa0] sm:$0xff]
    %v1127 = vld [vmem:[#allocation3 + $0xa8] sm:$0xff]
    %v1128 = vld [vmem:[#allocation3 + $0xb0] sm:$0xff]
    %v1129 = vld [vmem:[#allocation3 + $0xb8] sm:$0xff]
    %v1130 = vld [vmem:[#allocation3 + $0xc0] sm:$0xff]
    %v1131 = vld [vmem:[#allocation3 + $0xc8] sm:$0xff]
    %v1132 = vld [vmem:[#allocation3 + $0xd0] sm:$0xff]
    %v1133 = vld [vmem:[#allocation3 + $0xd8] sm:$0xff]
    %v1134 = vld [vmem:[#allocation3 + $0xe0] sm:$0xff]
    %v1135 = vld [vmem:[#allocation3 + $0xe8] sm:$0xff]
    %v1136 = vld [vmem:[#allocation3 + $0xf0] sm:$0xff]
    %v1137 = vld [vmem:[#allocation3 + $0xf8] sm:$0xff]
    %v1138 = vld [vmem:[#allocation3 + $0x100] sm:$0xff]
    %v1139 = vld [vmem:[#allocation3 + $0x108] sm:$0xff]
    %v1140 = vld [vmem:[#allocation3 + $0x110] sm:$0xff]
    %v1141 = vld [vmem:[#allocation3 + $0x118] sm:$0xff]
    %v1142 = vld [vmem:[#allocation3 + $0x120] sm:$0xff]
    %v1143 = vld [vmem:[#allocation3 + $0x128] sm:$0xff]
    %v1144 = vld [vmem:[#allocation3 + $0x130] sm:$0xff]
    %v1145 = vld [vmem:[#allocation3 + $0x138] sm:$0xff]
    %v1146 = vld [vmem:[#allocation3 + $0x140] sm:$0xff]
    %v1147 = vld [vmem:[#allocation3 + $0x148] sm:$0xff]
    %v1148 = vld [vmem:[#allocation3 + $0x150] sm:$0xff]
    %v1149 = vld [vmem:[#allocation3 + $0x158] sm:$0xff]
    %v1150 = vld [vmem:[#allocation3 + $0x160] sm:$0xff]
    %v1151 = vld [vmem:[#allocation3 + $0x168] sm:$0xff]
    %v1152 = vld [vmem:[#allocation3 + $0x170] sm:$0xff]
    %v1153 = vld [vmem:[#allocation3 + $0x178] sm:$0xff]
    %v1154 = vld [vmem:[#allocation3 + $0x180] sm:$0xff]
    %v1155 = vld [vmem:[#allocation3 + $0x188] sm:$0xff]
    %v1156 = vld [vmem:[#allocation3 + $0x190] sm:$0xff]
    %v1157 = vld [vmem:[#allocation3 + $0x198] sm:$0xff]
    %v1158 = vld [vmem:[#allocation3 + $0x1a0] sm:$0xff]
    %v1159 = vld [vmem:[#allocation3 + $0x1a8] sm:$0xff]
    %v1160 = vld [vmem:[#allocation3 + $0x1b0] sm:$0xff]
    %v1161 = vld [vmem:[#allocation3 + $0x1b8] sm:$0xff]
    %v1162 = vld [vmem:[#allocation3 + $0x1c0] sm:$0xff]
    %v1163 = vld [vmem:[#allocation3 + $0x1c8] sm:$0xff]
    %v1164 = vld [vmem:[#allocation3 + $0x1d0] sm:$0xff]
    %v1165 = vld [vmem:[#allocation3 + $0x1d8] sm:$0xff]
    %v1166 = vld [vmem:[#allocation3 + $0x1e0] sm:$0xff]
    %v1167 = vld [vmem:[#allocation3 + $0x1e8] sm:$0xff]
    %v1168 = vld [vmem:[#allocation3 + $0x1f0] sm:$0xff]
    %v1169 = vld [vmem:[#allocation3 + $0x1f8] sm:$0xff]
    %1170 = vmatpush.msra.mxu0 %v1166
    %1171 = vmatpush.msra.mxu0 %v1162
    %1172 = vmatpush.msra.mxu0 %v1158
    %1173 = vmatpush.msra.mxu0 %v1154
    %1174 = vmatpush.msra.mxu0 %v1150
    %1175 = vmatpush.msra.mxu0 %v1146
    %1176 = vmatpush.msra.mxu0 %v1142
    %1177 = vmatpush.msra.mxu0 %v1138
    %1178 = vmatpush.msra.mxu0 %v1134
    %1179 = vmatpush.msra.mxu0 %v1130
    %1180 = vmatpush.msra.mxu0 %v1126
    %1181 = vmatpush.msra.mxu0 %v1122
    %1182 = vmatpush.msra.mxu0 %v1118
    %1183 = vmatpush.msra.mxu0 %v1114
    %1184 = vmatpush.msra.mxu0 %v1110
    %1185 = vmatpush.msra.mxu0 %v1106
    %1186 = vmatmul.f32.gmra.mxu0 %v1105
    %v1187 = vpop.f32.mrf.mxu0
    %v1188 = vadd.f32 0.0, %v1187
    %1189 = vdwg.mxu0
    %1190 = vmatpush.msra.mxu0 %v1167
    %1191 = vmatpush.msra.mxu0 %v1163
    %1192 = vmatpush.msra.mxu0 %v1159
    %1193 = vmatpush.msra.mxu0 %v1155
    %1194 = vmatpush.msra.mxu0 %v1151
    %1195 = vmatpush.msra.mxu0 %v1147
    %1196 = vmatpush.msra.mxu0 %v1143
    %1197 = vmatpush.msra.mxu0 %v1139
    %1198 = vmatpush.msra.mxu0 %v1135
    %1199 = vmatpush.msra.mxu0 %v1131
    %1200 = vmatpush.msra.mxu0 %v1127
    %1201 = vmatpush.msra.mxu0 %v1123
    %1202 = vmatpush.msra.mxu0 %v1119
    %1203 = vmatpush.msra.mxu0 %v1115
    %1204 = vmatpush.msra.mxu0 %v1111
    %1205 = vmatpush.msra.mxu0 %v1107
    %1206 = vmatmul.f32.gmra.mxu0 %v1105
    %v1207 = vpop.f32.mrf.mxu0
    %v1208 = vadd.f32 0.0, %v1207
    %1209 = vdwg.mxu0
    %1210 = vmatpush.msra.mxu0 %v1168
    %1211 = vmatpush.msra.mxu0 %v1164
    %1212 = vmatpush.msra.mxu0 %v1160
    %1213 = vmatpush.msra.mxu0 %v1156
    %1214 = vmatpush.msra.mxu0 %v1152
    %1215 = vmatpush.msra.mxu0 %v1148
    %1216 = vmatpush.msra.mxu0 %v1144
    %1217 = vmatpush.msra.mxu0 %v1140
    %1218 = vmatpush.msra.mxu0 %v1136
    %1219 = vmatpush.msra.mxu0 %v1132
    %1220 = vmatpush.msra.mxu0 %v1128
    %1221 = vmatpush.msra.mxu0 %v1124
    %1222 = vmatpush.msra.mxu0 %v1120
    %1223 = vmatpush.msra.mxu0 %v1116
    %1224 = vmatpush.msra.mxu0 %v1112
    %1225 = vmatpush.msra.mxu0 %v1108
    %1226 = vmatmul.f32.gmra.mxu0 %v1105
    %v1227 = vpop.f32.mrf.mxu0
    %v1228 = vadd.f32 0.0, %v1227
    %1229 = vdwg.mxu0
    %1230 = vmatpush.msra.mxu0 %v1169
    %1231 = vmatpush.msra.mxu0 %v1165
    %1232 = vmatpush.msra.mxu0 %v1161
    %1233 = vmatpush.msra.mxu0 %v1157
    %1234 = vmatpush.msra.mxu0 %v1153
    %1235 = vmatpush.msra.mxu0 %v1149
    %1236 = vmatpush.msra.mxu0 %v1145
    %1237 = vmatpush.msra.mxu0 %v1141
    %1238 = vmatpush.msra.mxu0 %v1137
    %1239 = vmatpush.msra.mxu0 %v1133
    %1240 = vmatpush.msra.mxu0 %v1129
    %1241 = vmatpush.msra.mxu0 %v1125
    %1242 = vmatpush.msra.mxu0 %v1121
    %1243 = vmatpush.msra.mxu0 %v1117
    %1244 = vmatpush.msra.mxu0 %v1113
    %1245 = vmatpush.msra.mxu0 %v1109
    %1246 = vmatmul.f32.gmra.mxu0 %v1105
    %v1247 = vpop.f32.mrf.mxu0
    %v1248 = vadd.f32 0.0, %v1247
    %1249 = vdwg.mxu0
    %v1250 = vadd.f32 %v1101, %v1188
    %v1251 = vadd.f32 %v1102, %v1208
    %v1252 = vadd.f32 %v1103, %v1228
    %v1253 = vadd.f32 %v1104, %v1248
    %v1254 = vtanh.pop %v1250
    %v1255 = vtanh.pop %v1251
    %v1256 = vtanh.pop %v1252
    %v1257 = vtanh.pop %v1253
    %v1258 = vmul.f32 %v1254, 0.5
    %v1259 = vmul.f32 %v1255, 0.5
    %v1260 = vmul.f32 %v1256, 0.5
    %v1261 = vadd.f32 %v1258, 0.5
    %v1262 = vadd.f32 %v1259, 0.5
    %v1263 = vadd.f32 %v1260, 0.5
    %v1264 = vld [vmem:[#allocation6] sm:$0xff]
    %v1265 = vmul.f32 %v1262, %v1264
    %v1266 = vmul.f32 %v1261, %v1257
    %v1267 = vadd.f32 %v1265, %v1266
    %v1268 = vtanh.pop %v1267
    %v1269 = vmul.f32 %v1263, %v1268
    %1270 = vst [vmem:[#allocation6] sm:$0xff] %v1267
    %1271 = vst [vmem:[#allocation5] sm:$0xff] %v1269
    %s1272 = scalar_lea.vmem [#allocation16], 32
    %1273 = vst [vmem:[%s1272] sm:$0xff] %v1269
    %s1274 = scalar_lea.vmem [#allocation17], 32
    %1275 = vst [vmem:[%s1274] sm:$0xff] %v1267
    %s1276 = scalar_lea.vmem [#allocation4], 160
    %v1277 = vld [vmem:[%s1276] sm:$0xff]
    %v1278 = vld [vmem:[%s1276 + $0x8] sm:$0xff]
    %v1279 = vld [vmem:[%s1276 + $0x10] sm:$0xff]
    %v1280 = vld [vmem:[%s1276 + $0x18] sm:$0xff]
    %v1281 = vld [vmem:[#allocation5] sm:$0xff]
    %v1282 = vld [vmem:[#allocation3] sm:$0xff]
    %v1283 = vld [vmem:[#allocation3 + $0x8] sm:$0xff]
    %v1284 = vld [vmem:[#allocation3 + $0x10] sm:$0xff]
    %v1285 = vld [vmem:[#allocation3 + $0x18] sm:$0xff]
    %v1286 = vld [vmem:[#allocation3 + $0x20] sm:$0xff]
    %v1287 = vld [vmem:[#allocation3 + $0x28] sm:$0xff]
    %v1288 = vld [vmem:[#allocation3 + $0x30] sm:$0xff]
    %v1289 = vld [vmem:[#allocation3 + $0x38] sm:$0xff]
    %v1290 = vld [vmem:[#allocation3 + $0x40] sm:$0xff]
    %v1291 = vld [vmem:[#allocation3 + $0x48] sm:$0xff]
    %v1292 = vld [vmem:[#allocation3 + $0x50] sm:$0xff]
    %v1293 = vld [vmem:[#allocation3 + $0x58] sm:$0xff]
    %v1294 = vld [vmem:[#allocation3 + $0x60] sm:$0xff]
    %v1295 = vld [vmem:[#allocation3 + $0x68] sm:$0xff]
    %v1296 = vld [vmem:[#allocation3 + $0x70] sm:$0xff]
    %v1297 = vld [vmem:[#allocation3 + $0x78] sm:$0xff]
    %v1298 = vld [vmem:[#allocation3 + $0x80] sm:$0xff]
    %v1299 = vld [vmem:[#allocation3 + $0x88] sm:$0xff]
    %v1300 = vld [vmem:[#allocation3 + $0x90] sm:$0xff]
    %v1301 = vld [vmem:[#allocation3 + $0x98] sm:$0xff]
    %v1302 = vld [vmem:[#allocation3 + $0xa0] sm:$0xff]
    %v1303 = vld [vmem:[#allocation3 + $0xa8] sm:$0xff]
    %v1304 = vld [vmem:[#allocation3 + $0xb0] sm:$0xff]
    %v1305 = vld [vmem:[#allocation3 + $0xb8] sm:$0xff]
    %v1306 = vld [vmem:[#allocation3 + $0xc0] sm:$0xff]
    %v1307 = vld [vmem:[#allocation3 + $0xc8] sm:$0xff]
    %v1308 = vld [vmem:[#allocation3 + $0xd0] sm:$0xff]
    %v1309 = vld [vmem:[#allocation3 + $0xd8] sm:$0xff]
    %v1310 = vld [vmem:[#allocation3 + $0xe0] sm:$0xff]
    %v1311 = vld [vmem:[#allocation3 + $0xe8] sm:$0xff]
    %v1312 = vld [vmem:[#allocation3 + $0xf0] sm:$0xff]
    %v1313 = vld [vmem:[#allocation3 + $0xf8] sm:$0xff]
    %v1314 = vld [vmem:[#allocation3 + $0x100] sm:$0xff]
    %v1315 = vld [vmem:[#allocation3 + $0x108] sm:$0xff]
    %v1316 = vld [vmem:[#allocation3 + $0x110] sm:$0xff]
    %v1317 = vld [vmem:[#allocation3 + $0x118] sm:$0xff]
    %v1318 = vld [vmem:[#allocation3 + $0x120] sm:$0xff]
    %v1319 = vld [vmem:[#allocation3 + $0x128] sm:$0xff]
    %v1320 = vld [vmem:[#allocation3 + $0x130] sm:$0xff]
    %v1321 = vld [vmem:[#allocation3 + $0x138] sm:$0xff]
    %v1322 = vld [vmem:[#allocation3 + $0x140] sm:$0xff]
    %v1323 = vld [vmem:[#allocation3 + $0x148] sm:$0xff]
    %v1324 = vld [vmem:[#allocation3 + $0x150] sm:$0xff]
    %v1325 = vld [vmem:[#allocation3 + $0x158] sm:$0xff]
    %v1326 = vld [vmem:[#allocation3 + $0x160] sm:$0xff]
    %v1327 = vld [vmem:[#allocation3 + $0x168] sm:$0xff]
    %v1328 = vld [vmem:[#allocation3 + $0x170] sm:$0xff]
    %v1329 = vld [vmem:[#allocation3 + $0x178] sm:$0xff]
    %v1330 = vld [vmem:[#allocation3 + $0x180] sm:$0xff]
    %v1331 = vld [vmem:[#allocation3 + $0x188] sm:$0xff]
    %v1332 = vld [vmem:[#allocation3 + $0x190] sm:$0xff]
    %v1333 = vld [vmem:[#allocation3 + $0x198] sm:$0xff]
    %v1334 = vld [vmem:[#allocation3 + $0x1a0] sm:$0xff]
    %v1335 = vld [vmem:[#allocation3 + $0x1a8] sm:$0xff]
    %v1336 = vld [vmem:[#allocation3 + $0x1b0] sm:$0xff]
    %v1337 = vld [vmem:[#allocation3 + $0x1b8] sm:$0xff]
    %v1338 = vld [vmem:[#allocation3 + $0x1c0] sm:$0xff]
    %v1339 = vld [vmem:[#allocation3 + $0x1c8] sm:$0xff]
    %v1340 = vld [vmem:[#allocation3 + $0x1d0] sm:$0xff]
    %v1341 = vld [vmem:[#allocation3 + $0x1d8] sm:$0xff]
    %v1342 = vld [vmem:[#allocation3 + $0x1e0] sm:$0xff]
    %v1343 = vld [vmem:[#allocation3 + $0x1e8] sm:$0xff]
    %v1344 = vld [vmem:[#allocation3 + $0x1f0] sm:$0xff]
    %v1345 = vld [vmem:[#allocation3 + $0x1f8] sm:$0xff]
    %1346 = vmatpush.msra.mxu0 %v1342
    %1347 = vmatpush.msra.mxu0 %v1338
    %1348 = vmatpush.msra.mxu0 %v1334
    %1349 = vmatpush.msra.mxu0 %v1330
    %1350 = vmatpush.msra.mxu0 %v1326
    %1351 = vmatpush.msra.mxu0 %v1322
    %1352 = vmatpush.msra.mxu0 %v1318
    %1353 = vmatpush.msra.mxu0 %v1314
    %1354 = vmatpush.msra.mxu0 %v1310
    %1355 = vmatpush.msra.mxu0 %v1306
    %1356 = vmatpush.msra.mxu0 %v1302
    %1357 = vmatpush.msra.mxu0 %v1298
    %1358 = vmatpush.msra.mxu0 %v1294
    %1359 = vmatpush.msra.mxu0 %v1290
    %1360 = vmatpush.msra.mxu0 %v1286
    %1361 = vmatpush.msra.mxu0 %v1282
    %1362 = vmatmul.f32.gmra.mxu0 %v1281
    %v1363 = vpop.f32.mrf.mxu0
    %v1364 = vadd.f32 0.0, %v1363
    %1365 = vdwg.mxu0
    %1366 = vmatpush.msra.mxu0 %v1343
    %1367 = vmatpush.msra.mxu0 %v1339
    %1368 = vmatpush.msra.mxu0 %v1335
    %1369 = vmatpush.msra.mxu0 %v1331
    %1370 = vmatpush.msra.mxu0 %v1327
    %1371 = vmatpush.msra.mxu0 %v1323
    %1372 = vmatpush.msra.mxu0 %v1319
    %1373 = vmatpush.msra.mxu0 %v1315
    %1374 = vmatpush.msra.mxu0 %v1311
    %1375 = vmatpush.msra.mxu0 %v1307
    %1376 = vmatpush.msra.mxu0 %v1303
    %1377 = vmatpush.msra.mxu0 %v1299
    %1378 = vmatpush.msra.mxu0 %v1295
    %1379 = vmatpush.msra.mxu0 %v1291
    %1380 = vmatpush.msra.mxu0 %v1287
    %1381 = vmatpush.msra.mxu0 %v1283
    %1382 = vmatmul.f32.gmra.mxu0 %v1281
    %v1383 = vpop.f32.mrf.mxu0
    %v1384 = vadd.f32 0.0, %v1383
    %1385 = vdwg.mxu0
    %1386 = vmatpush.msra.mxu0 %v1344
    %1387 = vmatpush.msra.mxu0 %v1340
    %1388 = vmatpush.msra.mxu0 %v1336
    %1389 = vmatpush.msra.mxu0 %v1332
    %1390 = vmatpush.msra.mxu0 %v1328
    %1391 = vmatpush.msra.mxu0 %v1324
    %1392 = vmatpush.msra.mxu0 %v1320
    %1393 = vmatpush.msra.mxu0 %v1316
    %1394 = vmatpush.msra.mxu0 %v1312
    %1395 = vmatpush.msra.mxu0 %v1308
    %1396 = vmatpush.msra.mxu0 %v1304
    %1397 = vmatpush.msra.mxu0 %v1300
    %1398 = vmatpush.msra.mxu0 %v1296
    %1399 = vmatpush.msra.mxu0 %v1292
    %1400 = vmatpush.msra.mxu0 %v1288
    %1401 = vmatpush.msra.mxu0 %v1284
    %1402 = vmatmul.f32.gmra.mxu0 %v1281
    %v1403 = vpop.f32.mrf.mxu0
    %v1404 = vadd.f32 0.0, %v1403
    %1405 = vdwg.mxu0
    %1406 = vmatpush.msra.mxu0 %v1345
    %1407 = vmatpush.msra.mxu0 %v1341
    %1408 = vmatpush.msra.mxu0 %v1337
    %1409 = vmatpush.msra.mxu0 %v1333
    %1410 = vmatpush.msra.mxu0 %v1329
    %1411 = vmatpush.msra.mxu0 %v1325
    %1412 = vmatpush.msra.mxu0 %v1321
    %1413 = vmatpush.msra.mxu0 %v1317
    %1414 = vmatpush.msra.mxu0 %v1313
    %1415 = vmatpush.msra.mxu0 %v1309
    %1416 = vmatpush.msra.mxu0 %v1305
    %1417 = vmatpush.msra.mxu0 %v1301
    %1418 = vmatpush.msra.mxu0 %v1297
    %1419 = vmatpush.msra.mxu0 %v1293
    %1420 = vmatpush.msra.mxu0 %v1289
    %1421 = vmatpush.msra.mxu0 %v1285
    %1422 = vmatmul.f32.gmra.mxu0 %v1281
    %v1423 = vpop.f32.mrf.mxu0
    %v1424 = vadd.f32 0.0, %v1423
    %1425 = vdwg.mxu0
    %v1426 = vadd.f32 %v1277, %v1364
    %v1427 = vadd.f32 %v1278, %v1384
    %v1428 = vadd.f32 %v1279, %v1404
    %v1429 = vadd.f32 %v1280, %v1424
    %v1430 = vtanh.pop %v1426
    %v1431 = vtanh.pop %v1427
    %v1432 = vtanh.pop %v1428
    %v1433 = vtanh.pop %v1429
    %v1434 = vmul.f32 %v1430, 0.5
    %v1435 = vmul.f32 %v1431, 0.5
    %v1436 = vmul.f32 %v1432, 0.5
    %v1437 = vadd.f32 %v1434, 0.5
    %v1438 = vadd.f32 %v1435, 0.5
    %v1439 = vadd.f32 %v1436, 0.5
    %v1440 = vld [vmem:[#allocation6] sm:$0xff]
    %v1441 = vmul.f32 %v1438, %v1440
    %v1442 = vmul.f32 %v1437, %v1433
    %v1443 = vadd.f32 %v1441, %v1442
    %v1444 = vtanh.pop %v1443
    %v1445 = vmul.f32 %v1439, %v1444
    %1446 = vst [vmem:[#allocation6] sm:$0xff] %v1443
    %1447 = vst [vmem:[#allocation5] sm:$0xff] %v1445
    %s1448 = scalar_lea.vmem [#allocation16], 40
    %1449 = vst [vmem:[%s1448] sm:$0xff] %v1445
    %s1450 = scalar_lea.vmem [#allocation17], 40
    %1451 = vst [vmem:[%s1450] sm:$0xff] %v1443
    %s1452 = scalar_lea.vmem [#allocation4], 192
    %v1453 = vld [vmem:[%s1452] sm:$0xff]
    %v1454 = vld [vmem:[%s1452 + $0x8] sm:$0xff]
    %v1455 = vld [vmem:[%s1452 + $0x10] sm:$0xff]
    %v1456 = vld [vmem:[%s1452 + $0x18] sm:$0xff]
    %v1457 = vld [vmem:[#allocation5] sm:$0xff]
    %v1458 = vld [vmem:[#allocation3] sm:$0xff]
    %v1459 = vld [vmem:[#allocation3 + $0x8] sm:$0xff]
    %v1460 = vld [vmem:[#allocation3 + $0x10] sm:$0xff]
    %v1461 = vld [vmem:[#allocation3 + $0x18] sm:$0xff]
    %v1462 = vld [vmem:[#allocation3 + $0x20] sm:$0xff]
    %v1463 = vld [vmem:[#allocation3 + $0x28] sm:$0xff]
    %v1464 = vld [vmem:[#allocation3 + $0x30] sm:$0xff]
    %v1465 = vld [vmem:[#allocation3 + $0x38] sm:$0xff]
    %v1466 = vld [vmem:[#allocation3 + $0x40] sm:$0xff]
    %v1467 = vld [vmem:[#allocation3 + $0x48] sm:$0xff]
    %v1468 = vld [vmem:[#allocation3 + $0x50] sm:$0xff]
    %v1469 = vld [vmem:[#allocation3 + $0x58] sm:$0xff]
    %v1470 = vld [vmem:[#allocation3 + $0x60] sm:$0xff]
    %v1471 = vld [vmem:[#allocation3 + $0x68] sm:$0xff]
    %v1472 = vld [vmem:[#allocation3 + $0x70] sm:$0xff]
    %v1473 = vld [vmem:[#allocation3 + $0x78] sm:$0xff]
    %v1474 = vld [vmem:[#allocation3 + $0x80] sm:$0xff]
    %v1475 = vld [vmem:[#allocation3 + $0x88] sm:$0xff]
    %v1476 = vld [vmem:[#allocation3 + $0x90] sm:$0xff]
    %v1477 = vld [vmem:[#allocation3 + $0x98] sm:$0xff]
    %v1478 = vld [vmem:[#allocation3 + $0xa0] sm:$0xff]
    %v1479 = vld [vmem:[#allocation3 + $0xa8] sm:$0xff]
    %v1480 = vld [vmem:[#allocation3 + $0xb0] sm:$0xff]
    %v1481 = vld [vmem:[#allocation3 + $0xb8] sm:$0xff]
    %v1482 = vld [vmem:[#allocation3 + $0xc0] sm:$0xff]
    %v1483 = vld [vmem:[#allocation3 + $0xc8] sm:$0xff]
    %v1484 = vld [vmem:[#allocation3 + $0xd0] sm:$0xff]
    %v1485 = vld [vmem:[#allocation3 + $0xd8] sm:$0xff]
    %v1486 = vld [vmem:[#allocation3 + $0xe0] sm:$0xff]
    %v1487 = vld [vmem:[#allocation3 + $0xe8] sm:$0xff]
    %v1488 = vld [vmem:[#allocation3 + $0xf0] sm:$0xff]
    %v1489 = vld [vmem:[#allocation3 + $0xf8] sm:$0xff]
    %v1490 = vld [vmem:[#allocation3 + $0x100] sm:$0xff]
    %v1491 = vld [vmem:[#allocation3 + $0x108] sm:$0xff]
    %v1492 = vld [vmem:[#allocation3 + $0x110] sm:$0xff]
    %v1493 = vld [vmem:[#allocation3 + $0x118] sm:$0xff]
    %v1494 = vld [vmem:[#allocation3 + $0x120] sm:$0xff]
    %v1495 = vld [vmem:[#allocation3 + $0x128] sm:$0xff]
    %v1496 = vld [vmem:[#allocation3 + $0x130] sm:$0xff]
    %v1497 = vld [vmem:[#allocation3 + $0x138] sm:$0xff]
    %v1498 = vld [vmem:[#allocation3 + $0x140] sm:$0xff]
    %v1499 = vld [vmem:[#allocation3 + $0x148] sm:$0xff]
    %v1500 = vld [vmem:[#allocation3 + $0x150] sm:$0xff]
    %v1501 = vld [vmem:[#allocation3 + $0x158] sm:$0xff]
    %v1502 = vld [vmem:[#allocation3 + $0x160] sm:$0xff]
    %v1503 = vld [vmem:[#allocation3 + $0x168] sm:$0xff]
    %v1504 = vld [vmem:[#allocation3 + $0x170] sm:$0xff]
    %v1505 = vld [vmem:[#allocation3 + $0x178] sm:$0xff]
    %v1506 = vld [vmem:[#allocation3 + $0x180] sm:$0xff]
    %v1507 = vld [vmem:[#allocation3 + $0x188] sm:$0xff]
    %v1508 = vld [vmem:[#allocation3 + $0x190] sm:$0xff]
    %v1509 = vld [vmem:[#allocation3 + $0x198] sm:$0xff]
    %v1510 = vld [vmem:[#allocation3 + $0x1a0] sm:$0xff]
    %v1511 = vld [vmem:[#allocation3 + $0x1a8] sm:$0xff]
    %v1512 = vld [vmem:[#allocation3 + $0x1b0] sm:$0xff]
    %v1513 = vld [vmem:[#allocation3 + $0x1b8] sm:$0xff]
    %v1514 = vld [vmem:[#allocation3 + $0x1c0] sm:$0xff]
    %v1515 = vld [vmem:[#allocation3 + $0x1c8] sm:$0xff]
    %v1516 = vld [vmem:[#allocation3 + $0x1d0] sm:$0xff]
    %v1517 = vld [vmem:[#allocation3 + $0x1d8] sm:$0xff]
    %v1518 = vld [vmem:[#allocation3 + $0x1e0] sm:$0xff]
    %v1519 = vld [vmem:[#allocation3 + $0x1e8] sm:$0xff]
    %v1520 = vld [vmem:[#allocation3 + $0x1f0] sm:$0xff]
    %v1521 = vld [vmem:[#allocation3 + $0x1f8] sm:$0xff]
    %1522 = vmatpush.msra.mxu0 %v1518
    %1523 = vmatpush.msra.mxu0 %v1514
    %1524 = vmatpush.msra.mxu0 %v1510
    %1525 = vmatpush.msra.mxu0 %v1506
    %1526 = vmatpush.msra.mxu0 %v1502
    %1527 = vmatpush.msra.mxu0 %v1498
    %1528 = vmatpush.msra.mxu0 %v1494
    %1529 = vmatpush.msra.mxu0 %v1490
    %1530 = vmatpush.msra.mxu0 %v1486
    %1531 = vmatpush.msra.mxu0 %v1482
    %1532 = vmatpush.msra.mxu0 %v1478
    %1533 = vmatpush.msra.mxu0 %v1474
    %1534 = vmatpush.msra.mxu0 %v1470
    %1535 = vmatpush.msra.mxu0 %v1466
    %1536 = vmatpush.msra.mxu0 %v1462
    %1537 = vmatpush.msra.mxu0 %v1458
    %1538 = vmatmul.f32.gmra.mxu0 %v1457
    %v1539 = vpop.f32.mrf.mxu0
    %v1540 = vadd.f32 0.0, %v1539
    %1541 = vdwg.mxu0
    %1542 = vmatpush.msra.mxu0 %v1519
    %1543 = vmatpush.msra.mxu0 %v1515
    %1544 = vmatpush.msra.mxu0 %v1511
    %1545 = vmatpush.msra.mxu0 %v1507
    %1546 = vmatpush.msra.mxu0 %v1503
    %1547 = vmatpush.msra.mxu0 %v1499
    %1548 = vmatpush.msra.mxu0 %v1495
    %1549 = vmatpush.msra.mxu0 %v1491
    %1550 = vmatpush.msra.mxu0 %v1487
    %1551 = vmatpush.msra.mxu0 %v1483
    %1552 = vmatpush.msra.mxu0 %v1479
    %1553 = vmatpush.msra.mxu0 %v1475
    %1554 = vmatpush.msra.mxu0 %v1471
    %1555 = vmatpush.msra.mxu0 %v1467
    %1556 = vmatpush.msra.mxu0 %v1463
    %1557 = vmatpush.msra.mxu0 %v1459
    %1558 = vmatmul.f32.gmra.mxu0 %v1457
    %v1559 = vpop.f32.mrf.mxu0
    %v1560 = vadd.f32 0.0, %v1559
    %1561 = vdwg.mxu0
    %1562 = vmatpush.msra.mxu0 %v1520
    %1563 = vmatpush.msra.mxu0 %v1516
    %1564 = vmatpush.msra.mxu0 %v1512
    %1565 = vmatpush.msra.mxu0 %v1508
    %1566 = vmatpush.msra.mxu0 %v1504
    %1567 = vmatpush.msra.mxu0 %v1500
    %1568 = vmatpush.msra.mxu0 %v1496
    %1569 = vmatpush.msra.mxu0 %v1492
    %1570 = vmatpush.msra.mxu0 %v1488
    %1571 = vmatpush.msra.mxu0 %v1484
    %1572 = vmatpush.msra.mxu0 %v1480
    %1573 = vmatpush.msra.mxu0 %v1476
    %1574 = vmatpush.msra.mxu0 %v1472
    %1575 = vmatpush.msra.mxu0 %v1468
    %1576 = vmatpush.msra.mxu0 %v1464
    %1577 = vmatpush.msra.mxu0 %v1460
    %1578 = vmatmul.f32.gmra.mxu0 %v1457
    %v1579 = vpop.f32.mrf.mxu0
    %v1580 = vadd.f32 0.0, %v1579
    %1581 = vdwg.mxu0
    %1582 = vmatpush.msra.mxu0 %v1521
    %1583 = vmatpush.msra.mxu0 %v1517
    %1584 = vmatpush.msra.mxu0 %v1513
    %1585 = vmatpush.msra.mxu0 %v1509
    %1586 = vmatpush.msra.mxu0 %v1505
    %1587 = vmatpush.msra.mxu0 %v1501
    %1588 = vmatpush.msra.mxu0 %v1497
    %1589 = vmatpush.msra.mxu0 %v1493
    %1590 = vmatpush.msra.mxu0 %v1489
    %1591 = vmatpush.msra.mxu0 %v1485
    %1592 = vmatpush.msra.mxu0 %v1481
    %1593 = vmatpush.msra.mxu0 %v1477
    %1594 = vmatpush.msra.mxu0 %v1473
    %1595 = vmatpush.msra.mxu0 %v1469
    %1596 = vmatpush.msra.mxu0 %v1465
    %1597 = vmatpush.msra.mxu0 %v1461
    %1598 = vmatmul.f32.gmra.mxu0 %v1457
    %v1599 = vpop.f32.mrf.mxu0
    %v1600 = vadd.f32 0.0, %v1599
    %1601 = vdwg.mxu0
    %v1602 = vadd.f32 %v1453, %v1540
    %v1603 = vadd.f32 %v1454, %v1560
    %v1604 = vadd.f32 %v1455, %v1580
    %v1605 = vadd.f32 %v1456, %v1600
    %v1606 = vtanh.pop %v1602
    %v1607 = vtanh.pop %v1603
    %v1608 = vtanh.pop %v1604
    %v1609 = vtanh.pop %v1605
    %v1610 = vmul.f32 %v1606, 0.5
    %v1611 = vmul.f32 %v1607, 0.5
    %v1612 = vmul.f32 %v1608, 0.5
    %v1613 = vadd.f32 %v1610, 0.5
    %v1614 = vadd.f32 %v1611, 0.5
    %v1615 = vadd.f32 %v1612, 0.5
    %v1616 = vld [vmem:[#allocation6] sm:$0xff]
    %v1617 = vmul.f32 %v1614, %v1616
    %v1618 = vmul.f32 %v1613, %v1609
    %v1619 = vadd.f32 %v1617, %v1618
    %v1620 = vtanh.pop %v1619
    %v1621 = vmul.f32 %v1615, %v1620
    %1622 = vst [vmem:[#allocation6] sm:$0xff] %v1619
    %1623 = vst [vmem:[#allocation5] sm:$0xff] %v1621
    %s1624 = scalar_lea.vmem [#allocation16], 48
    %1625 = vst [vmem:[%s1624] sm:$0xff] %v1621
    %s1626 = scalar_lea.vmem [#allocation17], 48
    %1627 = vst [vmem:[%s1626] sm:$0xff] %v1619
    %s1628 = scalar_lea.vmem [#allocation4], 224
    %v1629 = vld [vmem:[%s1628] sm:$0xff]
    %v1630 = vld [vmem:[%s1628 + $0x8] sm:$0xff]
    %v1631 = vld [vmem:[%s1628 + $0x10] sm:$0xff]
    %v1632 = vld [vmem:[%s1628 + $0x18] sm:$0xff]
    %v1633 = vld [vmem:[#allocation5] sm:$0xff]
    %v1634 = vld [vmem:[#allocation3] sm:$0xff]
    %v1635 = vld [vmem:[#allocation3 + $0x8] sm:$0xff]
    %v1636 = vld [vmem:[#allocation3 + $0x10] sm:$0xff]
    %v1637 = vld [vmem:[#allocation3 + $0x18] sm:$0xff]
    %v1638 = vld [vmem:[#allocation3 + $0x20] sm:$0xff]
    %v1639 = vld [vmem:[#allocation3 + $0x28] sm:$0xff]
    %v1640 = vld [vmem:[#allocation3 + $0x30] sm:$0xff]
    %v1641 = vld [vmem:[#allocation3 + $0x38] sm:$0xff]
    %v1642 = vld [vmem:[#allocation3 + $0x40] sm:$0xff]
    %v1643 = vld [vmem:[#allocation3 + $0x48] sm:$0xff]
    %v1644 = vld [vmem:[#allocation3 + $0x50] sm:$0xff]
    %v1645 = vld [vmem:[#allocation3 + $0x58] sm:$0xff]
    %v1646 = vld [vmem:[#allocation3 + $0x60] sm:$0xff]
    %v1647 = vld [vmem:[#allocation3 + $0x68] sm:$0xff]
    %v1648 = vld [vmem:[#allocation3 + $0x70] sm:$0xff]
    %v1649 = vld [vmem:[#allocation3 + $0x78] sm:$0xff]
    %v1650 = vld [vmem:[#allocation3 + $0x80] sm:$0xff]
    %v1651 = vld [vmem:[#allocation3 + $0x88] sm:$0xff]
    %v1652 = vld [vmem:[#allocation3 + $0x90] sm:$0xff]
    %v1653 = vld [vmem:[#allocation3 + $0x98] sm:$0xff]
    %v1654 = vld [vmem:[#allocation3 + $0xa0] sm:$0xff]
    %v1655 = vld [vmem:[#allocation3 + $0xa8] sm:$0xff]
    %v1656 = vld [vmem:[#allocation3 + $0xb0] sm:$0xff]
    %v1657 = vld [vmem:[#allocation3 + $0xb8] sm:$0xff]
    %v1658 = vld [vmem:[#allocation3 + $0xc0] sm:$0xff]
    %v1659 = vld [vmem:[#allocation3 + $0xc8] sm:$0xff]
    %v1660 = vld [vmem:[#allocation3 + $0xd0] sm:$0xff]
    %v1661 = vld [vmem:[#allocation3 + $0xd8] sm:$0xff]
    %v1662 = vld [vmem:[#allocation3 + $0xe0] sm:$0xff]
    %v1663 = vld [vmem:[#allocation3 + $0xe8] sm:$0xff]
    %v1664 = vld [vmem:[#allocation3 + $0xf0] sm:$0xff]
    %v1665 = vld [vmem:[#allocation3 + $0xf8] sm:$0xff]
    %v1666 = vld [vmem:[#allocation3 + $0x100] sm:$0xff]
    %v1667 = vld [vmem:[#allocation3 + $0x108] sm:$0xff]
    %v1668 = vld [vmem:[#allocation3 + $0x110] sm:$0xff]
    %v1669 = vld [vmem:[#allocation3 + $0x118] sm:$0xff]
    %v1670 = vld [vmem:[#allocation3 + $0x120] sm:$0xff]
    %v1671 = vld [vmem:[#allocation3 + $0x128] sm:$0xff]
    %v1672 = vld [vmem:[#allocation3 + $0x130] sm:$0xff]
    %v1673 = vld [vmem:[#allocation3 + $0x138] sm:$0xff]
    %v1674 = vld [vmem:[#allocation3 + $0x140] sm:$0xff]
    %v1675 = vld [vmem:[#allocation3 + $0x148] sm:$0xff]
    %v1676 = vld [vmem:[#allocation3 + $0x150] sm:$0xff]
    %v1677 = vld [vmem:[#allocation3 + $0x158] sm:$0xff]
    %v1678 = vld [vmem:[#allocation3 + $0x160] sm:$0xff]
    %v1679 = vld [vmem:[#allocation3 + $0x168] sm:$0xff]
    %v1680 = vld [vmem:[#allocation3 + $0x170] sm:$0xff]
    %v1681 = vld [vmem:[#allocation3 + $0x178] sm:$0xff]
    %v1682 = vld [vmem:[#allocation3 + $0x180] sm:$0xff]
    %v1683 = vld [vmem:[#allocation3 + $0x188] sm:$0xff]
    %v1684 = vld [vmem:[#allocation3 + $0x190] sm:$0xff]
    %v1685 = vld [vmem:[#allocation3 + $0x198] sm:$0xff]
    %v1686 = vld [vmem:[#allocation3 + $0x1a0] sm:$0xff]
    %v1687 = vld [vmem:[#allocation3 + $0x1a8] sm:$0xff]
    %v1688 = vld [vmem:[#allocation3 + $0x1b0] sm:$0xff]
    %v1689 = vld [vmem:[#allocation3 + $0x1b8] sm:$0xff]
    %v1690 = vld [vmem:[#allocation3 + $0x1c0] sm:$0xff]
    %v1691 = vld [vmem:[#allocation3 + $0x1c8] sm:$0xff]
    %v1692 = vld [vmem:[#allocation3 + $0x1d0] sm:$0xff]
    %v1693 = vld [vmem:[#allocation3 + $0x1d8] sm:$0xff]
    %v1694 = vld [vmem:[#allocation3 + $0x1e0] sm:$0xff]
    %v1695 = vld [vmem:[#allocation3 + $0x1e8] sm:$0xff]
    %v1696 = vld [vmem:[#allocation3 + $0x1f0] sm:$0xff]
    %v1697 = vld [vmem:[#allocation3 + $0x1f8] sm:$0xff]
    %1698 = vmatpush.msra.mxu0 %v1694
    %1699 = vmatpush.msra.mxu0 %v1690
    %1700 = vmatpush.msra.mxu0 %v1686
    %1701 = vmatpush.msra.mxu0 %v1682
    %1702 = vmatpush.msra.mxu0 %v1678
    %1703 = vmatpush.msra.mxu0 %v1674
    %1704 = vmatpush.msra.mxu0 %v1670
    %1705 = vmatpush.msra.mxu0 %v1666
    %1706 = vmatpush.msra.mxu0 %v1662
    %1707 = vmatpush.msra.mxu0 %v1658
    %1708 = vmatpush.msra.mxu0 %v1654
    %1709 = vmatpush.msra.mxu0 %v1650
    %1710 = vmatpush.msra.mxu0 %v1646
    %1711 = vmatpush.msra.mxu0 %v1642
    %1712 = vmatpush.msra.mxu0 %v1638
    %1713 = vmatpush.msra.mxu0 %v1634
    %1714 = vmatmul.f32.gmra.mxu0 %v1633
    %v1715 = vpop.f32.mrf.mxu0
    %v1716 = vadd.f32 0.0, %v1715
    %1717 = vdwg.mxu0
    %1718 = vmatpush.msra.mxu0 %v1695
    %1719 = vmatpush.msra.mxu0 %v1691
    %1720 = vmatpush.msra.mxu0 %v1687
    %1721 = vmatpush.msra.mxu0 %v1683
    %1722 = vmatpush.msra.mxu0 %v1679
    %1723 = vmatpush.msra.mxu0 %v1675
    %1724 = vmatpush.msra.mxu0 %v1671
    %1725 = vmatpush.msra.mxu0 %v1667
    %1726 = vmatpush.msra.mxu0 %v1663
    %1727 = vmatpush.msra.mxu0 %v1659
    %1728 = vmatpush.msra.mxu0 %v1655
    %1729 = vmatpush.msra.mxu0 %v1651
    %1730 = vmatpush.msra.mxu0 %v1647
    %1731 = vmatpush.msra.mxu0 %v1643
    %1732 = vmatpush.msra.mxu0 %v1639
    %1733 = vmatpush.msra.mxu0 %v1635
    %1734 = vmatmul.f32.gmra.mxu0 %v1633
    %v1735 = vpop.f32.mrf.mxu0
    %v1736 = vadd.f32 0.0, %v1735
    %1737 = vdwg.mxu0
    %1738 = vmatpush.msra.mxu0 %v1696
    %1739 = vmatpush.msra.mxu0 %v1692
    %1740 = vmatpush.msra.mxu0 %v1688
    %1741 = vmatpush.msra.mxu0 %v1684
    %1742 = vmatpush.msra.mxu0 %v1680
    %1743 = vmatpush.msra.mxu0 %v1676
    %1744 = vmatpush.msra.mxu0 %v1672
    %1745 = vmatpush.msra.mxu0 %v1668
    %1746 = vmatpush.msra.mxu0 %v1664
    %1747 = vmatpush.msra.mxu0 %v1660
    %1748 = vmatpush.msra.mxu0 %v1656
    %1749 = vmatpush.msra.mxu0 %v1652
    %1750 = vmatpush.msra.mxu0 %v1648
    %1751 = vmatpush.msra.mxu0 %v1644
    %1752 = vmatpush.msra.mxu0 %v1640
    %1753 = vmatpush.msra.mxu0 %v1636
    %1754 = vmatmul.f32.gmra.mxu0 %v1633
    %v1755 = vpop.f32.mrf.mxu0
    %v1756 = vadd.f32 0.0, %v1755
    %1757 = vdwg.mxu0
    %1758 = vmatpush.msra.mxu0 %v1697
    %1759 = vmatpush.msra.mxu0 %v1693
    %1760 = vmatpush.msra.mxu0 %v1689
    %1761 = vmatpush.msra.mxu0 %v1685
    %1762 = vmatpush.msra.mxu0 %v1681
    %1763 = vmatpush.msra.mxu0 %v1677
    %1764 = vmatpush.msra.mxu0 %v1673
    %1765 = vmatpush.msra.mxu0 %v1669
    %1766 = vmatpush.msra.mxu0 %v1665
    %1767 = vmatpush.msra.mxu0 %v1661
    %1768 = vmatpush.msra.mxu0 %v1657
    %1769 = vmatpush.msra.mxu0 %v1653
    %1770 = vmatpush.msra.mxu0 %v1649
    %1771 = vmatpush.msra.mxu0 %v1645
    %1772 = vmatpush.msra.mxu0 %v1641
    %1773 = vmatpush.msra.mxu0 %v1637
    %1774 = vmatmul.f32.gmra.mxu0 %v1633
    %v1775 = vpop.f32.mrf.mxu0
    %v1776 = vadd.f32 0.0, %v1775
    %1777 = vdwg.mxu0
    %v1778 = vadd.f32 %v1629, %v1716
    %v1779 = vadd.f32 %v1630, %v1736
    %v1780 = vadd.f32 %v1631, %v1756
    %v1781 = vadd.f32 %v1632, %v1776
    %v1782 = vtanh.pop %v1778
    %v1783 = vtanh.pop %v1779
    %v1784 = vtanh.pop %v1780
    %v1785 = vtanh.pop %v1781
    %v1786 = vmul.f32 %v1782, 0.5
    %v1787 = vmul.f32 %v1783, 0.5
    %v1788 = vmul.f32 %v1784, 0.5
    %v1789 = vadd.f32 %v1786, 0.5
    %v1790 = vadd.f32 %v1787, 0.5
    %v1791 = vadd.f32 %v1788, 0.5
    %v1792 = vld [vmem:[#allocation6] sm:$0xff]
    %v1793 = vmul.f32 %v1790, %v1792
    %v1794 = vmul.f32 %v1789, %v1785
    %v1795 = vadd.f32 %v1793, %v1794
    %v1796 = vtanh.pop %v1795
    %v1797 = vmul.f32 %v1791, %v1796
    %1798 = vst [vmem:[#allocation6] sm:$0xff] %v1795
    %1799 = vst [vmem:[#allocation5] sm:$0xff] %v1797
    %s1800 = scalar_lea.vmem [#allocation16], 56
    %1801 = vst [vmem:[%s1800] sm:$0xff] %v1797
    %s1802 = scalar_lea.vmem [#allocation17], 56
    %1803 = vst [vmem:[%s1802] sm:$0xff] %v1795
    // Predicated region
    $region46: #{tpu_custom_call.1} parent=1 // pred_check
      _
    $region47: #{tpu_custom_call.1} parent=1 // pred_check_branch
      %1805 = sbr.rel (0) target = $region49
    $region48: #{tpu_custom_call.1} parent=1 // pred_region
      %1807 = vsyncadd [#allocation10], 0
      %s1808 = sshll.u32 [#allocation16], 4
      %s1809 = int_to_ptr.vmem [resolvable:$true] %s1808
      %s1810 = sshll.u32 %s6, 4
      %s1811 = int_to_ptr.hbm [resolvable:$true] %s1810
      %1816 = dma.vmem_to_hbm [thread:$0]  %s1809, 1024, %s1811, [#allocation10], 128, 128, 8
    $region49: #{tpu_custom_call.1} parent=1 // pred_fallthru
      _
    // Predicated region
    $region50: #{tpu_custom_call.1} parent=1 // pred_check
      _
    $region51: #{tpu_custom_call.1} parent=1 // pred_check_branch
      %1818 = sbr.rel (0) target = $region53
    $region52: #{tpu_custom_call.1} parent=1 // pred_region
      %1820 = vsyncadd [#allocation18], 0
      %s1821 = sshll.u32 [#allocation17], 4
      %s1822 = int_to_ptr.vmem [resolvable:$true] %s1821
      %s1823 = sshll.u32 %s7, 4
      %s1824 = int_to_ptr.hbm [resolvable:$true] %s1823
      %1829 = dma.vmem_to_hbm [thread:$0]  %s1822, 1024, %s1824, [#allocation18], 128, 128, 8
    $region53: #{tpu_custom_call.1} parent=1 // pred_fallthru
      _
    // Predicated region
    $region54: #{tpu_custom_call.1} parent=1 // pred_check
      _
    $region55: #{tpu_custom_call.1} parent=1 // pred_check_branch
      %1831 = sbr.rel (0) target = $region57
    $region56: #{tpu_custom_call.1} parent=1 // pred_region
      %1833 = dma.done [#allocation10], 1024
    $region57: #{tpu_custom_call.1} parent=1 // pred_fallthru
      _
    // Predicated region
    $region58: #{tpu_custom_call.1} parent=1 // pred_check
      _
    $region59: #{tpu_custom_call.1} parent=1 // pred_check_branch
      %1835 = sbr.rel (0) target = $region61
    $region60: #{tpu_custom_call.1} parent=1 // pred_region
      %1837 = dma.done [#allocation18], 1024
    $region61: #{tpu_custom_call.1} parent=1 // pred_fallthru
      _
    %1838 = vsyncpa [#allocation9], 1
    %1839 = vsyncpa [#allocation12], 1
    %1840 = vsyncpa [#allocation15], 1
    %1841 = vsyncpa [#allocation10], 1
    %1842 = vsyncpa [#allocation18], 1
  %1843 = vsyncmov [#allocation7]
  %s1844 = vpop.sfrf %1843
  %p1845 = scmp.eq.s32.totalorder %s1844, 0
  %p1846 = pneg %p1845
  %1848 = shalt.err (%p1846)
  %s1849 = scalar_lea.sflag [#allocation7], 1
  %1850 = vsyncmov %s1849
  %s1851 = vpop.sfrf %1850
  %p1852 = scmp.eq.s32.totalorder %s1851, 0
  %p1853 = pneg %p1852
  %1855 = shalt.err (%p1853)

</llo_original>
